<compile_context>
chip_gen: v7x
topology: tpu7x:2x2x1
jax: 0.10.0
libtpu: 0.0.40
codegen_flags: <defaults>
</compile_context>

<pallas_src>
import functools

import jax
import jax.numpy as jnp
import numpy as np
from jax.experimental import pallas as pl
from jax.experimental.pallas import tpu as pltpu

EPS = 1e-5  # PyTorch InstanceNorm3d default eps


def voxres_kernel(x_ref, w1_ref, b1_ref, w2_ref, b2_ref, alpha_ref, mask_ref,
                  o_ref, buf_ref, panel_ref, *, i0, span, offs, inv_n):
    """One batch sample per grid step.

    x_ref    : (1, C, span)     flat window covering every lane a conv tap reads
    w*_ref   : (C, 27*C) bf16   tap-packed weight panels, w[co, k*C + ci]
    b*_ref   : (C, 1)    f32    conv biases
    alpha_ref: (2,)      f32    PReLU slopes (SMEM)
    mask_ref : (1, span) f32    1.0 at interior voxels, 0.0 at padding lanes
    o_ref    : (1, C, span)     residual output window
    buf_ref  : (C, P)    f32    zero-padded activation scratch (VMEM)
    panel_ref: (27*C, span) f32 im2col panel scratch (VMEM)
    """
    C = x_ref.shape[1]
    x = x_ref[0].astype(jnp.float32)               # (C, span)
    m = mask_ref[...]                              # (1, span)
    a1 = alpha_ref[0]
    a2 = alpha_ref[1]

    def inorm_prelu(v, a):
        # v is exactly zero at non-interior lanes, so plain sums are interior
        # sums; two-pass masked stats avoid E[x^2] - mean^2 cancellation.
        mean = jnp.sum(v, axis=1, keepdims=True) * inv_n
        cen = (v - mean) * m                       # re-zero padding lanes
        var = jnp.sum(cen * cen, axis=1, keepdims=True) * inv_n
        h = cen * jax.lax.rsqrt(var + EPS)
        return jnp.where(h >= 0, h, a * h)         # PReLU (0 stays 0)

    def conv3(w_ref_, b_ref_):
        # Build the (27C, span) im2col panel from 27 shifted slices of the
        # zero-padded activation, then contract all taps+channels in ONE dot.
        hb = buf_ref[...]                          # (C, P) f32
        for k, off in enumerate(offs):
            s = i0 + off
            panel_ref[k * C:(k + 1) * C, :] = hb[:, s:s + span]
        return jnp.dot(w_ref_[...], panel_ref[...].astype(jnp.bfloat16),
                       preferred_element_type=jnp.float32) + b_ref_[...]

    # Stage 1: IN + PReLU on x, write into the padded scratch. Borders are
    # zeroed once and stay zero for the whole kernel.
    h1 = inorm_prelu(x, a1)                        # (C, span)
    zero_col = jnp.zeros((C, i0), jnp.float32)
    buf_ref[:, :i0] = zero_col
    buf_ref[:, i0 + span:] = zero_col
    buf_ref[:, i0:i0 + span] = h1

    c1 = m * conv3(w1_ref, b1_ref)                 # (C, span), pad lanes zeroed

    # Stage 2: IN + PReLU on conv1 output, overwrite the scratch window only.
    h2 = inorm_prelu(c1, a2)
    buf_ref[:, i0:i0 + span] = h2
    c2 = conv3(w2_ref, b2_ref)                     # (C, span)

    # Residual, stored straight into the lane-dense output window.
    o_ref[0] = (x + c2).astype(o_ref.dtype)


def voxres_module(x, w1, b1, w2, b2, alphas):
    """x: (N, C, D, H, W). w*: (Cout, Cin, 3, 3, 3) PyTorch layout. b*: (C,).
    alphas: (2,) PReLU slopes (one shared slope per nn.PReLU())."""
    N, C, D, H, W = x.shape
    Dp, Hp, Wp = D + 2, H + 2, W + 2
    P = Dp * Hp * Wp
    i0 = Hp * Wp + Wp + 1            # flat index of the first interior voxel
    span = P - 2 * i0                # flat window reachable by any conv tap
    offs = tuple((kd - 1) * Hp * Wp + (kh - 1) * Wp + (kw - 1)
                 for kd in range(3) for kh in range(3) for kw in range(3))

    # Zero-pad by 1 voxel per spatial dim, flatten spatial, keep only the span
    # window -> lane-dense (N, C, span). Pad lanes outside the span never
    # cross HBM.
    xp = jnp.pad(x, ((0, 0), (0, 0), (1, 1), (1, 1), (1, 1))).reshape(N, C, P)
    x_span = xp[:, :, i0:i0 + span]
    mask = jnp.pad(jnp.ones((1, D, H, W), jnp.float32),
                   ((0, 0), (1, 1), (1, 1), (1, 1))).reshape(1, P)[:, i0:i0 + span]

    # Tap-packed (C, 27*C) bf16 weight panels, row-block k = kd*9 + kh*3 + kw.
    wk1 = jnp.transpose(w1, (0, 2, 3, 4, 1)).reshape(C, 27 * C).astype(jnp.bfloat16)
    wk2 = jnp.transpose(w2, (0, 2, 3, 4, 1)).reshape(C, 27 * C).astype(jnp.bfloat16)
    b1v = b1.reshape(C, 1).astype(jnp.float32)
    b2v = b2.reshape(C, 1).astype(jnp.float32)

    kernel = functools.partial(voxres_kernel, i0=i0, span=span, offs=offs,
                               inv_n=1.0 / float(D * H * W))

    out_span = pl.pallas_call(
        kernel,
        out_shape=jax.ShapeDtypeStruct((N, C, span), x.dtype),
        grid=(N,),
        in_specs=[
            pl.BlockSpec((1, C, span), lambda n: (n, 0, 0)),
            pl.BlockSpec((C, 27 * C), lambda n: (0, 0)),
            pl.BlockSpec((C, 1), lambda n: (0, 0)),
            pl.BlockSpec((C, 27 * C), lambda n: (0, 0)),
            pl.BlockSpec((C, 1), lambda n: (0, 0)),
            pl.BlockSpec(memory_space=pltpu.MemorySpace.SMEM),
            pl.BlockSpec((1, span), lambda n: (0, 0)),
        ],
        out_specs=pl.BlockSpec((1, C, span), lambda n: (n, 0, 0)),
        scratch_shapes=[
            pltpu.VMEM((C, P), jnp.float32),          # zero-padded activation
            pltpu.VMEM((27 * C, span), jnp.float32),  # im2col panel
        ],
        compiler_params=pltpu.CompilerParams(
            dimension_semantics=("parallel",)),   # independent samples -> megacore
    )(x_span, wk1, b1v, wk2, b2v, alphas.astype(jnp.float32), mask)

    # Re-embed the span window in the padded volume and drop the 1-voxel border.
    out_p = jnp.pad(out_span, ((0, 0), (0, 0), (i0, i0)))
    return out_p.reshape(N, C, Dp, Hp, Wp)[:, :, 1:D + 1, 1:H + 1, 1:W + 1]


def reference(x, w1, b1, w2, b2, alphas):
    """Pure-JAX reference matching the PyTorch forward semantics (NCDHW)."""
    def inorm(v):
        mu = jnp.mean(v, axis=(2, 3, 4), keepdims=True)
        var = jnp.mean((v - mu) ** 2, axis=(2, 3, 4), keepdims=True)
        return (v - mu) / jnp.sqrt(var + EPS)

    def prelu(v, a):
        return jnp.where(v >= 0, v, a * v)

    def conv(v, w, b):
        out = jax.lax.conv_general_dilated(
            v, w, window_strides=(1, 1, 1), padding=[(1, 1)] * 3,
            dimension_numbers=("NCDHW", "OIDHW", "NCDHW"))
        return out + b.reshape(1, -1, 1, 1, 1)

    h = prelu(inorm(x), alphas[0])
    h = conv(h, w1, b1)
    h = prelu(inorm(h), alphas[1])
    h = conv(h, w2, b2)
    return x + h


if __name__ == "__main__":
    N, C, D, H, W = 2, 8, 8, 8, 8
    key = jax.random.PRNGKey(0)
    k = jax.random.split(key, 5)
    x = jax.random.normal(k[0], (N, C, D, H, W), jnp.float32)
    # Conv3d(C, C, 3, 1, 1) weights in PyTorch (Cout, Cin, kD, kH, kW) layout.
    w1 = jax.random.normal(k[1], (C, C, 3, 3, 3), jnp.float32) * 0.1
    b1 = jax.random.normal(k[2], (C,), jnp.float32) * 0.1
    w2 = jax.random.normal(k[3], (C, C, 3, 3, 3), jnp.float32) * 0.1
    b2 = jax.random.normal(k[4], (C,), jnp.float32) * 0.1
    # nn.PReLU() default: single shared slope, init 0.25 (one per PReLU module).
    alphas = jnp.array([0.25, 0.25], jnp.float32)

    out = jax.block_until_ready(voxres_module(x, w1, b1, w2, b2, alphas))

    ref = reference(x, w1, b1, w2, b2, alphas)
    # bf16 MXU operands (f32 accumulation) -> slightly looser tolerance than f32.
    np.testing.assert_allclose(np.asarray(out), np.asarray(ref),
                               rtol=2e-2, atol=2e-2)
    print("KERNEL_OK")
</pallas_src>

<mosaic_0001>
module attributes {stable_mosaic.version = 11 : i64} {
  func.func @voxres_kernel(%arg0: i32, %arg1: memref<1x8x778xf32, #tpu.memory_space<vmem>>, %arg2: memref<8x216xbf16, #tpu.memory_space<vmem>>, %arg3: memref<8x1xf32, #tpu.memory_space<vmem>>, %arg4: memref<8x216xbf16, #tpu.memory_space<vmem>>, %arg5: memref<8x1xf32, #tpu.memory_space<vmem>>, %arg6: memref<2xf32, #tpu.memory_space<smem>>, %arg7: memref<1x778xf32, #tpu.memory_space<vmem>>, %arg8: memref<1x8x778xf32, #tpu.memory_space<vmem>>, %arg9: memref<8x1000xf32, #tpu.memory_space<vmem>>, %arg10: memref<216x778xf32, #tpu.memory_space<vmem>>) attributes {dimension_semantics = [#tpu.dimension_semantics<parallel>], iteration_bounds = array<i64: 2>, scalar_prefetch = 0 : i64, scratch_operands = 2 : i64, tpu.core_type = #tpu.core_type<tc>, window_params = [{transform_indices = @transform_0, window_bounds = array<i64: 1, 8, 778>}, {pipeline_mode = #tpu.pipeline_mode<synchronous>, transform_indices = @transform_1, window_bounds = array<i64: 8, 216>}, {pipeline_mode = #tpu.pipeline_mode<synchronous>, transform_indices = @transform_2, window_bounds = array<i64: 8, 1>}, {pipeline_mode = #tpu.pipeline_mode<synchronous>, transform_indices = @transform_3, window_bounds = array<i64: 8, 216>}, {pipeline_mode = #tpu.pipeline_mode<synchronous>, transform_indices = @transform_4, window_bounds = array<i64: 8, 1>}, {transform_indices = @transform_5, window_bounds = array<i64: 2>}, {pipeline_mode = #tpu.pipeline_mode<synchronous>, transform_indices = @transform_6, window_bounds = array<i64: 1, 778>}, {transform_indices = @transform_7, window_bounds = array<i64: 1, 8, 778>}]} {
    %c0 = arith.constant 0 : index
    %c0_0 = arith.constant 0 : index
    %c0_1 = arith.constant 0 : index
    %0 = vector.load %arg1[%c0, %c0_0, %c0_1] : memref<1x8x778xf32, #tpu.memory_space<vmem>>, vector<1x8x778xf32>
    %1 = vector.shape_cast %0 : vector<1x8x778xf32> to vector<8x778xf32>
    %c0_2 = arith.constant 0 : index
    %c0_3 = arith.constant 0 : index
    %2 = vector.load %arg7[%c0_2, %c0_3] : memref<1x778xf32, #tpu.memory_space<vmem>>, vector<1x778xf32>
    %c0_4 = arith.constant 0 : index
    %3 = memref.load %arg6[%c0_4] : memref<2xf32, #tpu.memory_space<smem>>
    %c1 = arith.constant 1 : index
    %4 = memref.load %arg6[%c1] : memref<2xf32, #tpu.memory_space<smem>>
    %cst = arith.constant dense<0.000000e+00> : vector<8xf32>
    %5 = vector.multi_reduction <add>, %1, %cst [1] : vector<8x778xf32> to vector<8xf32>
    %6 = vector.shape_cast %5 : vector<8xf32> to vector<8x1xf32>
    %cst_5 = arith.constant 0.001953125 : f32
    %7 = vector.broadcast %cst_5 : f32 to vector<8x1xf32>
    %8 = arith.mulf %6, %7 : vector<8x1xf32>
    %9 = vector.broadcast %8 : vector<8x1xf32> to vector<8x778xf32>
    %10 = arith.subf %1, %9 : vector<8x778xf32>
    %11 = vector.broadcast %2 : vector<1x778xf32> to vector<8x778xf32>
    %12 = arith.mulf %10, %11 : vector<8x778xf32>
    %13 = arith.mulf %12, %12 : vector<8x778xf32>
    %cst_6 = arith.constant dense<0.000000e+00> : vector<8xf32>
    %14 = vector.multi_reduction <add>, %13, %cst_6 [1] : vector<8x778xf32> to vector<8xf32>
    %15 = vector.shape_cast %14 : vector<8xf32> to vector<8x1xf32>
    %cst_7 = arith.constant 0.001953125 : f32
    %16 = vector.broadcast %cst_7 : f32 to vector<8x1xf32>
    %17 = arith.mulf %15, %16 : vector<8x1xf32>
    %cst_8 = arith.constant 9.99999974E-6 : f32
    %18 = vector.broadcast %cst_8 : f32 to vector<8x1xf32>
    %19 = arith.addf %17, %18 : vector<8x1xf32>
    %20 = math.rsqrt %19 : vector<8x1xf32>
    %21 = vector.broadcast %20 : vector<8x1xf32> to vector<8x778xf32>
    %22 = arith.mulf %12, %21 : vector<8x778xf32>
    %cst_9 = arith.constant 0.000000e+00 : f32
    %23 = vector.broadcast %cst_9 : f32 to vector<8x778xf32>
    %24 = arith.cmpf oge, %22, %23 : vector<8x778xf32>
    %25 = vector.broadcast %3 : f32 to vector<8x778xf32>
    %26 = arith.mulf %25, %22 : vector<8x778xf32>
    %27 = arith.select %24, %22, %26 : vector<8x778xi1>, vector<8x778xf32>
    %cst_10 = arith.constant 0.000000e+00 : f32
    %28 = vector.broadcast %cst_10 : f32 to vector<8x111xf32>
    %c0_11 = arith.constant 0 : index
    %c0_12 = arith.constant 0 : index
    %29 = vector.load %arg9[%c0_11, %c0_12] : memref<8x1000xf32, #tpu.memory_space<vmem>>, vector<8x111xf32>
    tpu.vector_store %arg9[%c0_11, %c0_12], %28 {strides = array<i32>} : memref<8x1000xf32, #tpu.memory_space<vmem>>, vector<8x111xf32>,
    %c0_13 = arith.constant 0 : index
    %c889 = arith.constant 889 : index
    %30 = vector.load %arg9[%c0_13, %c889] : memref<8x1000xf32, #tpu.memory_space<vmem>>, vector<8x111xf32>
    tpu.vector_store %arg9[%c0_13, %c889], %28 {strides = array<i32>} : memref<8x1000xf32, #tpu.memory_space<vmem>>, vector<8x111xf32>,
    %c0_14 = arith.constant 0 : index
    %c111 = arith.constant 111 : index
    %31 = vector.load %arg9[%c0_14, %c111] : memref<8x1000xf32, #tpu.memory_space<vmem>>, vector<8x778xf32>
    tpu.vector_store %arg9[%c0_14, %c111], %27 {strides = array<i32>} : memref<8x1000xf32, #tpu.memory_space<vmem>>, vector<8x778xf32>,
    %c0_15 = arith.constant 0 : index
    %c0_16 = arith.constant 0 : index
    %32 = vector.load %arg9[%c0_15, %c0_16] : memref<8x1000xf32, #tpu.memory_space<vmem>>, vector<8x1000xf32>
    %33 = vector.extract_strided_slice %32 {offsets = [0, 0], sizes = [8, 778], strides = [1, 1]} : vector<8x1000xf32> to vector<8x778xf32>
    %c0_17 = arith.constant 0 : index
    %c0_18 = arith.constant 0 : index
    %34 = vector.load %arg10[%c0_17, %c0_18] : memref<216x778xf32, #tpu.memory_space<vmem>>, vector<8x778xf32>
    tpu.vector_store %arg10[%c0_17, %c0_18], %33 {strides = array<i32>} : memref<216x778xf32, #tpu.memory_space<vmem>>, vector<8x778xf32>,
    %35 = vector.extract_strided_slice %32 {offsets = [0, 1], sizes = [8, 778], strides = [1, 1]} : vector<8x1000xf32> to vector<8x778xf32>
    %c8 = arith.constant 8 : index
    %c0_19 = arith.constant 0 : index
    %36 = vector.load %arg10[%c8, %c0_19] : memref<216x778xf32, #tpu.memory_space<vmem>>, vector<8x778xf32>
    tpu.vector_store %arg10[%c8, %c0_19], %35 {strides = array<i32>} : memref<216x778xf32, #tpu.memory_space<vmem>>, vector<8x778xf32>,
    %37 = vector.extract_strided_slice %32 {offsets = [0, 2], sizes = [8, 778], strides = [1, 1]} : vector<8x1000xf32> to vector<8x778xf32>
    %c16 = arith.constant 16 : index
    %c0_20 = arith.constant 0 : index
    %38 = vector.load %arg10[%c16, %c0_20] : memref<216x778xf32, #tpu.memory_space<vmem>>, vector<8x778xf32>
    tpu.vector_store %arg10[%c16, %c0_20], %37 {strides = array<i32>} : memref<216x778xf32, #tpu.memory_space<vmem>>, vector<8x778xf32>,
    %39 = vector.extract_strided_slice %32 {offsets = [0, 10], sizes = [8, 778], strides = [1, 1]} : vector<8x1000xf32> to vector<8x778xf32>
    %c24 = arith.constant 24 : index
    %c0_21 = arith.constant 0 : index
    %40 = vector.load %arg10[%c24, %c0_21] : memref<216x778xf32, #tpu.memory_space<vmem>>, vector<8x778xf32>
    tpu.vector_store %arg10[%c24, %c0_21], %39 {strides = array<i32>} : memref<216x778xf32, #tpu.memory_space<vmem>>, vector<8x778xf32>,
    %41 = vector.extract_strided_slice %32 {offsets = [0, 11], sizes = [8, 778], strides = [1, 1]} : vector<8x1000xf32> to vector<8x778xf32>
    %c32 = arith.constant 32 : index
    %c0_22 = arith.constant 0 : index
    %42 = vector.load %arg10[%c32, %c0_22] : memref<216x778xf32, #tpu.memory_space<vmem>>, vector<8x778xf32>
    tpu.vector_store %arg10[%c32, %c0_22], %41 {strides = array<i32>} : memref<216x778xf32, #tpu.memory_space<vmem>>, vector<8x778xf32>,
    %43 = vector.extract_strided_slice %32 {offsets = [0, 12], sizes = [8, 778], strides = [1, 1]} : vector<8x1000xf32> to vector<8x778xf32>
    %c40 = arith.constant 40 : index
    %c0_23 = arith.constant 0 : index
    %44 = vector.load %arg10[%c40, %c0_23] : memref<216x778xf32, #tpu.memory_space<vmem>>, vector<8x778xf32>
    tpu.vector_store %arg10[%c40, %c0_23], %43 {strides = array<i32>} : memref<216x778xf32, #tpu.memory_space<vmem>>, vector<8x778xf32>,
    %45 = vector.extract_strided_slice %32 {offsets = [0, 20], sizes = [8, 778], strides = [1, 1]} : vector<8x1000xf32> to vector<8x778xf32>
    %c48 = arith.constant 48 : index
    %c0_24 = arith.constant 0 : index
    %46 = vector.load %arg10[%c48, %c0_24] : memref<216x778xf32, #tpu.memory_space<vmem>>, vector<8x778xf32>
    tpu.vector_store %arg10[%c48, %c0_24], %45 {strides = array<i32>} : memref<216x778xf32, #tpu.memory_space<vmem>>, vector<8x778xf32>,
    %47 = vector.extract_strided_slice %32 {offsets = [0, 21], sizes = [8, 778], strides = [1, 1]} : vector<8x1000xf32> to vector<8x778xf32>
    %c56 = arith.constant 56 : index
    %c0_25 = arith.constant 0 : index
    %48 = vector.load %arg10[%c56, %c0_25] : memref<216x778xf32, #tpu.memory_space<vmem>>, vector<8x778xf32>
    tpu.vector_store %arg10[%c56, %c0_25], %47 {strides = array<i32>} : memref<216x778xf32, #tpu.memory_space<vmem>>, vector<8x778xf32>,
    %49 = vector.extract_strided_slice %32 {offsets = [0, 22], sizes = [8, 778], strides = [1, 1]} : vector<8x1000xf32> to vector<8x778xf32>
    %c64 = arith.constant 64 : index
    %c0_26 = arith.constant 0 : index
    %50 = vector.load %arg10[%c64, %c0_26] : memref<216x778xf32, #tpu.memory_space<vmem>>, vector<8x778xf32>
    tpu.vector_store %arg10[%c64, %c0_26], %49 {strides = array<i32>} : memref<216x778xf32, #tpu.memory_space<vmem>>, vector<8x778xf32>,
    %51 = vector.extract_strided_slice %32 {offsets = [0, 100], sizes = [8, 778], strides = [1, 1]} : vector<8x1000xf32> to vector<8x778xf32>
    %c72 = arith.constant 72 : index
    %c0_27 = arith.constant 0 : index
    %52 = vector.load %arg10[%c72, %c0_27] : memref<216x778xf32, #tpu.memory_space<vmem>>, vector<8x778xf32>
    tpu.vector_store %arg10[%c72, %c0_27], %51 {strides = array<i32>} : memref<216x778xf32, #tpu.memory_space<vmem>>, vector<8x778xf32>,
    %53 = vector.extract_strided_slice %32 {offsets = [0, 101], sizes = [8, 778], strides = [1, 1]} : vector<8x1000xf32> to vector<8x778xf32>
    %c80 = arith.constant 80 : index
    %c0_28 = arith.constant 0 : index
    %54 = vector.load %arg10[%c80, %c0_28] : memref<216x778xf32, #tpu.memory_space<vmem>>, vector<8x778xf32>
    tpu.vector_store %arg10[%c80, %c0_28], %53 {strides = array<i32>} : memref<216x778xf32, #tpu.memory_space<vmem>>, vector<8x778xf32>,
    %55 = vector.extract_strided_slice %32 {offsets = [0, 102], sizes = [8, 778], strides = [1, 1]} : vector<8x1000xf32> to vector<8x778xf32>
    %c88 = arith.constant 88 : index
    %c0_29 = arith.constant 0 : index
    %56 = vector.load %arg10[%c88, %c0_29] : memref<216x778xf32, #tpu.memory_space<vmem>>, vector<8x778xf32>
    tpu.vector_store %arg10[%c88, %c0_29], %55 {strides = array<i32>} : memref<216x778xf32, #tpu.memory_space<vmem>>, vector<8x778xf32>,
    %57 = vector.extract_strided_slice %32 {offsets = [0, 110], sizes = [8, 778], strides = [1, 1]} : vector<8x1000xf32> to vector<8x778xf32>
    %c96 = arith.constant 96 : index
    %c0_30 = arith.constant 0 : index
    %58 = vector.load %arg10[%c96, %c0_30] : memref<216x778xf32, #tpu.memory_space<vmem>>, vector<8x778xf32>
    tpu.vector_store %arg10[%c96, %c0_30], %57 {strides = array<i32>} : memref<216x778xf32, #tpu.memory_space<vmem>>, vector<8x778xf32>,
    %59 = vector.extract_strided_slice %32 {offsets = [0, 111], sizes = [8, 778], strides = [1, 1]} : vector<8x1000xf32> to vector<8x778xf32>
    %c104 = arith.constant 104 : index
    %c0_31 = arith.constant 0 : index
    %60 = vector.load %arg10[%c104, %c0_31] : memref<216x778xf32, #tpu.memory_space<vmem>>, vector<8x778xf32>
    tpu.vector_store %arg10[%c104, %c0_31], %59 {strides = array<i32>} : memref<216x778xf32, #tpu.memory_space<vmem>>, vector<8x778xf32>,
    %61 = vector.extract_strided_slice %32 {offsets = [0, 112], sizes = [8, 778], strides = [1, 1]} : vector<8x1000xf32> to vector<8x778xf32>
    %c112 = arith.constant 112 : index
    %c0_32 = arith.constant 0 : index
    %62 = vector.load %arg10[%c112, %c0_32] : memref<216x778xf32, #tpu.memory_space<vmem>>, vector<8x778xf32>
    tpu.vector_store %arg10[%c112, %c0_32], %61 {strides = array<i32>} : memref<216x778xf32, #tpu.memory_space<vmem>>, vector<8x778xf32>,
    %63 = vector.extract_strided_slice %32 {offsets = [0, 120], sizes = [8, 778], strides = [1, 1]} : vector<8x1000xf32> to vector<8x778xf32>
    %c120 = arith.constant 120 : index
    %c0_33 = arith.constant 0 : index
    %64 = vector.load %arg10[%c120, %c0_33] : memref<216x778xf32, #tpu.memory_space<vmem>>, vector<8x778xf32>
    tpu.vector_store %arg10[%c120, %c0_33], %63 {strides = array<i32>} : memref<216x778xf32, #tpu.memory_space<vmem>>, vector<8x778xf32>,
    %65 = vector.extract_strided_slice %32 {offsets = [0, 121], sizes = [8, 778], strides = [1, 1]} : vector<8x1000xf32> to vector<8x778xf32>
    %c128 = arith.constant 128 : index
    %c0_34 = arith.constant 0 : index
    %66 = vector.load %arg10[%c128, %c0_34] : memref<216x778xf32, #tpu.memory_space<vmem>>, vector<8x778xf32>
    tpu.vector_store %arg10[%c128, %c0_34], %65 {strides = array<i32>} : memref<216x778xf32, #tpu.memory_space<vmem>>, vector<8x778xf32>,
    %67 = vector.extract_strided_slice %32 {offsets = [0, 122], sizes = [8, 778], strides = [1, 1]} : vector<8x1000xf32> to vector<8x778xf32>
    %c136 = arith.constant 136 : index
    %c0_35 = arith.constant 0 : index
    %68 = vector.load %arg10[%c136, %c0_35] : memref<216x778xf32, #tpu.memory_space<vmem>>, vector<8x778xf32>
    tpu.vector_store %arg10[%c136, %c0_35], %67 {strides = array<i32>} : memref<216x778xf32, #tpu.memory_space<vmem>>, vector<8x778xf32>,
    %69 = vector.extract_strided_slice %32 {offsets = [0, 200], sizes = [8, 778], strides = [1, 1]} : vector<8x1000xf32> to vector<8x778xf32>
    %c144 = arith.constant 144 : index
    %c0_36 = arith.constant 0 : index
    %70 = vector.load %arg10[%c144, %c0_36] : memref<216x778xf32, #tpu.memory_space<vmem>>, vector<8x778xf32>
    tpu.vector_store %arg10[%c144, %c0_36], %69 {strides = array<i32>} : memref<216x778xf32, #tpu.memory_space<vmem>>, vector<8x778xf32>,
    %71 = vector.extract_strided_slice %32 {offsets = [0, 201], sizes = [8, 778], strides = [1, 1]} : vector<8x1000xf32> to vector<8x778xf32>
    %c152 = arith.constant 152 : index
    %c0_37 = arith.constant 0 : index
    %72 = vector.load %arg10[%c152, %c0_37] : memref<216x778xf32, #tpu.memory_space<vmem>>, vector<8x778xf32>
    tpu.vector_store %arg10[%c152, %c0_37], %71 {strides = array<i32>} : memref<216x778xf32, #tpu.memory_space<vmem>>, vector<8x778xf32>,
    %73 = vector.extract_strided_slice %32 {offsets = [0, 202], sizes = [8, 778], strides = [1, 1]} : vector<8x1000xf32> to vector<8x778xf32>
    %c160 = arith.constant 160 : index
    %c0_38 = arith.constant 0 : index
    %74 = vector.load %arg10[%c160, %c0_38] : memref<216x778xf32, #tpu.memory_space<vmem>>, vector<8x778xf32>
    tpu.vector_store %arg10[%c160, %c0_38], %73 {strides = array<i32>} : memref<216x778xf32, #tpu.memory_space<vmem>>, vector<8x778xf32>,
    %75 = vector.extract_strided_slice %32 {offsets = [0, 210], sizes = [8, 778], strides = [1, 1]} : vector<8x1000xf32> to vector<8x778xf32>
    %c168 = arith.constant 168 : index
    %c0_39 = arith.constant 0 : index
    %76 = vector.load %arg10[%c168, %c0_39] : memref<216x778xf32, #tpu.memory_space<vmem>>, vector<8x778xf32>
    tpu.vector_store %arg10[%c168, %c0_39], %75 {strides = array<i32>} : memref<216x778xf32, #tpu.memory_space<vmem>>, vector<8x778xf32>,
    %77 = vector.extract_strided_slice %32 {offsets = [0, 211], sizes = [8, 778], strides = [1, 1]} : vector<8x1000xf32> to vector<8x778xf32>
    %c176 = arith.constant 176 : index
    %c0_40 = arith.constant 0 : index
    %78 = vector.load %arg10[%c176, %c0_40] : memref<216x778xf32, #tpu.memory_space<vmem>>, vector<8x778xf32>
    tpu.vector_store %arg10[%c176, %c0_40], %77 {strides = array<i32>} : memref<216x778xf32, #tpu.memory_space<vmem>>, vector<8x778xf32>,
    %79 = vector.extract_strided_slice %32 {offsets = [0, 212], sizes = [8, 778], strides = [1, 1]} : vector<8x1000xf32> to vector<8x778xf32>
    %c184 = arith.constant 184 : index
    %c0_41 = arith.constant 0 : index
    %80 = vector.load %arg10[%c184, %c0_41] : memref<216x778xf32, #tpu.memory_space<vmem>>, vector<8x778xf32>
    tpu.vector_store %arg10[%c184, %c0_41], %79 {strides = array<i32>} : memref<216x778xf32, #tpu.memory_space<vmem>>, vector<8x778xf32>,
    %81 = vector.extract_strided_slice %32 {offsets = [0, 220], sizes = [8, 778], strides = [1, 1]} : vector<8x1000xf32> to vector<8x778xf32>
    %c192 = arith.constant 192 : index
    %c0_42 = arith.constant 0 : index
    %82 = vector.load %arg10[%c192, %c0_42] : memref<216x778xf32, #tpu.memory_space<vmem>>, vector<8x778xf32>
    tpu.vector_store %arg10[%c192, %c0_42], %81 {strides = array<i32>} : memref<216x778xf32, #tpu.memory_space<vmem>>, vector<8x778xf32>,
    %83 = vector.extract_strided_slice %32 {offsets = [0, 221], sizes = [8, 778], strides = [1, 1]} : vector<8x1000xf32> to vector<8x778xf32>
    %c200 = arith.constant 200 : index
    %c0_43 = arith.constant 0 : index
    %84 = vector.load %arg10[%c200, %c0_43] : memref<216x778xf32, #tpu.memory_space<vmem>>, vector<8x778xf32>
    tpu.vector_store %arg10[%c200, %c0_43], %83 {strides = array<i32>} : memref<216x778xf32, #tpu.memory_space<vmem>>, vector<8x778xf32>,
    %85 = vector.extract_strided_slice %32 {offsets = [0, 222], sizes = [8, 778], strides = [1, 1]} : vector<8x1000xf32> to vector<8x778xf32>
    %c208 = arith.constant 208 : index
    %c0_44 = arith.constant 0 : index
    %86 = vector.load %arg10[%c208, %c0_44] : memref<216x778xf32, #tpu.memory_space<vmem>>, vector<8x778xf32>
    tpu.vector_store %arg10[%c208, %c0_44], %85 {strides = array<i32>} : memref<216x778xf32, #tpu.memory_space<vmem>>, vector<8x778xf32>,
    %c0_45 = arith.constant 0 : index
    %c0_46 = arith.constant 0 : index
    %87 = vector.load %arg2[%c0_45, %c0_46] : memref<8x216xbf16, #tpu.memory_space<vmem>>, vector<8x216xbf16>
    %c0_47 = arith.constant 0 : index
    %c0_48 = arith.constant 0 : index
    %88 = vector.load %arg10[%c0_47, %c0_48] : memref<216x778xf32, #tpu.memory_space<vmem>>, vector<216x778xf32>
    %89 = arith.truncf %88 : vector<216x778xf32> to vector<216x778xbf16>
    %cst_49 = arith.constant dense<0.000000e+00> : vector<8x778xf32>
    %90 = tpu.matmul %87, %89, %cst_49 {dimension_numbers = #tpu.dot_dimension_numbers<[1], [0], [0], [1], [0, 0, 1, 1], [], []>} : vector<8x216xbf16>, vector<216x778xbf16>, vector<8x778xf32> -> vector<8x778xf32>
    %c0_50 = arith.constant 0 : index
    %c0_51 = arith.constant 0 : index
    %91 = vector.load %arg3[%c0_50, %c0_51] : memref<8x1xf32, #tpu.memory_space<vmem>>, vector<8x1xf32>
    %92 = vector.broadcast %91 : vector<8x1xf32> to vector<8x778xf32>
    %93 = arith.addf %90, %92 : vector<8x778xf32>
    %94 = vector.broadcast %2 : vector<1x778xf32> to vector<8x778xf32>
    %95 = arith.mulf %94, %93 : vector<8x778xf32>
    %cst_52 = arith.constant dense<0.000000e+00> : vector<8xf32>
    %96 = vector.multi_reduction <add>, %95, %cst_52 [1] : vector<8x778xf32> to vector<8xf32>
    %97 = vector.shape_cast %96 : vector<8xf32> to vector<8x1xf32>
    %cst_53 = arith.constant 0.001953125 : f32
    %98 = vector.broadcast %cst_53 : f32 to vector<8x1xf32>
    %99 = arith.mulf %97, %98 : vector<8x1xf32>
    %100 = vector.broadcast %99 : vector<8x1xf32> to vector<8x778xf32>
    %101 = arith.subf %95, %100 : vector<8x778xf32>
    %102 = vector.broadcast %2 : vector<1x778xf32> to vector<8x778xf32>
    %103 = arith.mulf %101, %102 : vector<8x778xf32>
    %104 = arith.mulf %103, %103 : vector<8x778xf32>
    %cst_54 = arith.constant dense<0.000000e+00> : vector<8xf32>
    %105 = vector.multi_reduction <add>, %104, %cst_54 [1] : vector<8x778xf32> to vector<8xf32>
    %106 = vector.shape_cast %105 : vector<8xf32> to vector<8x1xf32>
    %cst_55 = arith.constant 0.001953125 : f32
    %107 = vector.broadcast %cst_55 : f32 to vector<8x1xf32>
    %108 = arith.mulf %106, %107 : vector<8x1xf32>
    %cst_56 = arith.constant 9.99999974E-6 : f32
    %109 = vector.broadcast %cst_56 : f32 to vector<8x1xf32>
    %110 = arith.addf %108, %109 : vector<8x1xf32>
    %111 = math.rsqrt %110 : vector<8x1xf32>
    %112 = vector.broadcast %111 : vector<8x1xf32> to vector<8x778xf32>
    %113 = arith.mulf %103, %112 : vector<8x778xf32>
    %cst_57 = arith.constant 0.000000e+00 : f32
    %114 = vector.broadcast %cst_57 : f32 to vector<8x778xf32>
    %115 = arith.cmpf oge, %113, %114 : vector<8x778xf32>
    %116 = vector.broadcast %4 : f32 to vector<8x778xf32>
    %117 = arith.mulf %116, %113 : vector<8x778xf32>
    %118 = arith.select %115, %113, %117 : vector<8x778xi1>, vector<8x778xf32>
    %c0_58 = arith.constant 0 : index
    %c111_59 = arith.constant 111 : index
    %119 = vector.load %arg9[%c0_58, %c111_59] : memref<8x1000xf32, #tpu.memory_space<vmem>>, vector<8x778xf32>
    tpu.vector_store %arg9[%c0_58, %c111_59], %118 {strides = array<i32>} : memref<8x1000xf32, #tpu.memory_space<vmem>>, vector<8x778xf32>,
    %c0_60 = arith.constant 0 : index
    %c0_61 = arith.constant 0 : index
    %120 = vector.load %arg9[%c0_60, %c0_61] : memref<8x1000xf32, #tpu.memory_space<vmem>>, vector<8x1000xf32>
    %121 = vector.extract_strided_slice %120 {offsets = [0, 0], sizes = [8, 778], strides = [1, 1]} : vector<8x1000xf32> to vector<8x778xf32>
    %c0_62 = arith.constant 0 : index
    %c0_63 = arith.constant 0 : index
    %122 = vector.load %arg10[%c0_62, %c0_63] : memref<216x778xf32, #tpu.memory_space<vmem>>, vector<8x778xf32>
    tpu.vector_store %arg10[%c0_62, %c0_63], %121 {strides = array<i32>} : memref<216x778xf32, #tpu.memory_space<vmem>>, vector<8x778xf32>,
    %123 = vector.extract_strided_slice %120 {offsets = [0, 1], sizes = [8, 778], strides = [1, 1]} : vector<8x1000xf32> to vector<8x778xf32>
    %c8_64 = arith.constant 8 : index
    %c0_65 = arith.constant 0 : index
    %124 = vector.load %arg10[%c8_64, %c0_65] : memref<216x778xf32, #tpu.memory_space<vmem>>, vector<8x778xf32>
    tpu.vector_store %arg10[%c8_64, %c0_65], %123 {strides = array<i32>} : memref<216x778xf32, #tpu.memory_space<vmem>>, vector<8x778xf32>,
    %125 = vector.extract_strided_slice %120 {offsets = [0, 2], sizes = [8, 778], strides = [1, 1]} : vector<8x1000xf32> to vector<8x778xf32>
    %c16_66 = arith.constant 16 : index
    %c0_67 = arith.constant 0 : index
    %126 = vector.load %arg10[%c16_66, %c0_67] : memref<216x778xf32, #tpu.memory_space<vmem>>, vector<8x778xf32>
    tpu.vector_store %arg10[%c16_66, %c0_67], %125 {strides = array<i32>} : memref<216x778xf32, #tpu.memory_space<vmem>>, vector<8x778xf32>,
    %127 = vector.extract_strided_slice %120 {offsets = [0, 10], sizes = [8, 778], strides = [1, 1]} : vector<8x1000xf32> to vector<8x778xf32>
    %c24_68 = arith.constant 24 : index
    %c0_69 = arith.constant 0 : index
    %128 = vector.load %arg10[%c24_68, %c0_69] : memref<216x778xf32, #tpu.memory_space<vmem>>, vector<8x778xf32>
    tpu.vector_store %arg10[%c24_68, %c0_69], %127 {strides = array<i32>} : memref<216x778xf32, #tpu.memory_space<vmem>>, vector<8x778xf32>,
    %129 = vector.extract_strided_slice %120 {offsets = [0, 11], sizes = [8, 778], strides = [1, 1]} : vector<8x1000xf32> to vector<8x778xf32>
    %c32_70 = arith.constant 32 : index
    %c0_71 = arith.constant 0 : index
    %130 = vector.load %arg10[%c32_70, %c0_71] : memref<216x778xf32, #tpu.memory_space<vmem>>, vector<8x778xf32>
    tpu.vector_store %arg10[%c32_70, %c0_71], %129 {strides = array<i32>} : memref<216x778xf32, #tpu.memory_space<vmem>>, vector<8x778xf32>,
    %131 = vector.extract_strided_slice %120 {offsets = [0, 12], sizes = [8, 778], strides = [1, 1]} : vector<8x1000xf32> to vector<8x778xf32>
    %c40_72 = arith.constant 40 : index
    %c0_73 = arith.constant 0 : index
    %132 = vector.load %arg10[%c40_72, %c0_73] : memref<216x778xf32, #tpu.memory_space<vmem>>, vector<8x778xf32>
    tpu.vector_store %arg10[%c40_72, %c0_73], %131 {strides = array<i32>} : memref<216x778xf32, #tpu.memory_space<vmem>>, vector<8x778xf32>,
    %133 = vector.extract_strided_slice %120 {offsets = [0, 20], sizes = [8, 778], strides = [1, 1]} : vector<8x1000xf32> to vector<8x778xf32>
    %c48_74 = arith.constant 48 : index
    %c0_75 = arith.constant 0 : index
    %134 = vector.load %arg10[%c48_74, %c0_75] : memref<216x778xf32, #tpu.memory_space<vmem>>, vector<8x778xf32>
    tpu.vector_store %arg10[%c48_74, %c0_75], %133 {strides = array<i32>} : memref<216x778xf32, #tpu.memory_space<vmem>>, vector<8x778xf32>,
    %135 = vector.extract_strided_slice %120 {offsets = [0, 21], sizes = [8, 778], strides = [1, 1]} : vector<8x1000xf32> to vector<8x778xf32>
    %c56_76 = arith.constant 56 : index
    %c0_77 = arith.constant 0 : index
    %136 = vector.load %arg10[%c56_76, %c0_77] : memref<216x778xf32, #tpu.memory_space<vmem>>, vector<8x778xf32>
    tpu.vector_store %arg10[%c56_76, %c0_77], %135 {strides = array<i32>} : memref<216x778xf32, #tpu.memory_space<vmem>>, vector<8x778xf32>,
    %137 = vector.extract_strided_slice %120 {offsets = [0, 22], sizes = [8, 778], strides = [1, 1]} : vector<8x1000xf32> to vector<8x778xf32>
    %c64_78 = arith.constant 64 : index
    %c0_79 = arith.constant 0 : index
    %138 = vector.load %arg10[%c64_78, %c0_79] : memref<216x778xf32, #tpu.memory_space<vmem>>, vector<8x778xf32>
    tpu.vector_store %arg10[%c64_78, %c0_79], %137 {strides = array<i32>} : memref<216x778xf32, #tpu.memory_space<vmem>>, vector<8x778xf32>,
    %139 = vector.extract_strided_slice %120 {offsets = [0, 100], sizes = [8, 778], strides = [1, 1]} : vector<8x1000xf32> to vector<8x778xf32>
    %c72_80 = arith.constant 72 : index
    %c0_81 = arith.constant 0 : index
    %140 = vector.load %arg10[%c72_80, %c0_81] : memref<216x778xf32, #tpu.memory_space<vmem>>, vector<8x778xf32>
    tpu.vector_store %arg10[%c72_80, %c0_81], %139 {strides = array<i32>} : memref<216x778xf32, #tpu.memory_space<vmem>>, vector<8x778xf32>,
    %141 = vector.extract_strided_slice %120 {offsets = [0, 101], sizes = [8, 778], strides = [1, 1]} : vector<8x1000xf32> to vector<8x778xf32>
    %c80_82 = arith.constant 80 : index
    %c0_83 = arith.constant 0 : index
    %142 = vector.load %arg10[%c80_82, %c0_83] : memref<216x778xf32, #tpu.memory_space<vmem>>, vector<8x778xf32>
    tpu.vector_store %arg10[%c80_82, %c0_83], %141 {strides = array<i32>} : memref<216x778xf32, #tpu.memory_space<vmem>>, vector<8x778xf32>,
    %143 = vector.extract_strided_slice %120 {offsets = [0, 102], sizes = [8, 778], strides = [1, 1]} : vector<8x1000xf32> to vector<8x778xf32>
    %c88_84 = arith.constant 88 : index
    %c0_85 = arith.constant 0 : index
    %144 = vector.load %arg10[%c88_84, %c0_85] : memref<216x778xf32, #tpu.memory_space<vmem>>, vector<8x778xf32>
    tpu.vector_store %arg10[%c88_84, %c0_85], %143 {strides = array<i32>} : memref<216x778xf32, #tpu.memory_space<vmem>>, vector<8x778xf32>,
    %145 = vector.extract_strided_slice %120 {offsets = [0, 110], sizes = [8, 778], strides = [1, 1]} : vector<8x1000xf32> to vector<8x778xf32>
    %c96_86 = arith.constant 96 : index
    %c0_87 = arith.constant 0 : index
    %146 = vector.load %arg10[%c96_86, %c0_87] : memref<216x778xf32, #tpu.memory_space<vmem>>, vector<8x778xf32>
    tpu.vector_store %arg10[%c96_86, %c0_87], %145 {strides = array<i32>} : memref<216x778xf32, #tpu.memory_space<vmem>>, vector<8x778xf32>,
    %147 = vector.extract_strided_slice %120 {offsets = [0, 111], sizes = [8, 778], strides = [1, 1]} : vector<8x1000xf32> to vector<8x778xf32>
    %c104_88 = arith.constant 104 : index
    %c0_89 = arith.constant 0 : index
    %148 = vector.load %arg10[%c104_88, %c0_89] : memref<216x778xf32, #tpu.memory_space<vmem>>, vector<8x778xf32>
    tpu.vector_store %arg10[%c104_88, %c0_89], %147 {strides = array<i32>} : memref<216x778xf32, #tpu.memory_space<vmem>>, vector<8x778xf32>,
    %149 = vector.extract_strided_slice %120 {offsets = [0, 112], sizes = [8, 778], strides = [1, 1]} : vector<8x1000xf32> to vector<8x778xf32>
    %c112_90 = arith.constant 112 : index
    %c0_91 = arith.constant 0 : index
    %150 = vector.load %arg10[%c112_90, %c0_91] : memref<216x778xf32, #tpu.memory_space<vmem>>, vector<8x778xf32>
    tpu.vector_store %arg10[%c112_90, %c0_91], %149 {strides = array<i32>} : memref<216x778xf32, #tpu.memory_space<vmem>>, vector<8x778xf32>,
    %151 = vector.extract_strided_slice %120 {offsets = [0, 120], sizes = [8, 778], strides = [1, 1]} : vector<8x1000xf32> to vector<8x778xf32>
    %c120_92 = arith.constant 120 : index
    %c0_93 = arith.constant 0 : index
    %152 = vector.load %arg10[%c120_92, %c0_93] : memref<216x778xf32, #tpu.memory_space<vmem>>, vector<8x778xf32>
    tpu.vector_store %arg10[%c120_92, %c0_93], %151 {strides = array<i32>} : memref<216x778xf32, #tpu.memory_space<vmem>>, vector<8x778xf32>,
    %153 = vector.extract_strided_slice %120 {offsets = [0, 121], sizes = [8, 778], strides = [1, 1]} : vector<8x1000xf32> to vector<8x778xf32>
    %c128_94 = arith.constant 128 : index
    %c0_95 = arith.constant 0 : index
    %154 = vector.load %arg10[%c128_94, %c0_95] : memref<216x778xf32, #tpu.memory_space<vmem>>, vector<8x778xf32>
    tpu.vector_store %arg10[%c128_94, %c0_95], %153 {strides = array<i32>} : memref<216x778xf32, #tpu.memory_space<vmem>>, vector<8x778xf32>,
    %155 = vector.extract_strided_slice %120 {offsets = [0, 122], sizes = [8, 778], strides = [1, 1]} : vector<8x1000xf32> to vector<8x778xf32>
    %c136_96 = arith.constant 136 : index
    %c0_97 = arith.constant 0 : index
    %156 = vector.load %arg10[%c136_96, %c0_97] : memref<216x778xf32, #tpu.memory_space<vmem>>, vector<8x778xf32>
    tpu.vector_store %arg10[%c136_96, %c0_97], %155 {strides = array<i32>} : memref<216x778xf32, #tpu.memory_space<vmem>>, vector<8x778xf32>,
    %157 = vector.extract_strided_slice %120 {offsets = [0, 200], sizes = [8, 778], strides = [1, 1]} : vector<8x1000xf32> to vector<8x778xf32>
    %c144_98 = arith.constant 144 : index
    %c0_99 = arith.constant 0 : index
    %158 = vector.load %arg10[%c144_98, %c0_99] : memref<216x778xf32, #tpu.memory_space<vmem>>, vector<8x778xf32>
    tpu.vector_store %arg10[%c144_98, %c0_99], %157 {strides = array<i32>} : memref<216x778xf32, #tpu.memory_space<vmem>>, vector<8x778xf32>,
    %159 = vector.extract_strided_slice %120 {offsets = [0, 201], sizes = [8, 778], strides = [1, 1]} : vector<8x1000xf32> to vector<8x778xf32>
    %c152_100 = arith.constant 152 : index
    %c0_101 = arith.constant 0 : index
    %160 = vector.load %arg10[%c152_100, %c0_101] : memref<216x778xf32, #tpu.memory_space<vmem>>, vector<8x778xf32>
    tpu.vector_store %arg10[%c152_100, %c0_101], %159 {strides = array<i32>} : memref<216x778xf32, #tpu.memory_space<vmem>>, vector<8x778xf32>,
    %161 = vector.extract_strided_slice %120 {offsets = [0, 202], sizes = [8, 778], strides = [1, 1]} : vector<8x1000xf32> to vector<8x778xf32>
    %c160_102 = arith.constant 160 : index
    %c0_103 = arith.constant 0 : index
    %162 = vector.load %arg10[%c160_102, %c0_103] : memref<216x778xf32, #tpu.memory_space<vmem>>, vector<8x778xf32>
    tpu.vector_store %arg10[%c160_102, %c0_103], %161 {strides = array<i32>} : memref<216x778xf32, #tpu.memory_space<vmem>>, vector<8x778xf32>,
    %163 = vector.extract_strided_slice %120 {offsets = [0, 210], sizes = [8, 778], strides = [1, 1]} : vector<8x1000xf32> to vector<8x778xf32>
    %c168_104 = arith.constant 168 : index
    %c0_105 = arith.constant 0 : index
    %164 = vector.load %arg10[%c168_104, %c0_105] : memref<216x778xf32, #tpu.memory_space<vmem>>, vector<8x778xf32>
    tpu.vector_store %arg10[%c168_104, %c0_105], %163 {strides = array<i32>} : memref<216x778xf32, #tpu.memory_space<vmem>>, vector<8x778xf32>,
    %165 = vector.extract_strided_slice %120 {offsets = [0, 211], sizes = [8, 778], strides = [1, 1]} : vector<8x1000xf32> to vector<8x778xf32>
    %c176_106 = arith.constant 176 : index
    %c0_107 = arith.constant 0 : index
    %166 = vector.load %arg10[%c176_106, %c0_107] : memref<216x778xf32, #tpu.memory_space<vmem>>, vector<8x778xf32>
    tpu.vector_store %arg10[%c176_106, %c0_107], %165 {strides = array<i32>} : memref<216x778xf32, #tpu.memory_space<vmem>>, vector<8x778xf32>,
    %167 = vector.extract_strided_slice %120 {offsets = [0, 212], sizes = [8, 778], strides = [1, 1]} : vector<8x1000xf32> to vector<8x778xf32>
    %c184_108 = arith.constant 184 : index
    %c0_109 = arith.constant 0 : index
    %168 = vector.load %arg10[%c184_108, %c0_109] : memref<216x778xf32, #tpu.memory_space<vmem>>, vector<8x778xf32>
    tpu.vector_store %arg10[%c184_108, %c0_109], %167 {strides = array<i32>} : memref<216x778xf32, #tpu.memory_space<vmem>>, vector<8x778xf32>,
    %169 = vector.extract_strided_slice %120 {offsets = [0, 220], sizes = [8, 778], strides = [1, 1]} : vector<8x1000xf32> to vector<8x778xf32>
    %c192_110 = arith.constant 192 : index
    %c0_111 = arith.constant 0 : index
    %170 = vector.load %arg10[%c192_110, %c0_111] : memref<216x778xf32, #tpu.memory_space<vmem>>, vector<8x778xf32>
    tpu.vector_store %arg10[%c192_110, %c0_111], %169 {strides = array<i32>} : memref<216x778xf32, #tpu.memory_space<vmem>>, vector<8x778xf32>,
    %171 = vector.extract_strided_slice %120 {offsets = [0, 221], sizes = [8, 778], strides = [1, 1]} : vector<8x1000xf32> to vector<8x778xf32>
    %c200_112 = arith.constant 200 : index
    %c0_113 = arith.constant 0 : index
    %172 = vector.load %arg10[%c200_112, %c0_113] : memref<216x778xf32, #tpu.memory_space<vmem>>, vector<8x778xf32>
    tpu.vector_store %arg10[%c200_112, %c0_113], %171 {strides = array<i32>} : memref<216x778xf32, #tpu.memory_space<vmem>>, vector<8x778xf32>,
    %173 = vector.extract_strided_slice %120 {offsets = [0, 222], sizes = [8, 778], strides = [1, 1]} : vector<8x1000xf32> to vector<8x778xf32>
    %c208_114 = arith.constant 208 : index
    %c0_115 = arith.constant 0 : index
    %174 = vector.load %arg10[%c208_114, %c0_115] : memref<216x778xf32, #tpu.memory_space<vmem>>, vector<8x778xf32>
    tpu.vector_store %arg10[%c208_114, %c0_115], %173 {strides = array<i32>} : memref<216x778xf32, #tpu.memory_space<vmem>>, vector<8x778xf32>,
    %c0_116 = arith.constant 0 : index
    %c0_117 = arith.constant 0 : index
    %175 = vector.load %arg4[%c0_116, %c0_117] : memref<8x216xbf16, #tpu.memory_space<vmem>>, vector<8x216xbf16>
    %c0_118 = arith.constant 0 : index
    %c0_119 = arith.constant 0 : index
    %176 = vector.load %arg10[%c0_118, %c0_119] : memref<216x778xf32, #tpu.memory_space<vmem>>, vector<216x778xf32>
    %177 = arith.truncf %176 : vector<216x778xf32> to vector<216x778xbf16>
    %cst_120 = arith.constant dense<0.000000e+00> : vector<8x778xf32>
    %178 = tpu.matmul %175, %177, %cst_120 {dimension_numbers = #tpu.dot_dimension_numbers<[1], [0], [0], [1], [0, 0, 1, 1], [], []>} : vector<8x216xbf16>, vector<216x778xbf16>, vector<8x778xf32> -> vector<8x778xf32>
    %c0_121 = arith.constant 0 : index
    %c0_122 = arith.constant 0 : index
    %179 = vector.load %arg5[%c0_121, %c0_122] : memref<8x1xf32, #tpu.memory_space<vmem>>, vector<8x1xf32>
    %180 = vector.broadcast %179 : vector<8x1xf32> to vector<8x778xf32>
    %181 = arith.addf %178, %180 : vector<8x778xf32>
    %182 = arith.addf %1, %181 : vector<8x778xf32>
    %c0_123 = arith.constant 0 : index
    %c0_124 = arith.constant 0 : index
    %c0_125 = arith.constant 0 : index
    %183 = vector.load %arg8[%c0_123, %c0_124, %c0_125] : memref<1x8x778xf32, #tpu.memory_space<vmem>>, vector<1x8x778xf32>
    %184 = vector.shape_cast %183 : vector<1x8x778xf32> to vector<8x778xf32>
    %185 = vector.shape_cast %182 : vector<8x778xf32> to vector<1x8x778xf32>
    tpu.vector_store %arg8[%c0_123, %c0_124, %c0_125], %185 {strides = array<i32>} : memref<1x8x778xf32, #tpu.memory_space<vmem>>, vector<1x8x778xf32>,
    return
  }
  func.func @transform_0(%arg0: i32) -> (i32, i32, i32) {
    %c0_i32 = arith.constant 0 : i32
    %c0_i32_0 = arith.constant 0 : i32
    %c0_i32_1 = arith.constant 0 : i32
    return %arg0, %c0_i32, %c0_i32_0 : i32, i32, i32
  }
  func.func @transform_1(%arg0: i32) -> (i32, i32) {
    %c0_i32 = arith.constant 0 : i32
    %c0_i32_0 = arith.constant 0 : i32
    %c0_i32_1 = arith.constant 0 : i32
    return %c0_i32, %c0_i32_0 : i32, i32
  }
  func.func @transform_2(%arg0: i32) -> (i32, i32) {
    %c0_i32 = arith.constant 0 : i32
    %c0_i32_0 = arith.constant 0 : i32
    %c0_i32_1 = arith.constant 0 : i32
    return %c0_i32, %c0_i32_0 : i32, i32
  }
  func.func @transform_3(%arg0: i32) -> (i32, i32) {
    %c0_i32 = arith.constant 0 : i32
    %c0_i32_0 = arith.constant 0 : i32
    %c0_i32_1 = arith.constant 0 : i32
    return %c0_i32, %c0_i32_0 : i32, i32
  }
  func.func @transform_4(%arg0: i32) -> (i32, i32) {
    %c0_i32 = arith.constant 0 : i32
    %c0_i32_0 = arith.constant 0 : i32
    %c0_i32_1 = arith.constant 0 : i32
    return %c0_i32, %c0_i32_0 : i32, i32
  }
  func.func @transform_5(%arg0: i32) -> i32 {
    %c0_i32 = arith.constant 0 : i32
    %c0_i32_0 = arith.constant 0 : i32
    return %c0_i32 : i32
  }
  func.func @transform_6(%arg0: i32) -> (i32, i32) {
    %c0_i32 = arith.constant 0 : i32
    %c0_i32_0 = arith.constant 0 : i32
    %c0_i32_1 = arith.constant 0 : i32
    return %c0_i32, %c0_i32_0 : i32, i32
  }
  func.func @transform_7(%arg0: i32) -> (i32, i32, i32) {
    %c0_i32 = arith.constant 0 : i32
    %c0_i32_0 = arith.constant 0 : i32
    %c0_i32_1 = arith.constant 0 : i32
    return %arg0, %c0_i32, %c0_i32_0 : i32, i32, i32
  }
}

</mosaic_0001>

<llo_original>
// kernel: tpu_custom_call.1
$region0: #{tpu_custom_call.1}
  #allocation0 [shape = 'u32[]', space=smem, size = 0x4, offset = 0x4, fixed_abs, tag = 'smem constant byte address 0x4 - core index']
  #allocation1 [shape = 'u32[144,128]{1,0:T(1,128)}', space=vmem, size = 0x12000, scoped, tag = 'internal scratch']
  #allocation2 [shape = 'f32[8,1000]{1,0:T(8,128)}', space=vmem, size = 0x8000, scoped, tag = 'scratch operand']
  #allocation3 [shape = 'f32[216,778]{1,0:T(8,128)}', space=vmem, size = 0xbd000, scoped, tag = 'scratch operand']
  %s0 = inlined_call_operand.hbm [shape: f32[2,8,778], index: 0, kind: input, shape index: {}]
  %s1 = inlined_call_operand.vmem [shape: bf16[8,216], index: 1, kind: input, shape index: {}]
  %s2 = inlined_call_operand.vmem [shape: f32[8,1], index: 2, kind: input, shape index: {}]
  %s3 = inlined_call_operand.vmem [shape: bf16[8,216], index: 3, kind: input, shape index: {}]
  %s4 = inlined_call_operand.vmem [shape: f32[8,1], index: 4, kind: input, shape index: {}]
  %s5 = inlined_call_operand.vmem [shape: f32[2], index: 5, kind: input, shape index: {}]
  %s6 = inlined_call_operand.vmem [shape: f32[1,778], index: 6, kind: input, shape index: {}]
  %s7 = inlined_call_operand.hbm [shape: f32[2,8,778], index: 7, kind: output, shape index: {}]
  %s8 = sld [smem:[#allocation0]]
  $region69: #{tpu_custom_call.1} parent=0
    _
  %s10 = ssub.s32 1, %s8
  %s11 = scalar_select 0, %s10, %s8
  $region1: #{tpu_custom_call.1} parent=0
    #allocation4 [shape = 'u8[57344]{0}', space=vmem, size = 0xe000, scoped, tag = 'input window, operand 0']
    #allocation5 [shape = 's32[2]{0}', space=sflag, size = 0x8, scoped, tag = 'scoped memory for tpu_custom_call.1']
    #allocation6 [shape = 's32[2]{0}', space=sflag, size = 0x8, scoped, tag = 'scoped memory for tpu_custom_call.1']
    #allocation7 [shape = 's32[2]{0}', space=sflag, size = 0x8, scoped, tag = 'scoped memory for tpu_custom_call.1']
    #allocation8 [shape = 'u8[512]{0}', space=smem, size = 0x200, scoped, tag = 'input window, operand 5, single buffered']
    #allocation9 [shape = 'u8[57344]{0}', space=vmem, size = 0xe000, scoped, tag = 'output window, operand 0']
    %12 = vsyncpa [#allocation5], 0
    %s13 = scalar_lea.sflag [#allocation5], 1
    %14 = vsyncpa %s13, 0
    %15 = vsyncpa [#allocation7], 0
    %16 = vsyncpa [#allocation6], 0
    %s17 = scalar_lea.sflag [#allocation6], 1
    %18 = vsyncpa %s17, 0
    loop: start=0, step=1, limit=4
    $region2: #{tpu_custom_call.1} parent=1 // loop_pre_header
      _
    $region3: #{tpu_custom_call.1} parent=1 // loop_header
      %s20 = sphi 0, %s24
      %p21 = scmp.ge.s32.totalorder %s20, 4
      %s30 = sphi 0, %s32
      %s33 = sphi 0, %s30
      %s34 = sphi 0, %s33
      %s50 = sphi 0, %s34
      %s54 = sphi 0, %s54
      %s56 = sphi 0, %s54
      %s57 = sphi 0, %s56
      %s71 = sphi 0, %s57
      %s75 = sphi 0, %s75
      %s77 = sphi 0, %s75
      %s78 = sphi 0, %s77
      %s92 = sphi 0, %s78
      %s96 = sphi 0, %s96
      %s98 = sphi 0, %s96
      %s99 = sphi 0, %s98
      %s113 = sphi 0, %s99
      %s117 = sphi 0, %s117
      %s119 = sphi 0, %s117
      %s120 = sphi 0, %s119
      %s134 = sphi 0, %s120
      %s138 = sphi 0, %s138
      %s140 = sphi 0, %s138
      %s141 = sphi 0, %s140
      %s155 = sphi 0, %s141
      %s159 = sphi 0, %s159
      %s161 = sphi 0, %s159
      %s162 = sphi 0, %s161
      %s176 = sphi 0, %s162
      %s182 = sphi 0, %s184
      %s185 = sphi 0, %s182
      %s186 = sphi 0, %s185
      %s202 = sphi 0, %s186
    $region4: #{tpu_custom_call.1} parent=1 // loop_header_branch
      %23 = sbr.rel (%p21) target = $region8
    $region5: #{tpu_custom_call.1} parent=1 // loop_body
      %s25 = ssub.s32 %s20, 1
      %s26 = ssub.s32 %s20, 2
      %s27 = sadd.s32 %s20, 1
      %s28 = ssub.s32 %s20, %s27
      %p29 = scmp.eq.s32.totalorder %s28, 0
      %s31 = sadd.s32 %s30, 1
      %s32 = scalar_select %p29, %s30, %s31
      %p35 = pneg %p29
      %p36 = scmp.eq.s32.totalorder %s20, 1
      %p37 = por %p35, %p36
      %p38 = scmp.ne.s32.totalorder %s30, %s33
      %p39 = scmp.eq.s32.totalorder %s20, 0
      %p40 = por %p38, %p39
      %p41 = scmp.ne.s32.totalorder %s30, %s33
      %p42 = scmp.eq.s32.totalorder %s25, 1
      %p43 = por %p41, %p42
      %p44 = scmp.ne.s32.totalorder %s33, %s34
      %p45 = scmp.eq.s32.totalorder %s25, 0
      %p46 = por %p44, %p45
      %p47 = scmp.ne.s32.totalorder %s33, %s34
      %p48 = scmp.eq.s32.totalorder %s26, 1
      %p49 = por %p47, %p48
      %p51 = scmp.ne.s32.totalorder %s34, %s50
      %p52 = scmp.eq.s32.totalorder %s26, 0
      %p53 = por %p51, %p52
      %s55 = sadd.s32 %s54, 1
      %p58 = scmp.eq.s32.totalorder %s20, 1
      %p59 = scmp.ne.s32.totalorder %s54, %s56
      %p60 = scmp.eq.s32.totalorder %s20, 0
      %p61 = por %p59, %p60
      %p62 = scmp.ne.s32.totalorder %s54, %s56
      %p63 = scmp.eq.s32.totalorder %s25, 1
      %p64 = por %p62, %p63
      %p65 = scmp.ne.s32.totalorder %s56, %s57
      %p66 = scmp.eq.s32.totalorder %s25, 0
      %p67 = por %p65, %p66
      %p68 = scmp.ne.s32.totalorder %s56, %s57
      %p69 = scmp.eq.s32.totalorder %s26, 1
      %p70 = por %p68, %p69
      %p72 = scmp.ne.s32.totalorder %s57, %s71
      %p73 = scmp.eq.s32.totalorder %s26, 0
      %p74 = por %p72, %p73
      %s76 = sadd.s32 %s75, 1
      %p79 = scmp.eq.s32.totalorder %s20, 1
      %p80 = scmp.ne.s32.totalorder %s75, %s77
      %p81 = scmp.eq.s32.totalorder %s20, 0
      %p82 = por %p80, %p81
      %p83 = scmp.ne.s32.totalorder %s75, %s77
      %p84 = scmp.eq.s32.totalorder %s25, 1
      %p85 = por %p83, %p84
      %p86 = scmp.ne.s32.totalorder %s77, %s78
      %p87 = scmp.eq.s32.totalorder %s25, 0
      %p88 = por %p86, %p87
      %p89 = scmp.ne.s32.totalorder %s77, %s78
      %p90 = scmp.eq.s32.totalorder %s26, 1
      %p91 = por %p89, %p90
      %p93 = scmp.ne.s32.totalorder %s78, %s92
      %p94 = scmp.eq.s32.totalorder %s26, 0
      %p95 = por %p93, %p94
      %s97 = sadd.s32 %s96, 1
      %p100 = scmp.eq.s32.totalorder %s20, 1
      %p101 = scmp.ne.s32.totalorder %s96, %s98
      %p102 = scmp.eq.s32.totalorder %s20, 0
      %p103 = por %p101, %p102
      %p104 = scmp.ne.s32.totalorder %s96, %s98
      %p105 = scmp.eq.s32.totalorder %s25, 1
      %p106 = por %p104, %p105
      %p107 = scmp.ne.s32.totalorder %s98, %s99
      %p108 = scmp.eq.s32.totalorder %s25, 0
      %p109 = por %p107, %p108
      %p110 = scmp.ne.s32.totalorder %s98, %s99
      %p111 = scmp.eq.s32.totalorder %s26, 1
      %p112 = por %p110, %p111
      %p114 = scmp.ne.s32.totalorder %s99, %s113
      %p115 = scmp.eq.s32.totalorder %s26, 0
      %p116 = por %p114, %p115
      %s118 = sadd.s32 %s117, 1
      %p121 = scmp.eq.s32.totalorder %s20, 1
      %p122 = scmp.ne.s32.totalorder %s117, %s119
      %p123 = scmp.eq.s32.totalorder %s20, 0
      %p124 = por %p122, %p123
      %p125 = scmp.ne.s32.totalorder %s117, %s119
      %p126 = scmp.eq.s32.totalorder %s25, 1
      %p127 = por %p125, %p126
      %p128 = scmp.ne.s32.totalorder %s119, %s120
      %p129 = scmp.eq.s32.totalorder %s25, 0
      %p130 = por %p128, %p129
      %p131 = scmp.ne.s32.totalorder %s119, %s120
      %p132 = scmp.eq.s32.totalorder %s26, 1
      %p133 = por %p131, %p132
      %p135 = scmp.ne.s32.totalorder %s120, %s134
      %p136 = scmp.eq.s32.totalorder %s26, 0
      %p137 = por %p135, %p136
      %s139 = sadd.s32 %s138, 1
      %p142 = scmp.eq.s32.totalorder %s20, 1
      %p143 = scmp.ne.s32.totalorder %s138, %s140
      %p144 = scmp.eq.s32.totalorder %s20, 0
      %p145 = por %p143, %p144
      %p146 = scmp.ne.s32.totalorder %s138, %s140
      %p147 = scmp.eq.s32.totalorder %s25, 1
      %p148 = por %p146, %p147
      %p149 = scmp.ne.s32.totalorder %s140, %s141
      %p150 = scmp.eq.s32.totalorder %s25, 0
      %p151 = por %p149, %p150
      %p152 = scmp.ne.s32.totalorder %s140, %s141
      %p153 = scmp.eq.s32.totalorder %s26, 1
      %p154 = por %p152, %p153
      %p156 = scmp.ne.s32.totalorder %s141, %s155
      %p157 = scmp.eq.s32.totalorder %s26, 0
      %p158 = por %p156, %p157
      %s160 = sadd.s32 %s159, 1
      %p163 = scmp.eq.s32.totalorder %s20, 1
      %p164 = scmp.ne.s32.totalorder %s159, %s161
      %p165 = scmp.eq.s32.totalorder %s20, 0
      %p166 = por %p164, %p165
      %p167 = scmp.ne.s32.totalorder %s159, %s161
      %p168 = scmp.eq.s32.totalorder %s25, 1
      %p169 = por %p167, %p168
      %p170 = scmp.ne.s32.totalorder %s161, %s162
      %p171 = scmp.eq.s32.totalorder %s25, 0
      %p172 = por %p170, %p171
      %p173 = scmp.ne.s32.totalorder %s161, %s162
      %p174 = scmp.eq.s32.totalorder %s26, 1
      %p175 = por %p173, %p174
      %p177 = scmp.ne.s32.totalorder %s162, %s176
      %p178 = scmp.eq.s32.totalorder %s26, 0
      %p179 = por %p177, %p178
      %s180 = ssub.s32 %s20, %s27
      %p181 = scmp.eq.s32.totalorder %s180, 0
      %s183 = sadd.s32 %s182, 1
      %s184 = scalar_select %p181, %s182, %s183
      %p187 = pneg %p181
      %p188 = scmp.eq.s32.totalorder %s20, 1
      %p189 = por %p187, %p188
      %p190 = scmp.ne.s32.totalorder %s182, %s185
      %p191 = scmp.eq.s32.totalorder %s20, 0
      %p192 = por %p190, %p191
      %p193 = scmp.ne.s32.totalorder %s182, %s185
      %p194 = scmp.eq.s32.totalorder %s25, 1
      %p195 = por %p193, %p194
      %p196 = scmp.ne.s32.totalorder %s185, %s186
      %p197 = scmp.eq.s32.totalorder %s25, 0
      %p198 = por %p196, %p197
      %p199 = scmp.ne.s32.totalorder %s185, %s186
      %p200 = scmp.eq.s32.totalorder %s26, 1
      %p201 = por %p199, %p200
      %p203 = scmp.ne.s32.totalorder %s186, %s202
      %p204 = scmp.eq.s32.totalorder %s26, 0
      %p205 = por %p203, %p204
      %p206 = scmp.le.s32.totalorder 1, %s20
      %p207 = scmp.lt.s32.totalorder %s20, 3
      %p208 = pnand %p206, %p207
      %p209 = pneg %p208
      // Predicated region
      $region9: #{tpu_custom_call.1} parent=5 // pred_check
        _
      $region10: #{tpu_custom_call.1} parent=5 // pred_check_branch
        %211 = sbr.rel (%p208) target = $region12
      $region11: #{tpu_custom_call.1} parent=5 // pred_region
        %s212 = ssub.s32 %s20, 1
        // Predicated region
        $region13: #{tpu_custom_call.1} parent=11 // pred_check
          %p213 = pneg %p67
        $region14: #{tpu_custom_call.1} parent=11 // pred_check_branch
          %215 = sbr.rel (%p213) target = $region16
        $region15: #{tpu_custom_call.1} parent=11 // pred_region
          _
        $region16: #{tpu_custom_call.1} parent=11 // pred_fallthru
          _
        // Predicated region
        $region17: #{tpu_custom_call.1} parent=11 // pred_check
          %p216 = pneg %p88
        $region18: #{tpu_custom_call.1} parent=11 // pred_check_branch
          %218 = sbr.rel (%p216) target = $region20
        $region19: #{tpu_custom_call.1} parent=11 // pred_region
          _
        $region20: #{tpu_custom_call.1} parent=11 // pred_fallthru
          _
        // Predicated region
        $region21: #{tpu_custom_call.1} parent=11 // pred_check
          %p219 = pneg %p109
        $region22: #{tpu_custom_call.1} parent=11 // pred_check_branch
          %221 = sbr.rel (%p219) target = $region24
        $region23: #{tpu_custom_call.1} parent=11 // pred_region
          _
        $region24: #{tpu_custom_call.1} parent=11 // pred_fallthru
          _
        // Predicated region
        $region25: #{tpu_custom_call.1} parent=11 // pred_check
          %p222 = pneg %p130
        $region26: #{tpu_custom_call.1} parent=11 // pred_check_branch
          %224 = sbr.rel (%p222) target = $region28
        $region27: #{tpu_custom_call.1} parent=11 // pred_region
          _
        $region28: #{tpu_custom_call.1} parent=11 // pred_fallthru
          _
        // Predicated region
        $region29: #{tpu_custom_call.1} parent=11 // pred_check
          %p225 = pneg %p151
        $region30: #{tpu_custom_call.1} parent=11 // pred_check_branch
          %227 = sbr.rel (%p225) target = $region32
        $region31: #{tpu_custom_call.1} parent=11 // pred_region
          %s229 = ssub.s32 16, 16
          %230 = vsyncadd [#allocation7], %s229
          %s232 = sshll.u32 %s5, 4
          %s233 = int_to_ptr.vmem [resolvable:$true] %s232
          %235 = dma.vmem_to_smem %s233, 16, [#allocation8], [#allocation7]
        $region32: #{tpu_custom_call.1} parent=11 // pred_fallthru
          _
        // Predicated region
        $region33: #{tpu_custom_call.1} parent=11 // pred_check
          %p236 = pneg %p172
        $region34: #{tpu_custom_call.1} parent=11 // pred_check_branch
          %238 = sbr.rel (%p236) target = $region36
        $region35: #{tpu_custom_call.1} parent=11 // pred_region
          _
        $region36: #{tpu_custom_call.1} parent=11 // pred_fallthru
          _
      $region12: #{tpu_custom_call.1} parent=5 // pred_fallthru
        _
      %p239 = scmp.lt.s32.totalorder %s20, 2
      // Predicated region
      $region37: #{tpu_custom_call.1} parent=5 // pred_check
        %p240 = pneg %p239
      $region38: #{tpu_custom_call.1} parent=5 // pred_check_branch
        %242 = sbr.rel (%p240) target = $region40
      $region39: #{tpu_custom_call.1} parent=5 // pred_region
        // Predicated region
        $region41: #{tpu_custom_call.1} parent=39 // pred_check
          %p243 = pneg %p40
        $region42: #{tpu_custom_call.1} parent=39 // pred_check_branch
          %245 = sbr.rel (%p243) target = $region44
        $region43: #{tpu_custom_call.1} parent=39 // pred_region
          %s246 = sand.u32 %s30, 1
          %s247 = scalar_lea.sflag [#allocation5], %s246
          %s248 = sand.u32 %s30, 1
          %s249 = smul.addr %s248, 56
          %s250 = scalar_lea.vmem [#allocation4], %s249
          %s252 = ssub.s32 896, 896
          %253 = vsyncadd %s247, %s252
          %s254 = smul.addr %s20, 7
          %s255 = smul.addr %s254, 128
          %s256 = scalar_lea.hbm %s0, %s255
          %s258 = sshll.u32 %s250, 4
          %s259 = int_to_ptr.vmem [resolvable:$true] %s258
          %261 = dma.hbm_to_vmem [thread:$0]  %s256, 896, %s259, %s247
        $region44: #{tpu_custom_call.1} parent=39 // pred_fallthru
          _
      $region40: #{tpu_custom_call.1} parent=5 // pred_fallthru
        _
      %p262 = scmp.le.s32.totalorder 1, %s20
      %p263 = scmp.lt.s32.totalorder %s20, 3
      %p264 = pnand %p262, %p263
      %p265 = pneg %p264
      // Predicated region
      $region45: #{tpu_custom_call.1} parent=5 // pred_check
        _
      $region46: #{tpu_custom_call.1} parent=5 // pred_check_branch
        %267 = sbr.rel (%p264) target = $region48
      $region47: #{tpu_custom_call.1} parent=5 // pred_region
        %s268 = ssub.s32 %s20, 1
        %s269 = sand.u32 %s33, 1
        %s270 = scalar_lea.sflag [#allocation5], %s269
        %s271 = sand.u32 %s33, 1
        %s272 = smul.addr %s271, 56
        %s273 = scalar_lea.vmem [#allocation4], %s272
        // Predicated region
        $region49: #{tpu_custom_call.1} parent=47 // pred_check
          %p274 = pneg %p46
        $region50: #{tpu_custom_call.1} parent=47 // pred_check_branch
          %276 = sbr.rel (%p274) target = $region52
        $region51: #{tpu_custom_call.1} parent=47 // pred_region
          %277 = dma.done %s270, 896
        $region52: #{tpu_custom_call.1} parent=47 // pred_fallthru
          _
        // Predicated region
        $region53: #{tpu_custom_call.1} parent=47 // pred_check
          %p278 = pneg %p151
        $region54: #{tpu_custom_call.1} parent=47 // pred_check_branch
          %280 = sbr.rel (%p278) target = $region56
        $region55: #{tpu_custom_call.1} parent=47 // pred_region
          %281 = dma.done [#allocation7], 16
        $region56: #{tpu_custom_call.1} parent=47 // pred_fallthru
          _
        %282 = sfence
        %s283 = sand.u32 %s33, 1
        %s284 = scalar_lea.sflag [#allocation5], %s283
        %s285 = sand.u32 %s33, 1
        %s286 = smul.addr %s285, 56
        %s287 = scalar_lea.vmem [#allocation4], %s286
        %p288 = pneg %p46
        %p289 = pneg %p43
        %p290 = pneg %p67
        %p291 = pneg %p64
        %p292 = pneg %p88
        %p293 = pneg %p85
        %p294 = pneg %p109
        %p295 = pneg %p106
        %p296 = pneg %p130
        %p297 = pneg %p127
        %p298 = pneg %p151
        %p299 = pneg %p148
        %p300 = pneg %p172
        %p301 = pneg %p169
        %p302 = pneg %p198
        %p303 = pneg %p195
        %s304 = sand.u32 %s185, 1
        %s305 = scalar_lea.sflag [#allocation6], %s304
        %s306 = sand.u32 %s185, 1
        %s307 = smul.addr %s306, 56
        %s308 = scalar_lea.vmem [#allocation9], %s307
        %v310 = vld [vmem:[%s273] sm:$0xff]
        %v311 = vld [vmem:[%s273 + $0x8] sm:$0xff]
        %v312 = vld [vmem:[%s273 + $0x10] sm:$0xff]
        %v313 = vld [vmem:[%s273 + $0x18] sm:$0xff]
        %v314 = vld [vmem:[%s273 + $0x20] sm:$0xff]
        %v315 = vld [vmem:[%s273 + $0x28] sm:$0xff]
        %v316 = vld [vmem:[%s273 + $0x30] sm:$0xff]
        %v317 = vld [vmem:[%s6] sm:$0x7f]
        %s318 = sld [smem:[#allocation8]]
        %s319 = sld [smem:[#allocation8 + $0x1]]
        %v320 = vadd.f32 %v310, %v311
        %v321 = vadd.f32 %v320, %v312
        %v322 = vadd.f32 %v321, %v313
        %v323 = vadd.f32 %v322, %v314
        %v324 = vadd.f32 %v323, %v315
        %vm325 = vcmask 80896
        %v326 = vsel %vm325, %v316, 0.0
        %v327 = vadd.f32 %v324, %v326
        %328 = vadd.xlane.f32.xlu0 %v327
        %v329 = vpop.xlane.xlu0 %328
        %v330 = vmul.f32 %v329, 0.001953125
        %v331 = vsub.f32 %v310, %v330
        %v332 = vsub.f32 %v311, %v330
        %v333 = vsub.f32 %v312, %v330
        %v334 = vsub.f32 %v313, %v330
        %v335 = vsub.f32 %v314, %v330
        %v336 = vsub.f32 %v315, %v330
        %v337 = vsub.f32 %v316, %v330
        %v339 = vlaneseq
        %v340 = vshrl.u32 %v339, 7
        %v341 = vsub.s32 0, %v340
        %v342 = vrot.slane %v317, %v341
        %v343 = vlaneseq
        %v344 = vshrl.u32 %v343, 7
        %v345 = vsub.s32 1, %v344
        %v346 = vrot.slane %v317, %v345
        %v347 = vlaneseq
        %v348 = vshrl.u32 %v347, 7
        %v349 = vsub.s32 2, %v348
        %v350 = vrot.slane %v317, %v349
        %v351 = vlaneseq
        %v352 = vshrl.u32 %v351, 7
        %v353 = vsub.s32 3, %v352
        %v354 = vrot.slane %v317, %v353
        %v355 = vlaneseq
        %v356 = vshrl.u32 %v355, 7
        %v357 = vsub.s32 4, %v356
        %v358 = vrot.slane %v317, %v357
        %v359 = vlaneseq
        %v360 = vshrl.u32 %v359, 7
        %v361 = vsub.s32 5, %v360
        %v362 = vrot.slane %v317, %v361
        %v363 = vlaneseq
        %v364 = vshrl.u32 %v363, 7
        %v365 = vsub.s32 6, %v364
        %v366 = vrot.slane %v317, %v365
        %v374 = vmul.f32 %v331, %v342
        %v375 = vmul.f32 %v332, %v346
        %v376 = vmul.f32 %v333, %v350
        %v377 = vmul.f32 %v334, %v354
        %v378 = vmul.f32 %v335, %v358
        %v379 = vmul.f32 %v336, %v362
        %v380 = vmul.f32 %v337, %v366
        %v381 = vmul.f32 %v374, %v374
        %v382 = vmul.f32 %v375, %v375
        %v383 = vmul.f32 %v376, %v376
        %v384 = vmul.f32 %v377, %v377
        %v385 = vmul.f32 %v378, %v378
        %v386 = vmul.f32 %v379, %v379
        %v387 = vmul.f32 %v380, %v380
        %v388 = vadd.f32 %v381, %v382
        %v389 = vadd.f32 %v388, %v383
        %v390 = vadd.f32 %v389, %v384
        %v391 = vadd.f32 %v390, %v385
        %v392 = vadd.f32 %v391, %v386
        %v393 = vsel %vm325, %v387, 0.0
        %v394 = vadd.f32 %v392, %v393
        %395 = vadd.xlane.f32.xlu0 %v394
        %v396 = vpop.xlane.xlu0 %395
        %v397 = vmul.f32 %v396, 0.001953125
        %v398 = vadd.f32 %v397, 1e-05
        %v399 = vrsqrt.pop %v398
        %v400 = vmul.f32 %v374, %v399
        %v401 = vmul.f32 %v375, %v399
        %v402 = vmul.f32 %v376, %v399
        %v403 = vmul.f32 %v377, %v399
        %v404 = vmul.f32 %v378, %v399
        %v405 = vmul.f32 %v379, %v399
        %v406 = vmul.f32 %v380, %v399
        %vm407 = vcmp.ge.f32.partialorder %v400, 0.0
        %vm408 = vcmp.ge.f32.partialorder %v401, 0.0
        %vm409 = vcmp.ge.f32.partialorder %v402, 0.0
        %vm410 = vcmp.ge.f32.partialorder %v403, 0.0
        %vm411 = vcmp.ge.f32.partialorder %v404, 0.0
        %vm412 = vcmp.ge.f32.partialorder %v405, 0.0
        %vm413 = vcmp.ge.f32.partialorder %v406, 0.0
        %v414 = vstv %s318
        %v415 = vmul.f32 %v414, %v400
        %v416 = vmul.f32 %v414, %v401
        %v417 = vmul.f32 %v414, %v402
        %v418 = vmul.f32 %v414, %v403
        %v419 = vmul.f32 %v414, %v404
        %v420 = vmul.f32 %v414, %v405
        %v421 = vmul.f32 %v414, %v406
        %v422 = vsel %vm407, %v400, %v415
        %v423 = vsel %vm408, %v401, %v416
        %v424 = vsel %vm409, %v402, %v417
        %v425 = vsel %vm410, %v403, %v418
        %v426 = vsel %vm411, %v404, %v419
        %v427 = vsel %vm412, %v405, %v420
        %v428 = vsel %vm413, %v406, %v421
        %vm429 = vcmask 908288
        %430 = vst.msk [vmem:[#allocation2] sm:$0xff] %vm429, 0.0
        %vm431 = vcmask 1048520
        %432 = vst.msk [vmem:[#allocation2 + $0x30] sm:$0xff] %vm431, 0.0
        %vm433 = vcmask 850944
        %434 = vst.msk [vmem:[#allocation2 + $0x38] sm:$0xff] %vm433, 0.0
        %442 = vrot.lane.b32.xlu0 %v422, 111
        %v443 = vpop.permute.xlu0 %442
        %444 = vrot.lane.b32.xlu0 %v423, 111
        %v445 = vpop.permute.xlu0 %444
        %446 = vrot.lane.b32.xlu0 %v424, 111
        %v447 = vpop.permute.xlu0 %446
        %448 = vrot.lane.b32.xlu0 %v425, 111
        %v449 = vpop.permute.xlu0 %448
        %450 = vrot.lane.b32.xlu0 %v426, 111
        %v451 = vpop.permute.xlu0 %450
        %452 = vrot.lane.b32.xlu0 %v427, 111
        %v453 = vpop.permute.xlu0 %452
        %454 = vrot.lane.b32.xlu0 %v428, 111
        %v455 = vpop.permute.xlu0 %454
        %v456 = vsel %vm429, %v443, %v445
        %v457 = vsel %vm429, %v445, %v447
        %v458 = vsel %vm429, %v447, %v449
        %v459 = vsel %vm429, %v449, %v451
        %v460 = vsel %vm429, %v451, %v453
        %v461 = vsel %vm429, %v453, %v455
        %vm469 = vcmask 1048440
        %470 = vst.msk [vmem:[#allocation2] sm:$0xff] %vm469, %v443
        %471 = vst [vmem:[#allocation2 + $0x8] sm:$0xff] %v456
        %472 = vst [vmem:[#allocation2 + $0x10] sm:$0xff] %v457
        %473 = vst [vmem:[#allocation2 + $0x18] sm:$0xff] %v458
        %474 = vst [vmem:[#allocation2 + $0x20] sm:$0xff] %v459
        %475 = vst [vmem:[#allocation2 + $0x28] sm:$0xff] %v460
        %vm476 = vcmask 990208
        %477 = vst.msk [vmem:[#allocation2 + $0x30] sm:$0xff] %vm476, %v461
        %v478 = vld [vmem:[#allocation2] sm:$0xff]
        %v479 = vld [vmem:[#allocation2 + $0x8] sm:$0xff]
        %v480 = vld [vmem:[#allocation2 + $0x10] sm:$0xff]
        %v481 = vld [vmem:[#allocation2 + $0x18] sm:$0xff]
        %v482 = vld [vmem:[#allocation2 + $0x20] sm:$0xff]
        %v483 = vld [vmem:[#allocation2 + $0x28] sm:$0xff]
        %v484 = vld [vmem:[#allocation2 + $0x30] sm:$0xff]
        %v485 = vld [vmem:[#allocation2 + $0x38] sm:$0xff]
        %486 = vst [vmem:[#allocation3] sm:$0xff] %v478
        %487 = vst [vmem:[#allocation3 + $0x8] sm:$0xff] %v479
        %488 = vst [vmem:[#allocation3 + $0x10] sm:$0xff] %v480
        %489 = vst [vmem:[#allocation3 + $0x18] sm:$0xff] %v481
        %490 = vst [vmem:[#allocation3 + $0x20] sm:$0xff] %v482
        %491 = vst [vmem:[#allocation3 + $0x28] sm:$0xff] %v483
        %492 = vst.msk [vmem:[#allocation3 + $0x30] sm:$0xff] %vm325, %v484
        %500 = vrot.lane.b32.xlu0 %v478, 127
        %v501 = vpop.permute.xlu0 %500
        %502 = vrot.lane.b32.xlu0 %v479, 127
        %v503 = vpop.permute.xlu0 %502
        %504 = vrot.lane.b32.xlu0 %v480, 127
        %v505 = vpop.permute.xlu0 %504
        %506 = vrot.lane.b32.xlu0 %v481, 127
        %v507 = vpop.permute.xlu0 %506
        %508 = vrot.lane.b32.xlu0 %v482, 127
        %v509 = vpop.permute.xlu0 %508
        %510 = vrot.lane.b32.xlu0 %v483, 127
        %v511 = vpop.permute.xlu0 %510
        %512 = vrot.lane.b32.xlu0 %v484, 127
        %v513 = vpop.permute.xlu0 %512
        %vm514 = vcmask 1039360
        %v515 = vsel %vm514, %v501, %v503
        %v516 = vsel %vm514, %v503, %v505
        %v517 = vsel %vm514, %v505, %v507
        %v518 = vsel %vm514, %v507, %v509
        %v519 = vsel %vm514, %v509, %v511
        %v520 = vsel %vm514, %v511, %v513
        %528 = vst [vmem:[#allocation3 + $0x38] sm:$0xff] %v515
        %529 = vst [vmem:[#allocation3 + $0x40] sm:$0xff] %v516
        %530 = vst [vmem:[#allocation3 + $0x48] sm:$0xff] %v517
        %531 = vst [vmem:[#allocation3 + $0x50] sm:$0xff] %v518
        %532 = vst [vmem:[#allocation3 + $0x58] sm:$0xff] %v519
        %533 = vst [vmem:[#allocation3 + $0x60] sm:$0xff] %v520
        %534 = vst.msk [vmem:[#allocation3 + $0x68] sm:$0xff] %vm325, %v513
        %535 = vrot.lane.b32.xlu0 %v478, 126
        %v536 = vpop.permute.xlu0 %535
        %537 = vrot.lane.b32.xlu0 %v479, 126
        %v538 = vpop.permute.xlu0 %537
        %539 = vrot.lane.b32.xlu0 %v480, 126
        %v540 = vpop.permute.xlu0 %539
        %541 = vrot.lane.b32.xlu0 %v481, 126
        %v542 = vpop.permute.xlu0 %541
        %543 = vrot.lane.b32.xlu0 %v482, 126
        %v544 = vpop.permute.xlu0 %543
        %545 = vrot.lane.b32.xlu0 %v483, 126
        %v546 = vpop.permute.xlu0 %545
        %547 = vrot.lane.b32.xlu0 %v484, 126
        %v548 = vpop.permute.xlu0 %547
        %vm549 = vcmask 1031168
        %v550 = vsel %vm549, %v536, %v538
        %v551 = vsel %vm549, %v538, %v540
        %v552 = vsel %vm549, %v540, %v542
        %v553 = vsel %vm549, %v542, %v544
        %v554 = vsel %vm549, %v544, %v546
        %v555 = vsel %vm549, %v546, %v548
        %563 = vst [vmem:[#allocation3 + $0x70] sm:$0xff] %v550
        %564 = vst [vmem:[#allocation3 + $0x78] sm:$0xff] %v551
        %565 = vst [vmem:[#allocation3 + $0x80] sm:$0xff] %v552
        %566 = vst [vmem:[#allocation3 + $0x88] sm:$0xff] %v553
        %567 = vst [vmem:[#allocation3 + $0x90] sm:$0xff] %v554
        %568 = vst [vmem:[#allocation3 + $0x98] sm:$0xff] %v555
        %569 = vst.msk [vmem:[#allocation3 + $0xa0] sm:$0xff] %vm325, %v548
        %570 = vrot.lane.b32.xlu0 %v478, 118
        %v571 = vpop.permute.xlu0 %570
        %572 = vrot.lane.b32.xlu0 %v479, 118
        %v573 = vpop.permute.xlu0 %572
        %574 = vrot.lane.b32.xlu0 %v480, 118
        %v575 = vpop.permute.xlu0 %574
        %576 = vrot.lane.b32.xlu0 %v481, 118
        %v577 = vpop.permute.xlu0 %576
        %578 = vrot.lane.b32.xlu0 %v482, 118
        %v579 = vpop.permute.xlu0 %578
        %580 = vrot.lane.b32.xlu0 %v483, 118
        %v581 = vpop.permute.xlu0 %580
        %582 = vrot.lane.b32.xlu0 %v484, 118
        %v583 = vpop.permute.xlu0 %582
        %vm584 = vcmask 965632
        %v585 = vsel %vm584, %v571, %v573
        %v586 = vsel %vm584, %v573, %v575
        %v587 = vsel %vm584, %v575, %v577
        %v588 = vsel %vm584, %v577, %v579
        %v589 = vsel %vm584, %v579, %v581
        %v590 = vsel %vm584, %v581, %v583
        %598 = vst [vmem:[#allocation3 + $0xa8] sm:$0xff] %v585
        %599 = vst [vmem:[#allocation3 + $0xb0] sm:$0xff] %v586
        %600 = vst [vmem:[#allocation3 + $0xb8] sm:$0xff] %v587
        %601 = vst [vmem:[#allocation3 + $0xc0] sm:$0xff] %v588
        %602 = vst [vmem:[#allocation3 + $0xc8] sm:$0xff] %v589
        %603 = vst [vmem:[#allocation3 + $0xd0] sm:$0xff] %v590
        %604 = vst.msk [vmem:[#allocation3 + $0xd8] sm:$0xff] %vm325, %v583
        %605 = vrot.lane.b32.xlu0 %v478, 117
        %v606 = vpop.permute.xlu0 %605
        %607 = vrot.lane.b32.xlu0 %v479, 117
        %v608 = vpop.permute.xlu0 %607
        %609 = vrot.lane.b32.xlu0 %v480, 117
        %v610 = vpop.permute.xlu0 %609
        %611 = vrot.lane.b32.xlu0 %v481, 117
        %v612 = vpop.permute.xlu0 %611
        %613 = vrot.lane.b32.xlu0 %v482, 117
        %v614 = vpop.permute.xlu0 %613
        %615 = vrot.lane.b32.xlu0 %v483, 117
        %v616 = vpop.permute.xlu0 %615
        %617 = vrot.lane.b32.xlu0 %v484, 117
        %v618 = vpop.permute.xlu0 %617
        %vm619 = vcmask 957440
        %v620 = vsel %vm619, %v606, %v608
        %v621 = vsel %vm619, %v608, %v610
        %v622 = vsel %vm619, %v610, %v612
        %v623 = vsel %vm619, %v612, %v614
        %v624 = vsel %vm619, %v614, %v616
        %v625 = vsel %vm619, %v616, %v618
        %633 = vst [vmem:[#allocation3 + $0xe0] sm:$0xff] %v620
        %634 = vst [vmem:[#allocation3 + $0xe8] sm:$0xff] %v621
        %635 = vst [vmem:[#allocation3 + $0xf0] sm:$0xff] %v622
        %636 = vst [vmem:[#allocation3 + $0xf8] sm:$0xff] %v623
        %637 = vst [vmem:[#allocation3 + $0x100] sm:$0xff] %v624
        %638 = vst [vmem:[#allocation3 + $0x108] sm:$0xff] %v625
        %639 = vst.msk [vmem:[#allocation3 + $0x110] sm:$0xff] %vm325, %v618
        %640 = vrot.lane.b32.xlu0 %v478, 116
        %v641 = vpop.permute.xlu0 %640
        %642 = vrot.lane.b32.xlu0 %v479, 116
        %v643 = vpop.permute.xlu0 %642
        %644 = vrot.lane.b32.xlu0 %v480, 116
        %v645 = vpop.permute.xlu0 %644
        %646 = vrot.lane.b32.xlu0 %v481, 116
        %v647 = vpop.permute.xlu0 %646
        %648 = vrot.lane.b32.xlu0 %v482, 116
        %v649 = vpop.permute.xlu0 %648
        %650 = vrot.lane.b32.xlu0 %v483, 116
        %v651 = vpop.permute.xlu0 %650
        %652 = vrot.lane.b32.xlu0 %v484, 116
        %v653 = vpop.permute.xlu0 %652
        %vm654 = vcmask 949248
        %v655 = vsel %vm654, %v641, %v643
        %v656 = vsel %vm654, %v643, %v645
        %v657 = vsel %vm654, %v645, %v647
        %v658 = vsel %vm654, %v647, %v649
        %v659 = vsel %vm654, %v649, %v651
        %v660 = vsel %vm654, %v651, %v653
        %668 = vst [vmem:[#allocation3 + $0x118] sm:$0xff] %v655
        %669 = vst [vmem:[#allocation3 + $0x120] sm:$0xff] %v656
        %670 = vst [vmem:[#allocation3 + $0x128] sm:$0xff] %v657
        %671 = vst [vmem:[#allocation3 + $0x130] sm:$0xff] %v658
        %672 = vst [vmem:[#allocation3 + $0x138] sm:$0xff] %v659
        %673 = vst [vmem:[#allocation3 + $0x140] sm:$0xff] %v660
        %674 = vst.msk [vmem:[#allocation3 + $0x148] sm:$0xff] %vm325, %v653
        %675 = vrot.lane.b32.xlu0 %v478, 108
        %v676 = vpop.permute.xlu0 %675
        %677 = vrot.lane.b32.xlu0 %v479, 108
        %v678 = vpop.permute.xlu0 %677
        %679 = vrot.lane.b32.xlu0 %v480, 108
        %v680 = vpop.permute.xlu0 %679
        %681 = vrot.lane.b32.xlu0 %v481, 108
        %v682 = vpop.permute.xlu0 %681
        %683 = vrot.lane.b32.xlu0 %v482, 108
        %v684 = vpop.permute.xlu0 %683
        %685 = vrot.lane.b32.xlu0 %v483, 108
        %v686 = vpop.permute.xlu0 %685
        %687 = vrot.lane.b32.xlu0 %v484, 108
        %v688 = vpop.permute.xlu0 %687
        %vm689 = vcmask 883712
        %v690 = vsel %vm689, %v676, %v678
        %v691 = vsel %vm689, %v678, %v680
        %v692 = vsel %vm689, %v680, %v682
        %v693 = vsel %vm689, %v682, %v684
        %v694 = vsel %vm689, %v684, %v686
        %v695 = vsel %vm689, %v686, %v688
        %703 = vst [vmem:[#allocation3 + $0x150] sm:$0xff] %v690
        %704 = vst [vmem:[#allocation3 + $0x158] sm:$0xff] %v691
        %705 = vst [vmem:[#allocation3 + $0x160] sm:$0xff] %v692
        %706 = vst [vmem:[#allocation3 + $0x168] sm:$0xff] %v693
        %707 = vst [vmem:[#allocation3 + $0x170] sm:$0xff] %v694
        %708 = vst [vmem:[#allocation3 + $0x178] sm:$0xff] %v695
        %709 = vst.msk [vmem:[#allocation3 + $0x180] sm:$0xff] %vm325, %v688
        %710 = vrot.lane.b32.xlu0 %v478, 107
        %v711 = vpop.permute.xlu0 %710
        %712 = vrot.lane.b32.xlu0 %v479, 107
        %v713 = vpop.permute.xlu0 %712
        %714 = vrot.lane.b32.xlu0 %v480, 107
        %v715 = vpop.permute.xlu0 %714
        %716 = vrot.lane.b32.xlu0 %v481, 107
        %v717 = vpop.permute.xlu0 %716
        %718 = vrot.lane.b32.xlu0 %v482, 107
        %v719 = vpop.permute.xlu0 %718
        %720 = vrot.lane.b32.xlu0 %v483, 107
        %v721 = vpop.permute.xlu0 %720
        %722 = vrot.lane.b32.xlu0 %v484, 107
        %v723 = vpop.permute.xlu0 %722
        %vm724 = vcmask 875520
        %v725 = vsel %vm724, %v711, %v713
        %v726 = vsel %vm724, %v713, %v715
        %v727 = vsel %vm724, %v715, %v717
        %v728 = vsel %vm724, %v717, %v719
        %v729 = vsel %vm724, %v719, %v721
        %v730 = vsel %vm724, %v721, %v723
        %738 = vst [vmem:[#allocation3 + $0x188] sm:$0xff] %v725
        %739 = vst [vmem:[#allocation3 + $0x190] sm:$0xff] %v726
        %740 = vst [vmem:[#allocation3 + $0x198] sm:$0xff] %v727
        %741 = vst [vmem:[#allocation3 + $0x1a0] sm:$0xff] %v728
        %742 = vst [vmem:[#allocation3 + $0x1a8] sm:$0xff] %v729
        %743 = vst [vmem:[#allocation3 + $0x1b0] sm:$0xff] %v730
        %744 = vst.msk [vmem:[#allocation3 + $0x1b8] sm:$0xff] %vm325, %v723
        %745 = vrot.lane.b32.xlu0 %v478, 106
        %v746 = vpop.permute.xlu0 %745
        %747 = vrot.lane.b32.xlu0 %v479, 106
        %v748 = vpop.permute.xlu0 %747
        %749 = vrot.lane.b32.xlu0 %v480, 106
        %v750 = vpop.permute.xlu0 %749
        %751 = vrot.lane.b32.xlu0 %v481, 106
        %v752 = vpop.permute.xlu0 %751
        %753 = vrot.lane.b32.xlu0 %v482, 106
        %v754 = vpop.permute.xlu0 %753
        %755 = vrot.lane.b32.xlu0 %v483, 106
        %v756 = vpop.permute.xlu0 %755
        %757 = vrot.lane.b32.xlu0 %v484, 106
        %v758 = vpop.permute.xlu0 %757
        %vm759 = vcmask 867328
        %v760 = vsel %vm759, %v746, %v748
        %v761 = vsel %vm759, %v748, %v750
        %v762 = vsel %vm759, %v750, %v752
        %v763 = vsel %vm759, %v752, %v754
        %v764 = vsel %vm759, %v754, %v756
        %v765 = vsel %vm759, %v756, %v758
        %773 = vst [vmem:[#allocation3 + $0x1c0] sm:$0xff] %v760
        %774 = vst [vmem:[#allocation3 + $0x1c8] sm:$0xff] %v761
        %775 = vst [vmem:[#allocation3 + $0x1d0] sm:$0xff] %v762
        %776 = vst [vmem:[#allocation3 + $0x1d8] sm:$0xff] %v763
        %777 = vst [vmem:[#allocation3 + $0x1e0] sm:$0xff] %v764
        %778 = vst [vmem:[#allocation3 + $0x1e8] sm:$0xff] %v765
        %779 = vst.msk [vmem:[#allocation3 + $0x1f0] sm:$0xff] %vm325, %v758
        %780 = vrot.lane.b32.xlu0 %v478, 28
        %v781 = vpop.permute.xlu0 %780
        %782 = vrot.lane.b32.xlu0 %v479, 28
        %v783 = vpop.permute.xlu0 %782
        %784 = vrot.lane.b32.xlu0 %v480, 28
        %v785 = vpop.permute.xlu0 %784
        %786 = vrot.lane.b32.xlu0 %v481, 28
        %v787 = vpop.permute.xlu0 %786
        %788 = vrot.lane.b32.xlu0 %v482, 28
        %v789 = vpop.permute.xlu0 %788
        %790 = vrot.lane.b32.xlu0 %v483, 28
        %v791 = vpop.permute.xlu0 %790
        %792 = vrot.lane.b32.xlu0 %v484, 28
        %v793 = vpop.permute.xlu0 %792
        %vm794 = vcmask 228352
        %v795 = vsel %vm794, %v781, %v783
        %v796 = vsel %vm794, %v783, %v785
        %v797 = vsel %vm794, %v785, %v787
        %v798 = vsel %vm794, %v787, %v789
        %v799 = vsel %vm794, %v789, %v791
        %v800 = vsel %vm794, %v791, %v793
        %808 = vst [vmem:[#allocation3 + $0x1f8] sm:$0xff] %v795
        %809 = vst [vmem:[#allocation3 + $0x200] sm:$0xff] %v796
        %810 = vst [vmem:[#allocation3 + $0x208] sm:$0xff] %v797
        %811 = vst [vmem:[#allocation3 + $0x210] sm:$0xff] %v798
        %812 = vst [vmem:[#allocation3 + $0x218] sm:$0xff] %v799
        %813 = vst [vmem:[#allocation3 + $0x220] sm:$0xff] %v800
        %814 = vst.msk [vmem:[#allocation3 + $0x228] sm:$0xff] %vm325, %v793
        %815 = vrot.lane.b32.xlu0 %v478, 27
        %v816 = vpop.permute.xlu0 %815
        %817 = vrot.lane.b32.xlu0 %v479, 27
        %v818 = vpop.permute.xlu0 %817
        %819 = vrot.lane.b32.xlu0 %v480, 27
        %v820 = vpop.permute.xlu0 %819
        %821 = vrot.lane.b32.xlu0 %v481, 27
        %v822 = vpop.permute.xlu0 %821
        %823 = vrot.lane.b32.xlu0 %v482, 27
        %v824 = vpop.permute.xlu0 %823
        %825 = vrot.lane.b32.xlu0 %v483, 27
        %v826 = vpop.permute.xlu0 %825
        %827 = vrot.lane.b32.xlu0 %v484, 27
        %v828 = vpop.permute.xlu0 %827
        %vm829 = vcmask 220160
        %v830 = vsel %vm829, %v816, %v818
        %v831 = vsel %vm829, %v818, %v820
        %v832 = vsel %vm829, %v820, %v822
        %v833 = vsel %vm829, %v822, %v824
        %v834 = vsel %vm829, %v824, %v826
        %v835 = vsel %vm829, %v826, %v828
        %843 = vst [vmem:[#allocation3 + $0x230] sm:$0xff] %v830
        %844 = vst [vmem:[#allocation3 + $0x238] sm:$0xff] %v831
        %845 = vst [vmem:[#allocation3 + $0x240] sm:$0xff] %v832
        %846 = vst [vmem:[#allocation3 + $0x248] sm:$0xff] %v833
        %847 = vst [vmem:[#allocation3 + $0x250] sm:$0xff] %v834
        %848 = vst [vmem:[#allocation3 + $0x258] sm:$0xff] %v835
        %849 = vst.msk [vmem:[#allocation3 + $0x260] sm:$0xff] %vm325, %v828
        %850 = vrot.lane.b32.xlu0 %v478, 26
        %v851 = vpop.permute.xlu0 %850
        %852 = vrot.lane.b32.xlu0 %v479, 26
        %v853 = vpop.permute.xlu0 %852
        %854 = vrot.lane.b32.xlu0 %v480, 26
        %v855 = vpop.permute.xlu0 %854
        %856 = vrot.lane.b32.xlu0 %v481, 26
        %v857 = vpop.permute.xlu0 %856
        %858 = vrot.lane.b32.xlu0 %v482, 26
        %v859 = vpop.permute.xlu0 %858
        %860 = vrot.lane.b32.xlu0 %v483, 26
        %v861 = vpop.permute.xlu0 %860
        %862 = vrot.lane.b32.xlu0 %v484, 26
        %v863 = vpop.permute.xlu0 %862
        %vm864 = vcmask 211968
        %v865 = vsel %vm864, %v851, %v853
        %v866 = vsel %vm864, %v853, %v855
        %v867 = vsel %vm864, %v855, %v857
        %v868 = vsel %vm864, %v857, %v859
        %v869 = vsel %vm864, %v859, %v861
        %v870 = vsel %vm864, %v861, %v863
        %878 = vst [vmem:[#allocation3 + $0x268] sm:$0xff] %v865
        %879 = vst [vmem:[#allocation3 + $0x270] sm:$0xff] %v866
        %880 = vst [vmem:[#allocation3 + $0x278] sm:$0xff] %v867
        %881 = vst [vmem:[#allocation3 + $0x280] sm:$0xff] %v868
        %882 = vst [vmem:[#allocation3 + $0x288] sm:$0xff] %v869
        %883 = vst [vmem:[#allocation3 + $0x290] sm:$0xff] %v870
        %884 = vst.msk [vmem:[#allocation3 + $0x298] sm:$0xff] %vm325, %v863
        %885 = vrot.lane.b32.xlu0 %v478, 18
        %v886 = vpop.permute.xlu0 %885
        %887 = vrot.lane.b32.xlu0 %v479, 18
        %v888 = vpop.permute.xlu0 %887
        %889 = vrot.lane.b32.xlu0 %v480, 18
        %v890 = vpop.permute.xlu0 %889
        %891 = vrot.lane.b32.xlu0 %v481, 18
        %v892 = vpop.permute.xlu0 %891
        %893 = vrot.lane.b32.xlu0 %v482, 18
        %v894 = vpop.permute.xlu0 %893
        %895 = vrot.lane.b32.xlu0 %v483, 18
        %v896 = vpop.permute.xlu0 %895
        %897 = vrot.lane.b32.xlu0 %v484, 18
        %v898 = vpop.permute.xlu0 %897
        %vm899 = vcmask 146432
        %v900 = vsel %vm899, %v886, %v888
        %v901 = vsel %vm899, %v888, %v890
        %v902 = vsel %vm899, %v890, %v892
        %v903 = vsel %vm899, %v892, %v894
        %v904 = vsel %vm899, %v894, %v896
        %v905 = vsel %vm899, %v896, %v898
        %913 = vst [vmem:[#allocation3 + $0x2a0] sm:$0xff] %v900
        %914 = vst [vmem:[#allocation3 + $0x2a8] sm:$0xff] %v901
        %915 = vst [vmem:[#allocation3 + $0x2b0] sm:$0xff] %v902
        %916 = vst [vmem:[#allocation3 + $0x2b8] sm:$0xff] %v903
        %917 = vst [vmem:[#allocation3 + $0x2c0] sm:$0xff] %v904
        %918 = vst [vmem:[#allocation3 + $0x2c8] sm:$0xff] %v905
        %919 = vst.msk [vmem:[#allocation3 + $0x2d0] sm:$0xff] %vm325, %v898
        %920 = vrot.lane.b32.xlu0 %v478, 17
        %v921 = vpop.permute.xlu0 %920
        %922 = vrot.lane.b32.xlu0 %v479, 17
        %v923 = vpop.permute.xlu0 %922
        %924 = vrot.lane.b32.xlu0 %v480, 17
        %v925 = vpop.permute.xlu0 %924
        %926 = vrot.lane.b32.xlu0 %v481, 17
        %v927 = vpop.permute.xlu0 %926
        %928 = vrot.lane.b32.xlu0 %v482, 17
        %v929 = vpop.permute.xlu0 %928
        %930 = vrot.lane.b32.xlu0 %v483, 17
        %v931 = vpop.permute.xlu0 %930
        %932 = vrot.lane.b32.xlu0 %v484, 17
        %v933 = vpop.permute.xlu0 %932
        %vm934 = vcmask 138240
        %v935 = vsel %vm934, %v921, %v923
        %v936 = vsel %vm934, %v923, %v925
        %v937 = vsel %vm934, %v925, %v927
        %v938 = vsel %vm934, %v927, %v929
        %v939 = vsel %vm934, %v929, %v931
        %v940 = vsel %vm934, %v931, %v933
        %948 = vst [vmem:[#allocation3 + $0x2d8] sm:$0xff] %v935
        %949 = vst [vmem:[#allocation3 + $0x2e0] sm:$0xff] %v936
        %950 = vst [vmem:[#allocation3 + $0x2e8] sm:$0xff] %v937
        %951 = vst [vmem:[#allocation3 + $0x2f0] sm:$0xff] %v938
        %952 = vst [vmem:[#allocation3 + $0x2f8] sm:$0xff] %v939
        %953 = vst [vmem:[#allocation3 + $0x300] sm:$0xff] %v940
        %954 = vst.msk [vmem:[#allocation3 + $0x308] sm:$0xff] %vm325, %v933
        %955 = vrot.lane.b32.xlu0 %v478, 16
        %v956 = vpop.permute.xlu0 %955
        %957 = vrot.lane.b32.xlu0 %v479, 16
        %v958 = vpop.permute.xlu0 %957
        %959 = vrot.lane.b32.xlu0 %v480, 16
        %v960 = vpop.permute.xlu0 %959
        %961 = vrot.lane.b32.xlu0 %v481, 16
        %v962 = vpop.permute.xlu0 %961
        %963 = vrot.lane.b32.xlu0 %v482, 16
        %v964 = vpop.permute.xlu0 %963
        %965 = vrot.lane.b32.xlu0 %v483, 16
        %v966 = vpop.permute.xlu0 %965
        %967 = vrot.lane.b32.xlu0 %v484, 16
        %v968 = vpop.permute.xlu0 %967
        %vm969 = vcmask 130048
        %v970 = vsel %vm969, %v956, %v958
        %v971 = vsel %vm969, %v958, %v960
        %v972 = vsel %vm969, %v960, %v962
        %v973 = vsel %vm969, %v962, %v964
        %v974 = vsel %vm969, %v964, %v966
        %v975 = vsel %vm969, %v966, %v968
        %983 = vst [vmem:[#allocation3 + $0x310] sm:$0xff] %v970
        %984 = vst [vmem:[#allocation3 + $0x318] sm:$0xff] %v971
        %985 = vst [vmem:[#allocation3 + $0x320] sm:$0xff] %v972
        %986 = vst [vmem:[#allocation3 + $0x328] sm:$0xff] %v973
        %987 = vst [vmem:[#allocation3 + $0x330] sm:$0xff] %v974
        %988 = vst [vmem:[#allocation3 + $0x338] sm:$0xff] %v975
        %989 = vst.msk [vmem:[#allocation3 + $0x340] sm:$0xff] %vm325, %v968
        %991 = vrot.lane.b32.xlu0 %v478, 8
        %v992 = vpop.permute.xlu0 %991
        %993 = vrot.lane.b32.xlu0 %v479, 8
        %v994 = vpop.permute.xlu0 %993
        %995 = vrot.lane.b32.xlu0 %v480, 8
        %v996 = vpop.permute.xlu0 %995
        %997 = vrot.lane.b32.xlu0 %v481, 8
        %v998 = vpop.permute.xlu0 %997
        %999 = vrot.lane.b32.xlu0 %v482, 8
        %v1000 = vpop.permute.xlu0 %999
        %1001 = vrot.lane.b32.xlu0 %v483, 8
        %v1002 = vpop.permute.xlu0 %1001
        %1003 = vrot.lane.b32.xlu0 %v484, 8
        %v1004 = vpop.permute.xlu0 %1003
        %1005 = vrot.lane.b32.xlu0 %v485, 8
        %v1006 = vpop.permute.xlu0 %1005
        %vm1007 = vcmask 64512
        %v1008 = vsel %vm1007, %v992, %v994
        %v1009 = vsel %vm1007, %v994, %v996
        %v1010 = vsel %vm1007, %v996, %v998
        %v1011 = vsel %vm1007, %v998, %v1000
        %v1012 = vsel %vm1007, %v1000, %v1002
        %v1013 = vsel %vm1007, %v1002, %v1004
        %v1014 = vsel %vm1007, %v1004, %v1006
        %1022 = vst [vmem:[#allocation3 + $0x348] sm:$0xff] %v1008
        %1023 = vst [vmem:[#allocation3 + $0x350] sm:$0xff] %v1009
        %1024 = vst [vmem:[#allocation3 + $0x358] sm:$0xff] %v1010
        %1025 = vst [vmem:[#allocation3 + $0x360] sm:$0xff] %v1011
        %1026 = vst [vmem:[#allocation3 + $0x368] sm:$0xff] %v1012
        %1027 = vst [vmem:[#allocation3 + $0x370] sm:$0xff] %v1013
        %1028 = vst.msk [vmem:[#allocation3 + $0x378] sm:$0xff] %vm325, %v1014
        %1029 = vrot.lane.b32.xlu0 %v478, 7
        %v1030 = vpop.permute.xlu0 %1029
        %1031 = vrot.lane.b32.xlu0 %v479, 7
        %v1032 = vpop.permute.xlu0 %1031
        %1033 = vrot.lane.b32.xlu0 %v480, 7
        %v1034 = vpop.permute.xlu0 %1033
        %1035 = vrot.lane.b32.xlu0 %v481, 7
        %v1036 = vpop.permute.xlu0 %1035
        %1037 = vrot.lane.b32.xlu0 %v482, 7
        %v1038 = vpop.permute.xlu0 %1037
        %1039 = vrot.lane.b32.xlu0 %v483, 7
        %v1040 = vpop.permute.xlu0 %1039
        %1041 = vrot.lane.b32.xlu0 %v484, 7
        %v1042 = vpop.permute.xlu0 %1041
        %1043 = vrot.lane.b32.xlu0 %v485, 7
        %v1044 = vpop.permute.xlu0 %1043
        %vm1045 = vcmask 56320
        %v1046 = vsel %vm1045, %v1030, %v1032
        %v1047 = vsel %vm1045, %v1032, %v1034
        %v1048 = vsel %vm1045, %v1034, %v1036
        %v1049 = vsel %vm1045, %v1036, %v1038
        %v1050 = vsel %vm1045, %v1038, %v1040
        %v1051 = vsel %vm1045, %v1040, %v1042
        %v1052 = vsel %vm1045, %v1042, %v1044
        %1060 = vst [vmem:[#allocation3 + $0x380] sm:$0xff] %v1046
        %1061 = vst [vmem:[#allocation3 + $0x388] sm:$0xff] %v1047
        %1062 = vst [vmem:[#allocation3 + $0x390] sm:$0xff] %v1048
        %1063 = vst [vmem:[#allocation3 + $0x398] sm:$0xff] %v1049
        %1064 = vst [vmem:[#allocation3 + $0x3a0] sm:$0xff] %v1050
        %1065 = vst [vmem:[#allocation3 + $0x3a8] sm:$0xff] %v1051
        %1066 = vst.msk [vmem:[#allocation3 + $0x3b0] sm:$0xff] %vm325, %v1052
        %1067 = vrot.lane.b32.xlu0 %v478, 6
        %v1068 = vpop.permute.xlu0 %1067
        %1069 = vrot.lane.b32.xlu0 %v479, 6
        %v1070 = vpop.permute.xlu0 %1069
        %1071 = vrot.lane.b32.xlu0 %v480, 6
        %v1072 = vpop.permute.xlu0 %1071
        %1073 = vrot.lane.b32.xlu0 %v481, 6
        %v1074 = vpop.permute.xlu0 %1073
        %1075 = vrot.lane.b32.xlu0 %v482, 6
        %v1076 = vpop.permute.xlu0 %1075
        %1077 = vrot.lane.b32.xlu0 %v483, 6
        %v1078 = vpop.permute.xlu0 %1077
        %1079 = vrot.lane.b32.xlu0 %v484, 6
        %v1080 = vpop.permute.xlu0 %1079
        %1081 = vrot.lane.b32.xlu0 %v485, 6
        %v1082 = vpop.permute.xlu0 %1081
        %vm1083 = vcmask 48128
        %v1084 = vsel %vm1083, %v1068, %v1070
        %v1085 = vsel %vm1083, %v1070, %v1072
        %v1086 = vsel %vm1083, %v1072, %v1074
        %v1087 = vsel %vm1083, %v1074, %v1076
        %v1088 = vsel %vm1083, %v1076, %v1078
        %v1089 = vsel %vm1083, %v1078, %v1080
        %v1090 = vsel %vm1083, %v1080, %v1082
        %1098 = vst [vmem:[#allocation3 + $0x3b8] sm:$0xff] %v1084
        %1099 = vst [vmem:[#allocation3 + $0x3c0] sm:$0xff] %v1085
        %1100 = vst [vmem:[#allocation3 + $0x3c8] sm:$0xff] %v1086
        %1101 = vst [vmem:[#allocation3 + $0x3d0] sm:$0xff] %v1087
        %1102 = vst [vmem:[#allocation3 + $0x3d8] sm:$0xff] %v1088
        %1103 = vst [vmem:[#allocation3 + $0x3e0] sm:$0xff] %v1089
        %1104 = vst.msk [vmem:[#allocation3 + $0x3e8] sm:$0xff] %vm325, %v1090
        %1105 = vrot.lane.b32.xlu0 %v479, 56
        %v1106 = vpop.permute.xlu0 %1105
        %1107 = vrot.lane.b32.xlu0 %v480, 56
        %v1108 = vpop.permute.xlu0 %1107
        %1109 = vrot.lane.b32.xlu0 %v481, 56
        %v1110 = vpop.permute.xlu0 %1109
        %1111 = vrot.lane.b32.xlu0 %v482, 56
        %v1112 = vpop.permute.xlu0 %1111
        %1113 = vrot.lane.b32.xlu0 %v483, 56
        %v1114 = vpop.permute.xlu0 %1113
        %1115 = vrot.lane.b32.xlu0 %v484, 56
        %v1116 = vpop.permute.xlu0 %1115
        %1117 = vrot.lane.b32.xlu0 %v485, 56
        %v1118 = vpop.permute.xlu0 %1117
        %vm1119 = vcmask 457728
        %v1120 = vsel %vm1119, %v1106, %v1108
        %v1121 = vsel %vm1119, %v1108, %v1110
        %v1122 = vsel %vm1119, %v1110, %v1112
        %v1123 = vsel %vm1119, %v1112, %v1114
        %v1124 = vsel %vm1119, %v1114, %v1116
        %v1125 = vsel %vm1119, %v1116, %v1118
        %1133 = vst [vmem:[#allocation3 + $0x3f0] sm:$0xff] %v1120
        %1134 = vst [vmem:[#allocation3 + $0x3f8] sm:$0xff] %v1121
        %1135 = vst [vmem:[#allocation3 + $0x400] sm:$0xff] %v1122
        %1136 = vst [vmem:[#allocation3 + $0x408] sm:$0xff] %v1123
        %1137 = vst [vmem:[#allocation3 + $0x410] sm:$0xff] %v1124
        %1138 = vst [vmem:[#allocation3 + $0x418] sm:$0xff] %v1125
        %1139 = vst.msk [vmem:[#allocation3 + $0x420] sm:$0xff] %vm325, %v1118
        %1140 = vrot.lane.b32.xlu0 %v479, 55
        %v1141 = vpop.permute.xlu0 %1140
        %1142 = vrot.lane.b32.xlu0 %v480, 55
        %v1143 = vpop.permute.xlu0 %1142
        %1144 = vrot.lane.b32.xlu0 %v481, 55
        %v1145 = vpop.permute.xlu0 %1144
        %1146 = vrot.lane.b32.xlu0 %v482, 55
        %v1147 = vpop.permute.xlu0 %1146
        %1148 = vrot.lane.b32.xlu0 %v483, 55
        %v1149 = vpop.permute.xlu0 %1148
        %1150 = vrot.lane.b32.xlu0 %v484, 55
        %v1151 = vpop.permute.xlu0 %1150
        %1152 = vrot.lane.b32.xlu0 %v485, 55
        %v1153 = vpop.permute.xlu0 %1152
        %vm1154 = vcmask 449536
        %v1155 = vsel %vm1154, %v1141, %v1143
        %v1156 = vsel %vm1154, %v1143, %v1145
        %v1157 = vsel %vm1154, %v1145, %v1147
        %v1158 = vsel %vm1154, %v1147, %v1149
        %v1159 = vsel %vm1154, %v1149, %v1151
        %v1160 = vsel %vm1154, %v1151, %v1153
        %1168 = vst [vmem:[#allocation3 + $0x428] sm:$0xff] %v1155
        %1169 = vst [vmem:[#allocation3 + $0x430] sm:$0xff] %v1156
        %1170 = vst [vmem:[#allocation3 + $0x438] sm:$0xff] %v1157
        %1171 = vst [vmem:[#allocation3 + $0x440] sm:$0xff] %v1158
        %1172 = vst [vmem:[#allocation3 + $0x448] sm:$0xff] %v1159
        %1173 = vst [vmem:[#allocation3 + $0x450] sm:$0xff] %v1160
        %1174 = vst.msk [vmem:[#allocation3 + $0x458] sm:$0xff] %vm325, %v1153
        %1175 = vrot.lane.b32.xlu0 %v479, 54
        %v1176 = vpop.permute.xlu0 %1175
        %1177 = vrot.lane.b32.xlu0 %v480, 54
        %v1178 = vpop.permute.xlu0 %1177
        %1179 = vrot.lane.b32.xlu0 %v481, 54
        %v1180 = vpop.permute.xlu0 %1179
        %1181 = vrot.lane.b32.xlu0 %v482, 54
        %v1182 = vpop.permute.xlu0 %1181
        %1183 = vrot.lane.b32.xlu0 %v483, 54
        %v1184 = vpop.permute.xlu0 %1183
        %1185 = vrot.lane.b32.xlu0 %v484, 54
        %v1186 = vpop.permute.xlu0 %1185
        %1187 = vrot.lane.b32.xlu0 %v485, 54
        %v1188 = vpop.permute.xlu0 %1187
        %vm1189 = vcmask 441344
        %v1190 = vsel %vm1189, %v1176, %v1178
        %v1191 = vsel %vm1189, %v1178, %v1180
        %v1192 = vsel %vm1189, %v1180, %v1182
        %v1193 = vsel %vm1189, %v1182, %v1184
        %v1194 = vsel %vm1189, %v1184, %v1186
        %v1195 = vsel %vm1189, %v1186, %v1188
        %1203 = vst [vmem:[#allocation3 + $0x460] sm:$0xff] %v1190
        %1204 = vst [vmem:[#allocation3 + $0x468] sm:$0xff] %v1191
        %1205 = vst [vmem:[#allocation3 + $0x470] sm:$0xff] %v1192
        %1206 = vst [vmem:[#allocation3 + $0x478] sm:$0xff] %v1193
        %1207 = vst [vmem:[#allocation3 + $0x480] sm:$0xff] %v1194
        %1208 = vst [vmem:[#allocation3 + $0x488] sm:$0xff] %v1195
        %1209 = vst.msk [vmem:[#allocation3 + $0x490] sm:$0xff] %vm325, %v1188
        %1210 = vrot.lane.b32.xlu0 %v479, 46
        %v1211 = vpop.permute.xlu0 %1210
        %1212 = vrot.lane.b32.xlu0 %v480, 46
        %v1213 = vpop.permute.xlu0 %1212
        %1214 = vrot.lane.b32.xlu0 %v481, 46
        %v1215 = vpop.permute.xlu0 %1214
        %1216 = vrot.lane.b32.xlu0 %v482, 46
        %v1217 = vpop.permute.xlu0 %1216
        %1218 = vrot.lane.b32.xlu0 %v483, 46
        %v1219 = vpop.permute.xlu0 %1218
        %1220 = vrot.lane.b32.xlu0 %v484, 46
        %v1221 = vpop.permute.xlu0 %1220
        %1222 = vrot.lane.b32.xlu0 %v485, 46
        %v1223 = vpop.permute.xlu0 %1222
        %vm1224 = vcmask 375808
        %v1225 = vsel %vm1224, %v1211, %v1213
        %v1226 = vsel %vm1224, %v1213, %v1215
        %v1227 = vsel %vm1224, %v1215, %v1217
        %v1228 = vsel %vm1224, %v1217, %v1219
        %v1229 = vsel %vm1224, %v1219, %v1221
        %v1230 = vsel %vm1224, %v1221, %v1223
        %1238 = vst [vmem:[#allocation3 + $0x498] sm:$0xff] %v1225
        %1239 = vst [vmem:[#allocation3 + $0x4a0] sm:$0xff] %v1226
        %1240 = vst [vmem:[#allocation3 + $0x4a8] sm:$0xff] %v1227
        %1241 = vst [vmem:[#allocation3 + $0x4b0] sm:$0xff] %v1228
        %1242 = vst [vmem:[#allocation3 + $0x4b8] sm:$0xff] %v1229
        %1243 = vst [vmem:[#allocation3 + $0x4c0] sm:$0xff] %v1230
        %1244 = vst.msk [vmem:[#allocation3 + $0x4c8] sm:$0xff] %vm325, %v1223
        %1245 = vrot.lane.b32.xlu0 %v479, 45
        %v1246 = vpop.permute.xlu0 %1245
        %1247 = vrot.lane.b32.xlu0 %v480, 45
        %v1248 = vpop.permute.xlu0 %1247
        %1249 = vrot.lane.b32.xlu0 %v481, 45
        %v1250 = vpop.permute.xlu0 %1249
        %1251 = vrot.lane.b32.xlu0 %v482, 45
        %v1252 = vpop.permute.xlu0 %1251
        %1253 = vrot.lane.b32.xlu0 %v483, 45
        %v1254 = vpop.permute.xlu0 %1253
        %1255 = vrot.lane.b32.xlu0 %v484, 45
        %v1256 = vpop.permute.xlu0 %1255
        %1257 = vrot.lane.b32.xlu0 %v485, 45
        %v1258 = vpop.permute.xlu0 %1257
        %vm1259 = vcmask 367616
        %v1260 = vsel %vm1259, %v1246, %v1248
        %v1261 = vsel %vm1259, %v1248, %v1250
        %v1262 = vsel %vm1259, %v1250, %v1252
        %v1263 = vsel %vm1259, %v1252, %v1254
        %v1264 = vsel %vm1259, %v1254, %v1256
        %v1265 = vsel %vm1259, %v1256, %v1258
        %1273 = vst [vmem:[#allocation3 + $0x4d0] sm:$0xff] %v1260
        %1274 = vst [vmem:[#allocation3 + $0x4d8] sm:$0xff] %v1261
        %1275 = vst [vmem:[#allocation3 + $0x4e0] sm:$0xff] %v1262
        %1276 = vst [vmem:[#allocation3 + $0x4e8] sm:$0xff] %v1263
        %1277 = vst [vmem:[#allocation3 + $0x4f0] sm:$0xff] %v1264
        %1278 = vst [vmem:[#allocation3 + $0x4f8] sm:$0xff] %v1265
        %1279 = vst.msk [vmem:[#allocation3 + $0x500] sm:$0xff] %vm325, %v1258
        %1280 = vrot.lane.b32.xlu0 %v479, 44
        %v1281 = vpop.permute.xlu0 %1280
        %1282 = vrot.lane.b32.xlu0 %v480, 44
        %v1283 = vpop.permute.xlu0 %1282
        %1284 = vrot.lane.b32.xlu0 %v481, 44
        %v1285 = vpop.permute.xlu0 %1284
        %1286 = vrot.lane.b32.xlu0 %v482, 44
        %v1287 = vpop.permute.xlu0 %1286
        %1288 = vrot.lane.b32.xlu0 %v483, 44
        %v1289 = vpop.permute.xlu0 %1288
        %1290 = vrot.lane.b32.xlu0 %v484, 44
        %v1291 = vpop.permute.xlu0 %1290
        %1292 = vrot.lane.b32.xlu0 %v485, 44
        %v1293 = vpop.permute.xlu0 %1292
        %vm1294 = vcmask 359424
        %v1295 = vsel %vm1294, %v1281, %v1283
        %v1296 = vsel %vm1294, %v1283, %v1285
        %v1297 = vsel %vm1294, %v1285, %v1287
        %v1298 = vsel %vm1294, %v1287, %v1289
        %v1299 = vsel %vm1294, %v1289, %v1291
        %v1300 = vsel %vm1294, %v1291, %v1293
        %1308 = vst [vmem:[#allocation3 + $0x508] sm:$0xff] %v1295
        %1309 = vst [vmem:[#allocation3 + $0x510] sm:$0xff] %v1296
        %1310 = vst [vmem:[#allocation3 + $0x518] sm:$0xff] %v1297
        %1311 = vst [vmem:[#allocation3 + $0x520] sm:$0xff] %v1298
        %1312 = vst [vmem:[#allocation3 + $0x528] sm:$0xff] %v1299
        %1313 = vst [vmem:[#allocation3 + $0x530] sm:$0xff] %v1300
        %1314 = vst.msk [vmem:[#allocation3 + $0x538] sm:$0xff] %vm325, %v1293
        %1315 = vrot.lane.b32.xlu0 %v479, 36
        %v1316 = vpop.permute.xlu0 %1315
        %1317 = vrot.lane.b32.xlu0 %v480, 36
        %v1318 = vpop.permute.xlu0 %1317
        %1319 = vrot.lane.b32.xlu0 %v481, 36
        %v1320 = vpop.permute.xlu0 %1319
        %1321 = vrot.lane.b32.xlu0 %v482, 36
        %v1322 = vpop.permute.xlu0 %1321
        %1323 = vrot.lane.b32.xlu0 %v483, 36
        %v1324 = vpop.permute.xlu0 %1323
        %1325 = vrot.lane.b32.xlu0 %v484, 36
        %v1326 = vpop.permute.xlu0 %1325
        %1327 = vrot.lane.b32.xlu0 %v485, 36
        %v1328 = vpop.permute.xlu0 %1327
        %vm1329 = vcmask 293888
        %v1330 = vsel %vm1329, %v1316, %v1318
        %v1331 = vsel %vm1329, %v1318, %v1320
        %v1332 = vsel %vm1329, %v1320, %v1322
        %v1333 = vsel %vm1329, %v1322, %v1324
        %v1334 = vsel %vm1329, %v1324, %v1326
        %v1335 = vsel %vm1329, %v1326, %v1328
        %1343 = vst [vmem:[#allocation3 + $0x540] sm:$0xff] %v1330
        %1344 = vst [vmem:[#allocation3 + $0x548] sm:$0xff] %v1331
        %1345 = vst [vmem:[#allocation3 + $0x550] sm:$0xff] %v1332
        %1346 = vst [vmem:[#allocation3 + $0x558] sm:$0xff] %v1333
        %1347 = vst [vmem:[#allocation3 + $0x560] sm:$0xff] %v1334
        %1348 = vst [vmem:[#allocation3 + $0x568] sm:$0xff] %v1335
        %1349 = vst.msk [vmem:[#allocation3 + $0x570] sm:$0xff] %vm325, %v1328
        %1350 = vrot.lane.b32.xlu0 %v479, 35
        %v1351 = vpop.permute.xlu0 %1350
        %1352 = vrot.lane.b32.xlu0 %v480, 35
        %v1353 = vpop.permute.xlu0 %1352
        %1354 = vrot.lane.b32.xlu0 %v481, 35
        %v1355 = vpop.permute.xlu0 %1354
        %1356 = vrot.lane.b32.xlu0 %v482, 35
        %v1357 = vpop.permute.xlu0 %1356
        %1358 = vrot.lane.b32.xlu0 %v483, 35
        %v1359 = vpop.permute.xlu0 %1358
        %1360 = vrot.lane.b32.xlu0 %v484, 35
        %v1361 = vpop.permute.xlu0 %1360
        %1362 = vrot.lane.b32.xlu0 %v485, 35
        %v1363 = vpop.permute.xlu0 %1362
        %vm1364 = vcmask 285696
        %v1365 = vsel %vm1364, %v1351, %v1353
        %v1366 = vsel %vm1364, %v1353, %v1355
        %v1367 = vsel %vm1364, %v1355, %v1357
        %v1368 = vsel %vm1364, %v1357, %v1359
        %v1369 = vsel %vm1364, %v1359, %v1361
        %v1370 = vsel %vm1364, %v1361, %v1363
        %1378 = vst [vmem:[#allocation3 + $0x578] sm:$0xff] %v1365
        %1379 = vst [vmem:[#allocation3 + $0x580] sm:$0xff] %v1366
        %1380 = vst [vmem:[#allocation3 + $0x588] sm:$0xff] %v1367
        %1381 = vst [vmem:[#allocation3 + $0x590] sm:$0xff] %v1368
        %1382 = vst [vmem:[#allocation3 + $0x598] sm:$0xff] %v1369
        %1383 = vst [vmem:[#allocation3 + $0x5a0] sm:$0xff] %v1370
        %1384 = vst.msk [vmem:[#allocation3 + $0x5a8] sm:$0xff] %vm325, %v1363
        %1385 = vrot.lane.b32.xlu0 %v479, 34
        %v1386 = vpop.permute.xlu0 %1385
        %1387 = vrot.lane.b32.xlu0 %v480, 34
        %v1388 = vpop.permute.xlu0 %1387
        %1389 = vrot.lane.b32.xlu0 %v481, 34
        %v1390 = vpop.permute.xlu0 %1389
        %1391 = vrot.lane.b32.xlu0 %v482, 34
        %v1392 = vpop.permute.xlu0 %1391
        %1393 = vrot.lane.b32.xlu0 %v483, 34
        %v1394 = vpop.permute.xlu0 %1393
        %1395 = vrot.lane.b32.xlu0 %v484, 34
        %v1396 = vpop.permute.xlu0 %1395
        %1397 = vrot.lane.b32.xlu0 %v485, 34
        %v1398 = vpop.permute.xlu0 %1397
        %vm1399 = vcmask 277504
        %v1400 = vsel %vm1399, %v1386, %v1388
        %v1401 = vsel %vm1399, %v1388, %v1390
        %v1402 = vsel %vm1399, %v1390, %v1392
        %v1403 = vsel %vm1399, %v1392, %v1394
        %v1404 = vsel %vm1399, %v1394, %v1396
        %v1405 = vsel %vm1399, %v1396, %v1398
        %1413 = vst [vmem:[#allocation3 + $0x5b0] sm:$0xff] %v1400
        %1414 = vst [vmem:[#allocation3 + $0x5b8] sm:$0xff] %v1401
        %1415 = vst [vmem:[#allocation3 + $0x5c0] sm:$0xff] %v1402
        %1416 = vst [vmem:[#allocation3 + $0x5c8] sm:$0xff] %v1403
        %1417 = vst [vmem:[#allocation3 + $0x5d0] sm:$0xff] %v1404
        %1418 = vst [vmem:[#allocation3 + $0x5d8] sm:$0xff] %v1405
        %1419 = vst.msk [vmem:[#allocation3 + $0x5e0] sm:$0xff] %vm325, %v1398
        %v1420 = vld [vmem:[%s1] sm:$0xff]
        %v1421 = vld [vmem:[#allocation3] sm:$0xff]
        %v1422 = vld [vmem:[#allocation3 + $0x8] sm:$0xff]
        %v1423 = vld [vmem:[#allocation3 + $0x10] sm:$0xff]
        %v1424 = vld [vmem:[#allocation3 + $0x18] sm:$0xff]
        %v1425 = vld [vmem:[#allocation3 + $0x20] sm:$0xff]
        %v1426 = vld [vmem:[#allocation3 + $0x28] sm:$0xff]
        %v1427 = vld [vmem:[#allocation3 + $0x30] sm:$0xff]
        %v1428 = vld [vmem:[#allocation3 + $0x38] sm:$0xff]
        %v1429 = vld [vmem:[#allocation3 + $0x40] sm:$0xff]
        %v1430 = vld [vmem:[#allocation3 + $0x48] sm:$0xff]
        %v1431 = vld [vmem:[#allocation3 + $0x50] sm:$0xff]
        %v1432 = vld [vmem:[#allocation3 + $0x58] sm:$0xff]
        %v1433 = vld [vmem:[#allocation3 + $0x60] sm:$0xff]
        %v1434 = vld [vmem:[#allocation3 + $0x68] sm:$0xff]
        %v1435 = vld [vmem:[#allocation3 + $0x70] sm:$0xff]
        %v1436 = vld [vmem:[#allocation3 + $0x78] sm:$0xff]
        %v1437 = vld [vmem:[#allocation3 + $0x80] sm:$0xff]
        %v1438 = vld [vmem:[#allocation3 + $0x88] sm:$0xff]
        %v1439 = vld [vmem:[#allocation3 + $0x90] sm:$0xff]
        %v1440 = vld [vmem:[#allocation3 + $0x98] sm:$0xff]
        %v1441 = vld [vmem:[#allocation3 + $0xa0] sm:$0xff]
        %v1442 = vld [vmem:[#allocation3 + $0xa8] sm:$0xff]
        %v1443 = vld [vmem:[#allocation3 + $0xb0] sm:$0xff]
        %v1444 = vld [vmem:[#allocation3 + $0xb8] sm:$0xff]
        %v1445 = vld [vmem:[#allocation3 + $0xc0] sm:$0xff]
        %v1446 = vld [vmem:[#allocation3 + $0xc8] sm:$0xff]
        %v1447 = vld [vmem:[#allocation3 + $0xd0] sm:$0xff]
        %v1448 = vld [vmem:[#allocation3 + $0xd8] sm:$0xff]
        %v1449 = vld [vmem:[#allocation3 + $0xe0] sm:$0xff]
        %v1450 = vld [vmem:[#allocation3 + $0xe8] sm:$0xff]
        %v1451 = vld [vmem:[#allocation3 + $0xf0] sm:$0xff]
        %v1452 = vld [vmem:[#allocation3 + $0xf8] sm:$0xff]
        %v1453 = vld [vmem:[#allocation3 + $0x100] sm:$0xff]
        %v1454 = vld [vmem:[#allocation3 + $0x108] sm:$0xff]
        %v1455 = vld [vmem:[#allocation3 + $0x110] sm:$0xff]
        %v1456 = vld [vmem:[#allocation3 + $0x118] sm:$0xff]
        %v1457 = vld [vmem:[#allocation3 + $0x120] sm:$0xff]
        %v1458 = vld [vmem:[#allocation3 + $0x128] sm:$0xff]
        %v1459 = vld [vmem:[#allocation3 + $0x130] sm:$0xff]
        %v1460 = vld [vmem:[#allocation3 + $0x138] sm:$0xff]
        %v1461 = vld [vmem:[#allocation3 + $0x140] sm:$0xff]
        %v1462 = vld [vmem:[#allocation3 + $0x148] sm:$0xff]
        %v1463 = vld [vmem:[#allocation3 + $0x150] sm:$0xff]
        %v1464 = vld [vmem:[#allocation3 + $0x158] sm:$0xff]
        %v1465 = vld [vmem:[#allocation3 + $0x160] sm:$0xff]
        %v1466 = vld [vmem:[#allocation3 + $0x168] sm:$0xff]
        %v1467 = vld [vmem:[#allocation3 + $0x170] sm:$0xff]
        %v1468 = vld [vmem:[#allocation3 + $0x178] sm:$0xff]
        %v1469 = vld [vmem:[#allocation3 + $0x180] sm:$0xff]
        %v1470 = vld [vmem:[#allocation3 + $0x188] sm:$0xff]
        %v1471 = vld [vmem:[#allocation3 + $0x190] sm:$0xff]
        %v1472 = vld [vmem:[#allocation3 + $0x198] sm:$0xff]
        %v1473 = vld [vmem:[#allocation3 + $0x1a0] sm:$0xff]
        %v1474 = vld [vmem:[#allocation3 + $0x1a8] sm:$0xff]
        %v1475 = vld [vmem:[#allocation3 + $0x1b0] sm:$0xff]
        %v1476 = vld [vmem:[#allocation3 + $0x1b8] sm:$0xff]
        %v1477 = vld [vmem:[#allocation3 + $0x1c0] sm:$0xff]
        %v1478 = vld [vmem:[#allocation3 + $0x1c8] sm:$0xff]
        %v1479 = vld [vmem:[#allocation3 + $0x1d0] sm:$0xff]
        %v1480 = vld [vmem:[#allocation3 + $0x1d8] sm:$0xff]
        %v1481 = vld [vmem:[#allocation3 + $0x1e0] sm:$0xff]
        %v1482 = vld [vmem:[#allocation3 + $0x1e8] sm:$0xff]
        %v1483 = vld [vmem:[#allocation3 + $0x1f0] sm:$0xff]
        %v1484 = vld [vmem:[#allocation3 + $0x1f8] sm:$0xff]
        %v1485 = vld [vmem:[#allocation3 + $0x200] sm:$0xff]
        %v1486 = vld [vmem:[#allocation3 + $0x208] sm:$0xff]
        %v1487 = vld [vmem:[#allocation3 + $0x210] sm:$0xff]
        %v1488 = vld [vmem:[#allocation3 + $0x218] sm:$0xff]
        %v1489 = vld [vmem:[#allocation3 + $0x220] sm:$0xff]
        %v1490 = vld [vmem:[#allocation3 + $0x228] sm:$0xff]
        %v1491 = vld [vmem:[#allocation3 + $0x230] sm:$0xff]
        %v1492 = vld [vmem:[#allocation3 + $0x238] sm:$0xff]
        %v1493 = vld [vmem:[#allocation3 + $0x240] sm:$0xff]
        %v1494 = vld [vmem:[#allocation3 + $0x248] sm:$0xff]
        %v1495 = vld [vmem:[#allocation3 + $0x250] sm:$0xff]
        %v1496 = vld [vmem:[#allocation3 + $0x258] sm:$0xff]
        %v1497 = vld [vmem:[#allocation3 + $0x260] sm:$0xff]
        %v1498 = vld [vmem:[#allocation3 + $0x268] sm:$0xff]
        %v1499 = vld [vmem:[#allocation3 + $0x270] sm:$0xff]
        %v1500 = vld [vmem:[#allocation3 + $0x278] sm:$0xff]
        %v1501 = vld [vmem:[#allocation3 + $0x280] sm:$0xff]
        %v1502 = vld [vmem:[#allocation3 + $0x288] sm:$0xff]
        %v1503 = vld [vmem:[#allocation3 + $0x290] sm:$0xff]
        %v1504 = vld [vmem:[#allocation3 + $0x298] sm:$0xff]
        %v1505 = vld [vmem:[#allocation3 + $0x2a0] sm:$0xff]
        %v1506 = vld [vmem:[#allocation3 + $0x2a8] sm:$0xff]
        %v1507 = vld [vmem:[#allocation3 + $0x2b0] sm:$0xff]
        %v1508 = vld [vmem:[#allocation3 + $0x2b8] sm:$0xff]
        %v1509 = vld [vmem:[#allocation3 + $0x2c0] sm:$0xff]
        %v1510 = vld [vmem:[#allocation3 + $0x2c8] sm:$0xff]
        %v1511 = vld [vmem:[#allocation3 + $0x2d0] sm:$0xff]
        %v1512 = vld [vmem:[#allocation3 + $0x2d8] sm:$0xff]
        %v1513 = vld [vmem:[#allocation3 + $0x2e0] sm:$0xff]
        %v1514 = vld [vmem:[#allocation3 + $0x2e8] sm:$0xff]
        %v1515 = vld [vmem:[#allocation3 + $0x2f0] sm:$0xff]
        %v1516 = vld [vmem:[#allocation3 + $0x2f8] sm:$0xff]
        %v1517 = vld [vmem:[#allocation3 + $0x300] sm:$0xff]
        %v1518 = vld [vmem:[#allocation3 + $0x308] sm:$0xff]
        %v1519 = vld [vmem:[#allocation3 + $0x310] sm:$0xff]
        %v1520 = vld [vmem:[#allocation3 + $0x318] sm:$0xff]
        %v1521 = vld [vmem:[#allocation3 + $0x320] sm:$0xff]
        %v1522 = vld [vmem:[#allocation3 + $0x328] sm:$0xff]
        %v1523 = vld [vmem:[#allocation3 + $0x330] sm:$0xff]
        %v1524 = vld [vmem:[#allocation3 + $0x338] sm:$0xff]
        %v1525 = vld [vmem:[#allocation3 + $0x340] sm:$0xff]
        %v1526 = vld [vmem:[#allocation3 + $0x348] sm:$0xff]
        %v1527 = vld [vmem:[#allocation3 + $0x350] sm:$0xff]
        %v1528 = vld [vmem:[#allocation3 + $0x358] sm:$0xff]
        %v1529 = vld [vmem:[#allocation3 + $0x360] sm:$0xff]
        %v1530 = vld [vmem:[#allocation3 + $0x368] sm:$0xff]
        %v1531 = vld [vmem:[#allocation3 + $0x370] sm:$0xff]
        %v1532 = vld [vmem:[#allocation3 + $0x378] sm:$0xff]
        %v1533 = vld [vmem:[#allocation3 + $0x380] sm:$0xff]
        %v1534 = vld [vmem:[#allocation3 + $0x388] sm:$0xff]
        %v1535 = vld [vmem:[#allocation3 + $0x390] sm:$0xff]
        %v1536 = vld [vmem:[#allocation3 + $0x398] sm:$0xff]
        %v1537 = vld [vmem:[#allocation3 + $0x3a0] sm:$0xff]
        %v1538 = vld [vmem:[#allocation3 + $0x3a8] sm:$0xff]
        %v1539 = vld [vmem:[#allocation3 + $0x3b0] sm:$0xff]
        %v1540 = vld [vmem:[#allocation3 + $0x3b8] sm:$0xff]
        %v1541 = vld [vmem:[#allocation3 + $0x3c0] sm:$0xff]
        %v1542 = vld [vmem:[#allocation3 + $0x3c8] sm:$0xff]
        %v1543 = vld [vmem:[#allocation3 + $0x3d0] sm:$0xff]
        %v1544 = vld [vmem:[#allocation3 + $0x3d8] sm:$0xff]
        %v1545 = vld [vmem:[#allocation3 + $0x3e0] sm:$0xff]
        %v1546 = vld [vmem:[#allocation3 + $0x3e8] sm:$0xff]
        %v1547 = vld [vmem:[#allocation3 + $0x3f0] sm:$0xff]
        %v1548 = vld [vmem:[#allocation3 + $0x3f8] sm:$0xff]
        %v1549 = vld [vmem:[#allocation3 + $0x400] sm:$0xff]
        %v1550 = vld [vmem:[#allocation3 + $0x408] sm:$0xff]
        %v1551 = vld [vmem:[#allocation3 + $0x410] sm:$0xff]
        %v1552 = vld [vmem:[#allocation3 + $0x418] sm:$0xff]
        %v1553 = vld [vmem:[#allocation3 + $0x420] sm:$0xff]
        %v1554 = vld [vmem:[#allocation3 + $0x428] sm:$0xff]
        %v1555 = vld [vmem:[#allocation3 + $0x430] sm:$0xff]
        %v1556 = vld [vmem:[#allocation3 + $0x438] sm:$0xff]
        %v1557 = vld [vmem:[#allocation3 + $0x440] sm:$0xff]
        %v1558 = vld [vmem:[#allocation3 + $0x448] sm:$0xff]
        %v1559 = vld [vmem:[#allocation3 + $0x450] sm:$0xff]
        %v1560 = vld [vmem:[#allocation3 + $0x458] sm:$0xff]
        %v1561 = vld [vmem:[#allocation3 + $0x460] sm:$0xff]
        %v1562 = vld [vmem:[#allocation3 + $0x468] sm:$0xff]
        %v1563 = vld [vmem:[#allocation3 + $0x470] sm:$0xff]
        %v1564 = vld [vmem:[#allocation3 + $0x478] sm:$0xff]
        %v1565 = vld [vmem:[#allocation3 + $0x480] sm:$0xff]
        %v1566 = vld [vmem:[#allocation3 + $0x488] sm:$0xff]
        %v1567 = vld [vmem:[#allocation3 + $0x490] sm:$0xff]
        %v1568 = vld [vmem:[#allocation3 + $0x498] sm:$0xff]
        %v1569 = vld [vmem:[#allocation3 + $0x4a0] sm:$0xff]
        %v1570 = vld [vmem:[#allocation3 + $0x4a8] sm:$0xff]
        %v1571 = vld [vmem:[#allocation3 + $0x4b0] sm:$0xff]
        %v1572 = vld [vmem:[#allocation3 + $0x4b8] sm:$0xff]
        %v1573 = vld [vmem:[#allocation3 + $0x4c0] sm:$0xff]
        %v1574 = vld [vmem:[#allocation3 + $0x4c8] sm:$0xff]
        %v1575 = vld [vmem:[#allocation3 + $0x4d0] sm:$0xff]
        %v1576 = vld [vmem:[#allocation3 + $0x4d8] sm:$0xff]
        %v1577 = vld [vmem:[#allocation3 + $0x4e0] sm:$0xff]
        %v1578 = vld [vmem:[#allocation3 + $0x4e8] sm:$0xff]
        %v1579 = vld [vmem:[#allocation3 + $0x4f0] sm:$0xff]
        %v1580 = vld [vmem:[#allocation3 + $0x4f8] sm:$0xff]
        %v1581 = vld [vmem:[#allocation3 + $0x500] sm:$0xff]
        %v1582 = vld [vmem:[#allocation3 + $0x508] sm:$0xff]
        %v1583 = vld [vmem:[#allocation3 + $0x510] sm:$0xff]
        %v1584 = vld [vmem:[#allocation3 + $0x518] sm:$0xff]
        %v1585 = vld [vmem:[#allocation3 + $0x520] sm:$0xff]
        %v1586 = vld [vmem:[#allocation3 + $0x528] sm:$0xff]
        %v1587 = vld [vmem:[#allocation3 + $0x530] sm:$0xff]
        %v1588 = vld [vmem:[#allocation3 + $0x538] sm:$0xff]
        %v1589 = vld [vmem:[#allocation3 + $0x540] sm:$0xff]
        %v1590 = vld [vmem:[#allocation3 + $0x548] sm:$0xff]
        %v1591 = vld [vmem:[#allocation3 + $0x550] sm:$0xff]
        %v1592 = vld [vmem:[#allocation3 + $0x558] sm:$0xff]
        %v1593 = vld [vmem:[#allocation3 + $0x560] sm:$0xff]
        %v1594 = vld [vmem:[#allocation3 + $0x568] sm:$0xff]
        %v1595 = vld [vmem:[#allocation3 + $0x570] sm:$0xff]
        %v1596 = vld [vmem:[#allocation3 + $0x578] sm:$0xff]
        %v1597 = vld [vmem:[#allocation3 + $0x580] sm:$0xff]
        %v1598 = vld [vmem:[#allocation3 + $0x588] sm:$0xff]
        %v1599 = vld [vmem:[#allocation3 + $0x590] sm:$0xff]
        %v1600 = vld [vmem:[#allocation3 + $0x598] sm:$0xff]
        %v1601 = vld [vmem:[#allocation3 + $0x5a0] sm:$0xff]
        %v1602 = vld [vmem:[#allocation3 + $0x5a8] sm:$0xff]
        %v1603 = vld [vmem:[#allocation3 + $0x5b0] sm:$0xff]
        %v1604 = vld [vmem:[#allocation3 + $0x5b8] sm:$0xff]
        %v1605 = vld [vmem:[#allocation3 + $0x5c0] sm:$0xff]
        %v1606 = vld [vmem:[#allocation3 + $0x5c8] sm:$0xff]
        %v1607 = vld [vmem:[#allocation3 + $0x5d0] sm:$0xff]
        %v1608 = vld [vmem:[#allocation3 + $0x5d8] sm:$0xff]
        %v1609 = vld [vmem:[#allocation3 + $0x5e0] sm:$0xff]
        %v1610 = vpack.c.bf16 %v1428, %v1421
        %v1611 = vpack.c.bf16 %v1429, %v1422
        %v1612 = vpack.c.bf16 %v1430, %v1423
        %v1613 = vpack.c.bf16 %v1431, %v1424
        %v1614 = vpack.c.bf16 %v1432, %v1425
        %v1615 = vpack.c.bf16 %v1433, %v1426
        %v1616 = vpack.c.bf16 %v1434, %v1427
        %v1617 = vpack.c.bf16 %v1442, %v1435
        %v1618 = vpack.c.bf16 %v1443, %v1436
        %v1619 = vpack.c.bf16 %v1444, %v1437
        %v1620 = vpack.c.bf16 %v1445, %v1438
        %v1621 = vpack.c.bf16 %v1446, %v1439
        %v1622 = vpack.c.bf16 %v1447, %v1440
        %v1623 = vpack.c.bf16 %v1448, %v1441
        %v1624 = vpack.c.bf16 %v1456, %v1449
        %v1625 = vpack.c.bf16 %v1457, %v1450
        %v1626 = vpack.c.bf16 %v1458, %v1451
        %v1627 = vpack.c.bf16 %v1459, %v1452
        %v1628 = vpack.c.bf16 %v1460, %v1453
        %v1629 = vpack.c.bf16 %v1461, %v1454
        %v1630 = vpack.c.bf16 %v1462, %v1455
        %v1631 = vpack.c.bf16 %v1470, %v1463
        %v1632 = vpack.c.bf16 %v1471, %v1464
        %v1633 = vpack.c.bf16 %v1472, %v1465
        %v1634 = vpack.c.bf16 %v1473, %v1466
        %v1635 = vpack.c.bf16 %v1474, %v1467
        %v1636 = vpack.c.bf16 %v1475, %v1468
        %v1637 = vpack.c.bf16 %v1476, %v1469
        %v1638 = vpack.c.bf16 %v1484, %v1477
        %v1639 = vpack.c.bf16 %v1485, %v1478
        %v1640 = vpack.c.bf16 %v1486, %v1479
        %v1641 = vpack.c.bf16 %v1487, %v1480
        %v1642 = vpack.c.bf16 %v1488, %v1481
        %v1643 = vpack.c.bf16 %v1489, %v1482
        %v1644 = vpack.c.bf16 %v1490, %v1483
        %v1645 = vpack.c.bf16 %v1498, %v1491
        %v1646 = vpack.c.bf16 %v1499, %v1492
        %v1647 = vpack.c.bf16 %v1500, %v1493
        %v1648 = vpack.c.bf16 %v1501, %v1494
        %v1649 = vpack.c.bf16 %v1502, %v1495
        %v1650 = vpack.c.bf16 %v1503, %v1496
        %v1651 = vpack.c.bf16 %v1504, %v1497
        %v1652 = vpack.c.bf16 %v1512, %v1505
        %v1653 = vpack.c.bf16 %v1513, %v1506
        %v1654 = vpack.c.bf16 %v1514, %v1507
        %v1655 = vpack.c.bf16 %v1515, %v1508
        %v1656 = vpack.c.bf16 %v1516, %v1509
        %v1657 = vpack.c.bf16 %v1517, %v1510
        %v1658 = vpack.c.bf16 %v1518, %v1511
        %v1659 = vpack.c.bf16 %v1526, %v1519
        %v1660 = vpack.c.bf16 %v1527, %v1520
        %v1661 = vpack.c.bf16 %v1528, %v1521
        %v1662 = vpack.c.bf16 %v1529, %v1522
        %v1663 = vpack.c.bf16 %v1530, %v1523
        %v1664 = vpack.c.bf16 %v1531, %v1524
        %v1665 = vpack.c.bf16 %v1532, %v1525
        %v1666 = vpack.c.bf16 %v1540, %v1533
        %v1667 = vpack.c.bf16 %v1541, %v1534
        %v1668 = vpack.c.bf16 %v1542, %v1535
        %v1669 = vpack.c.bf16 %v1543, %v1536
        %v1670 = vpack.c.bf16 %v1544, %v1537
        %v1671 = vpack.c.bf16 %v1545, %v1538
        %v1672 = vpack.c.bf16 %v1546, %v1539
        %v1673 = vpack.c.bf16 %v1554, %v1547
        %v1674 = vpack.c.bf16 %v1555, %v1548
        %v1675 = vpack.c.bf16 %v1556, %v1549
        %v1676 = vpack.c.bf16 %v1557, %v1550
        %v1677 = vpack.c.bf16 %v1558, %v1551
        %v1678 = vpack.c.bf16 %v1559, %v1552
        %v1679 = vpack.c.bf16 %v1560, %v1553
        %v1680 = vpack.c.bf16 %v1568, %v1561
        %v1681 = vpack.c.bf16 %v1569, %v1562
        %v1682 = vpack.c.bf16 %v1570, %v1563
        %v1683 = vpack.c.bf16 %v1571, %v1564
        %v1684 = vpack.c.bf16 %v1572, %v1565
        %v1685 = vpack.c.bf16 %v1573, %v1566
        %v1686 = vpack.c.bf16 %v1574, %v1567
        %v1687 = vpack.c.bf16 %v1582, %v1575
        %v1688 = vpack.c.bf16 %v1583, %v1576
        %v1689 = vpack.c.bf16 %v1584, %v1577
        %v1690 = vpack.c.bf16 %v1585, %v1578
        %v1691 = vpack.c.bf16 %v1586, %v1579
        %v1692 = vpack.c.bf16 %v1587, %v1580
        %v1693 = vpack.c.bf16 %v1588, %v1581
        %v1694 = vpack.c.bf16 %v1596, %v1589
        %v1695 = vpack.c.bf16 %v1597, %v1590
        %v1696 = vpack.c.bf16 %v1598, %v1591
        %v1697 = vpack.c.bf16 %v1599, %v1592
        %v1698 = vpack.c.bf16 %v1600, %v1593
        %v1699 = vpack.c.bf16 %v1601, %v1594
        %v1700 = vpack.c.bf16 %v1602, %v1595
        %v1701 = vpack.c.bf16 %v1603, %v1603
        %v1702 = vpack.c.bf16 %v1604, %v1604
        %v1703 = vpack.c.bf16 %v1605, %v1605
        %v1704 = vpack.c.bf16 %v1606, %v1606
        %v1705 = vpack.c.bf16 %v1607, %v1607
        %v1706 = vpack.c.bf16 %v1608, %v1608
        %v1707 = vpack.c.bf16 %v1609, %v1609
        %v1708 = vld [vmem:[%s2] sm:$0xff]
        %1710 = vset.pattern.permute.xlu0 0
        %1711 = vperm.xlu0 %1710, %v1708
        %v1712 = vpop.permute.xlu0 %1711
        %v1715 = vunpack.c.l.b16 %v1420
        %v1716 = vunpack.c.h.b16 %v1420
        %v1717 = vpack.c.b16 %v1715, %v1715
        %v1718 = vpack.c.b16 %v1716, %v1716
        %vm1720 = vcmask 719872
        %v1722 = vsel %vm1720, %v1718, 0
        %vm1724 = vcmask 1043456
        %v1726 = vsel %vm1724, %v1701, 0
        %v1729 = vsel %vm1724, %v1702, 0
        %v1732 = vsel %vm1724, %v1703, 0
        %v1735 = vsel %vm1724, %v1704, 0
        %v1738 = vsel %vm1724, %v1705, 0
        %v1741 = vsel %vm1724, %v1706, 0
        %v1744 = vsel %vm1724, %v1707, 0
        %1746 = vmatprep.subr.bf16.mxu0 %v1611
        %1747 = vmatpush1.bf16.msra.mxu0 %v1610
        %1748 = vmatprep.subr.bf16.mxu0 %v1618
        %1749 = vmatpush1.bf16.msra.mxu0 %v1617
        %1750 = vmatprep.subr.bf16.mxu0 %v1625
        %1751 = vmatpush1.bf16.msra.mxu0 %v1624
        %1752 = vmatprep.subr.bf16.mxu0 %v1632
        %1753 = vmatpush1.bf16.msra.mxu0 %v1631
        %1754 = vmatprep.subr.bf16.mxu0 %v1639
        %1755 = vmatpush1.bf16.msra.mxu0 %v1638
        %1756 = vmatprep.subr.bf16.mxu0 %v1646
        %1757 = vmatpush1.bf16.msra.mxu0 %v1645
        %1758 = vmatprep.subr.bf16.mxu0 %v1653
        %1759 = vmatpush1.bf16.msra.mxu0 %v1652
        %1760 = vmatprep.subr.bf16.mxu0 %v1660
        %1761 = vmatpush1.bf16.msra.mxu0 %v1659
        %1762 = vmatprep.subr.bf16.mxu0 %v1667
        %1763 = vmatpush1.bf16.msra.mxu0 %v1666
        %1764 = vmatprep.subr.bf16.mxu0 %v1674
        %1765 = vmatpush1.bf16.msra.mxu0 %v1673
        %1766 = vmatprep.subr.bf16.mxu0 %v1681
        %1767 = vmatpush1.bf16.msra.mxu0 %v1680
        %1768 = vmatprep.subr.bf16.mxu0 %v1688
        %1769 = vmatpush1.bf16.msra.mxu0 %v1687
        %1770 = vmatprep.subr.bf16.mxu0 %v1695
        %1771 = vmatpush1.bf16.msra.mxu0 %v1694
        %1772 = vmatprep.subr.bf16.mxu0 %v1729
        %1773 = vmatpush1.bf16.msra.mxu0 %v1726
        %1774 = vmatprep.subr.bf16.mxu0 0
        %1775 = vmatpush1.bf16.msra.mxu0 0
        %1776 = vmatprep.subr.bf16.mxu0 0
        %1777 = vmatpush1.bf16.msra.mxu0 0
        %1778 = vmatprep.mubr.bf16.mxu0 %v1722
        %1779 = vmatmul.mubr.bf16.gmra.mrb[0].mxu0 %v1717
        %v1780 = vpop.f32.mrb[0].mxu0
        %v1781 = vadd.f32 %v1712, %v1780
        %v1782 = vpop.f32.mrb[0].mxu0
        %v1783 = vadd.f32 %v1712, %v1782
        %v1784 = vpop.f32.mrb[0].mxu0
        %v1785 = vpop.f32.mrb[0].mxu0
        %1786 = vdwg.mxu0
        %1787 = vmatprep.subr.bf16.mxu0 %v1613
        %1788 = vmatpush1.bf16.msra.mxu0 %v1612
        %1789 = vmatprep.subr.bf16.mxu0 %v1620
        %1790 = vmatpush1.bf16.msra.mxu0 %v1619
        %1791 = vmatprep.subr.bf16.mxu0 %v1627
        %1792 = vmatpush1.bf16.msra.mxu0 %v1626
        %1793 = vmatprep.subr.bf16.mxu0 %v1634
        %1794 = vmatpush1.bf16.msra.mxu0 %v1633
        %1795 = vmatprep.subr.bf16.mxu0 %v1641
        %1796 = vmatpush1.bf16.msra.mxu0 %v1640
        %1797 = vmatprep.subr.bf16.mxu0 %v1648
        %1798 = vmatpush1.bf16.msra.mxu0 %v1647
        %1799 = vmatprep.subr.bf16.mxu0 %v1655
        %1800 = vmatpush1.bf16.msra.mxu0 %v1654
        %1801 = vmatprep.subr.bf16.mxu0 %v1662
        %1802 = vmatpush1.bf16.msra.mxu0 %v1661
        %1803 = vmatprep.subr.bf16.mxu0 %v1669
        %1804 = vmatpush1.bf16.msra.mxu0 %v1668
        %1805 = vmatprep.subr.bf16.mxu0 %v1676
        %1806 = vmatpush1.bf16.msra.mxu0 %v1675
        %1807 = vmatprep.subr.bf16.mxu0 %v1683
        %1808 = vmatpush1.bf16.msra.mxu0 %v1682
        %1809 = vmatprep.subr.bf16.mxu0 %v1690
        %1810 = vmatpush1.bf16.msra.mxu0 %v1689
        %1811 = vmatprep.subr.bf16.mxu0 %v1697
        %1812 = vmatpush1.bf16.msra.mxu0 %v1696
        %1813 = vmatprep.subr.bf16.mxu0 %v1735
        %1814 = vmatpush1.bf16.msra.mxu0 %v1732
        %1815 = vmatprep.subr.bf16.mxu0 0
        %1816 = vmatpush1.bf16.msra.mxu0 0
        %1817 = vmatprep.subr.bf16.mxu0 0
        %1818 = vmatpush1.bf16.msra.mxu0 0
        %1819 = vmatprep.mubr.bf16.mxu0 %v1722
        %1820 = vmatmul.mubr.bf16.gmra.mrb[0].mxu0 %v1717
        %v1821 = vpop.f32.mrb[0].mxu0
        %v1822 = vadd.f32 %v1712, %v1821
        %v1823 = vpop.f32.mrb[0].mxu0
        %v1824 = vadd.f32 %v1712, %v1823
        %v1825 = vpop.f32.mrb[0].mxu0
        %v1826 = vpop.f32.mrb[0].mxu0
        %1827 = vdwg.mxu0
        %1828 = vmatprep.subr.bf16.mxu0 %v1615
        %1829 = vmatpush1.bf16.msra.mxu0 %v1614
        %1830 = vmatprep.subr.bf16.mxu0 %v1622
        %1831 = vmatpush1.bf16.msra.mxu0 %v1621
        %1832 = vmatprep.subr.bf16.mxu0 %v1629
        %1833 = vmatpush1.bf16.msra.mxu0 %v1628
        %1834 = vmatprep.subr.bf16.mxu0 %v1636
        %1835 = vmatpush1.bf16.msra.mxu0 %v1635
        %1836 = vmatprep.subr.bf16.mxu0 %v1643
        %1837 = vmatpush1.bf16.msra.mxu0 %v1642
        %1838 = vmatprep.subr.bf16.mxu0 %v1650
        %1839 = vmatpush1.bf16.msra.mxu0 %v1649
        %1840 = vmatprep.subr.bf16.mxu0 %v1657
        %1841 = vmatpush1.bf16.msra.mxu0 %v1656
        %1842 = vmatprep.subr.bf16.mxu0 %v1664
        %1843 = vmatpush1.bf16.msra.mxu0 %v1663
        %1844 = vmatprep.subr.bf16.mxu0 %v1671
        %1845 = vmatpush1.bf16.msra.mxu0 %v1670
        %1846 = vmatprep.subr.bf16.mxu0 %v1678
        %1847 = vmatpush1.bf16.msra.mxu0 %v1677
        %1848 = vmatprep.subr.bf16.mxu0 %v1685
        %1849 = vmatpush1.bf16.msra.mxu0 %v1684
        %1850 = vmatprep.subr.bf16.mxu0 %v1692
        %1851 = vmatpush1.bf16.msra.mxu0 %v1691
        %1852 = vmatprep.subr.bf16.mxu0 %v1699
        %1853 = vmatpush1.bf16.msra.mxu0 %v1698
        %1854 = vmatprep.subr.bf16.mxu0 %v1741
        %1855 = vmatpush1.bf16.msra.mxu0 %v1738
        %1856 = vmatprep.subr.bf16.mxu0 0
        %1857 = vmatpush1.bf16.msra.mxu0 0
        %1858 = vmatprep.subr.bf16.mxu0 0
        %1859 = vmatpush1.bf16.msra.mxu0 0
        %1860 = vmatprep.mubr.bf16.mxu0 %v1722
        %1861 = vmatmul.mubr.bf16.gmra.mrb[0].mxu0 %v1717
        %v1862 = vpop.f32.mrb[0].mxu0
        %v1863 = vadd.f32 %v1712, %v1862
        %v1864 = vpop.f32.mrb[0].mxu0
        %v1865 = vadd.f32 %v1712, %v1864
        %v1866 = vpop.f32.mrb[0].mxu0
        %v1867 = vpop.f32.mrb[0].mxu0
        %1868 = vdwg.mxu0
        %1869 = vmatprep.subr.bf16.mxu0 0
        %1870 = vmatpush1.bf16.msra.mxu0 %v1616
        %1871 = vmatprep.subr.bf16.mxu0 0
        %1872 = vmatpush1.bf16.msra.mxu0 %v1623
        %1873 = vmatprep.subr.bf16.mxu0 0
        %1874 = vmatpush1.bf16.msra.mxu0 %v1630
        %1875 = vmatprep.subr.bf16.mxu0 0
        %1876 = vmatpush1.bf16.msra.mxu0 %v1637
        %1877 = vmatprep.subr.bf16.mxu0 0
        %1878 = vmatpush1.bf16.msra.mxu0 %v1644
        %1879 = vmatprep.subr.bf16.mxu0 0
        %1880 = vmatpush1.bf16.msra.mxu0 %v1651
        %1881 = vmatprep.subr.bf16.mxu0 0
        %1882 = vmatpush1.bf16.msra.mxu0 %v1658
        %1883 = vmatprep.subr.bf16.mxu0 0
        %1884 = vmatpush1.bf16.msra.mxu0 %v1665
        %1885 = vmatprep.subr.bf16.mxu0 0
        %1886 = vmatpush1.bf16.msra.mxu0 %v1672
        %1887 = vmatprep.subr.bf16.mxu0 0
        %1888 = vmatpush1.bf16.msra.mxu0 %v1679
        %1889 = vmatprep.subr.bf16.mxu0 0
        %1890 = vmatpush1.bf16.msra.mxu0 %v1686
        %1891 = vmatprep.subr.bf16.mxu0 0
        %1892 = vmatpush1.bf16.msra.mxu0 %v1693
        %1893 = vmatprep.subr.bf16.mxu0 0
        %1894 = vmatpush1.bf16.msra.mxu0 %v1700
        %1895 = vmatprep.subr.bf16.mxu0 0
        %1896 = vmatpush1.bf16.msra.mxu0 %v1744
        %1897 = vmatprep.subr.bf16.mxu0 0
        %1898 = vmatpush1.bf16.msra.mxu0 0
        %1899 = vmatprep.subr.bf16.mxu0 0
        %1900 = vmatpush1.bf16.msra.mxu0 0
        %1901 = vmatprep.mubr.bf16.mxu0 %v1722
        %1902 = vmatmul.mubr.bf16.gmra.mrb[0].mxu0 %v1717
        %v1903 = vpop.f32.mrb[0].mxu0
        %v1904 = vadd.f32 %v1712, %v1903
        %v1905 = vpop.f32.mrb[0].mxu0
        %v1906 = vpop.f32.mrb[0].mxu0
        %v1907 = vpop.f32.mrb[0].mxu0
        %1908 = vdwg.mxu0
        %v1909 = vmul.f32 %v342, %v1781
        %v1910 = vmul.f32 %v346, %v1783
        %v1911 = vmul.f32 %v350, %v1822
        %v1912 = vmul.f32 %v354, %v1824
        %v1913 = vmul.f32 %v358, %v1863
        %v1914 = vmul.f32 %v362, %v1865
        %v1915 = vmul.f32 %v366, %v1904
        %v1916 = vadd.f32 %v1909, %v1910
        %v1917 = vadd.f32 %v1916, %v1911
        %v1918 = vadd.f32 %v1917, %v1912
        %v1919 = vadd.f32 %v1918, %v1913
        %v1920 = vadd.f32 %v1919, %v1914
        %v1921 = vsel %vm325, %v1915, 0.0
        %v1922 = vadd.f32 %v1920, %v1921
        %1923 = vadd.xlane.f32.xlu0 %v1922
        %v1924 = vpop.xlane.xlu0 %1923
        %v1925 = vmul.f32 %v1924, 0.001953125
        %v1926 = vsub.f32 %v1909, %v1925
        %v1927 = vsub.f32 %v1910, %v1925
        %v1928 = vsub.f32 %v1911, %v1925
        %v1929 = vsub.f32 %v1912, %v1925
        %v1930 = vsub.f32 %v1913, %v1925
        %v1931 = vsub.f32 %v1914, %v1925
        %v1932 = vsub.f32 %v1915, %v1925
        %v1933 = vmul.f32 %v1926, %v342
        %v1934 = vmul.f32 %v1927, %v346
        %v1935 = vmul.f32 %v1928, %v350
        %v1936 = vmul.f32 %v1929, %v354
        %v1937 = vmul.f32 %v1930, %v358
        %v1938 = vmul.f32 %v1931, %v362
        %v1939 = vmul.f32 %v1932, %v366
        %v1940 = vmul.f32 %v1933, %v1933
        %v1941 = vmul.f32 %v1934, %v1934
        %v1942 = vmul.f32 %v1935, %v1935
        %v1943 = vmul.f32 %v1936, %v1936
        %v1944 = vmul.f32 %v1937, %v1937
        %v1945 = vmul.f32 %v1938, %v1938
        %v1946 = vmul.f32 %v1939, %v1939
        %v1947 = vadd.f32 %v1940, %v1941
        %v1948 = vadd.f32 %v1947, %v1942
        %v1949 = vadd.f32 %v1948, %v1943
        %v1950 = vadd.f32 %v1949, %v1944
        %v1951 = vadd.f32 %v1950, %v1945
        %v1952 = vsel %vm325, %v1946, 0.0
        %v1953 = vadd.f32 %v1951, %v1952
        %1954 = vadd.xlane.f32.xlu0 %v1953
        %v1955 = vpop.xlane.xlu0 %1954
        %v1956 = vmul.f32 %v1955, 0.001953125
        %v1957 = vadd.f32 %v1956, 1e-05
        %v1958 = vrsqrt.pop %v1957
        %v1959 = vmul.f32 %v1933, %v1958
        %v1960 = vmul.f32 %v1934, %v1958
        %v1961 = vmul.f32 %v1935, %v1958
        %v1962 = vmul.f32 %v1936, %v1958
        %v1963 = vmul.f32 %v1937, %v1958
        %v1964 = vmul.f32 %v1938, %v1958
        %v1965 = vmul.f32 %v1939, %v1958
        %vm1966 = vcmp.ge.f32.partialorder %v1959, 0.0
        %vm1967 = vcmp.ge.f32.partialorder %v1960, 0.0
        %vm1968 = vcmp.ge.f32.partialorder %v1961, 0.0
        %vm1969 = vcmp.ge.f32.partialorder %v1962, 0.0
        %vm1970 = vcmp.ge.f32.partialorder %v1963, 0.0
        %vm1971 = vcmp.ge.f32.partialorder %v1964, 0.0
        %vm1972 = vcmp.ge.f32.partialorder %v1965, 0.0
        %v1973 = vstv %s319
        %v1974 = vmul.f32 %v1973, %v1959
        %v1975 = vmul.f32 %v1973, %v1960
        %v1976 = vmul.f32 %v1973, %v1961
        %v1977 = vmul.f32 %v1973, %v1962
        %v1978 = vmul.f32 %v1973, %v1963
        %v1979 = vmul.f32 %v1973, %v1964
        %v1980 = vmul.f32 %v1973, %v1965
        %v1981 = vsel %vm1966, %v1959, %v1974
        %v1982 = vsel %vm1967, %v1960, %v1975
        %v1983 = vsel %vm1968, %v1961, %v1976
        %v1984 = vsel %vm1969, %v1962, %v1977
        %v1985 = vsel %vm1970, %v1963, %v1978
        %v1986 = vsel %vm1971, %v1964, %v1979
        %v1987 = vsel %vm1972, %v1965, %v1980
        %1995 = vrot.lane.b32.xlu0 %v1981, 111
        %v1996 = vpop.permute.xlu0 %1995
        %1997 = vrot.lane.b32.xlu0 %v1982, 111
        %v1998 = vpop.permute.xlu0 %1997
        %1999 = vrot.lane.b32.xlu0 %v1983, 111
        %v2000 = vpop.permute.xlu0 %1999
        %2001 = vrot.lane.b32.xlu0 %v1984, 111
        %v2002 = vpop.permute.xlu0 %2001
        %2003 = vrot.lane.b32.xlu0 %v1985, 111
        %v2004 = vpop.permute.xlu0 %2003
        %2005 = vrot.lane.b32.xlu0 %v1986, 111
        %v2006 = vpop.permute.xlu0 %2005
        %2007 = vrot.lane.b32.xlu0 %v1987, 111
        %v2008 = vpop.permute.xlu0 %2007
        %v2009 = vsel %vm429, %v1996, %v1998
        %v2010 = vsel %vm429, %v1998, %v2000
        %v2011 = vsel %vm429, %v2000, %v2002
        %v2012 = vsel %vm429, %v2002, %v2004
        %v2013 = vsel %vm429, %v2004, %v2006
        %v2014 = vsel %vm429, %v2006, %v2008
        %2022 = vst.msk [vmem:[#allocation2] sm:$0xff] %vm469, %v1996
        %2023 = vst [vmem:[#allocation2 + $0x8] sm:$0xff] %v2009
        %2024 = vst [vmem:[#allocation2 + $0x10] sm:$0xff] %v2010
        %2025 = vst [vmem:[#allocation2 + $0x18] sm:$0xff] %v2011
        %2026 = vst [vmem:[#allocation2 + $0x20] sm:$0xff] %v2012
        %2027 = vst [vmem:[#allocation2 + $0x28] sm:$0xff] %v2013
        %2028 = vst.msk [vmem:[#allocation2 + $0x30] sm:$0xff] %vm476, %v2014
        %v2029 = vld [vmem:[#allocation2] sm:$0xff]
        %v2030 = vld [vmem:[#allocation2 + $0x8] sm:$0xff]
        %v2031 = vld [vmem:[#allocation2 + $0x10] sm:$0xff]
        %v2032 = vld [vmem:[#allocation2 + $0x18] sm:$0xff]
        %v2033 = vld [vmem:[#allocation2 + $0x20] sm:$0xff]
        %v2034 = vld [vmem:[#allocation2 + $0x28] sm:$0xff]
        %v2035 = vld [vmem:[#allocation2 + $0x30] sm:$0xff]
        %v2036 = vld [vmem:[#allocation2 + $0x38] sm:$0xff]
        %2037 = vst [vmem:[#allocation3] sm:$0xff] %v2029
        %2038 = vst [vmem:[#allocation3 + $0x8] sm:$0xff] %v2030
        %2039 = vst [vmem:[#allocation3 + $0x10] sm:$0xff] %v2031
        %2040 = vst [vmem:[#allocation3 + $0x18] sm:$0xff] %v2032
        %2041 = vst [vmem:[#allocation3 + $0x20] sm:$0xff] %v2033
        %2042 = vst [vmem:[#allocation3 + $0x28] sm:$0xff] %v2034
        %2043 = vst.msk [vmem:[#allocation3 + $0x30] sm:$0xff] %vm325, %v2035
        %2051 = vrot.lane.b32.xlu0 %v2029, 127
        %v2052 = vpop.permute.xlu0 %2051
        %2053 = vrot.lane.b32.xlu0 %v2030, 127
        %v2054 = vpop.permute.xlu0 %2053
        %2055 = vrot.lane.b32.xlu0 %v2031, 127
        %v2056 = vpop.permute.xlu0 %2055
        %2057 = vrot.lane.b32.xlu0 %v2032, 127
        %v2058 = vpop.permute.xlu0 %2057
        %2059 = vrot.lane.b32.xlu0 %v2033, 127
        %v2060 = vpop.permute.xlu0 %2059
        %2061 = vrot.lane.b32.xlu0 %v2034, 127
        %v2062 = vpop.permute.xlu0 %2061
        %2063 = vrot.lane.b32.xlu0 %v2035, 127
        %v2064 = vpop.permute.xlu0 %2063
        %v2065 = vsel %vm514, %v2052, %v2054
        %v2066 = vsel %vm514, %v2054, %v2056
        %v2067 = vsel %vm514, %v2056, %v2058
        %v2068 = vsel %vm514, %v2058, %v2060
        %v2069 = vsel %vm514, %v2060, %v2062
        %v2070 = vsel %vm514, %v2062, %v2064
        %2078 = vst [vmem:[#allocation3 + $0x38] sm:$0xff] %v2065
        %2079 = vst [vmem:[#allocation3 + $0x40] sm:$0xff] %v2066
        %2080 = vst [vmem:[#allocation3 + $0x48] sm:$0xff] %v2067
        %2081 = vst [vmem:[#allocation3 + $0x50] sm:$0xff] %v2068
        %2082 = vst [vmem:[#allocation3 + $0x58] sm:$0xff] %v2069
        %2083 = vst [vmem:[#allocation3 + $0x60] sm:$0xff] %v2070
        %2084 = vst.msk [vmem:[#allocation3 + $0x68] sm:$0xff] %vm325, %v2064
        %2085 = vrot.lane.b32.xlu0 %v2029, 126
        %v2086 = vpop.permute.xlu0 %2085
        %2087 = vrot.lane.b32.xlu0 %v2030, 126
        %v2088 = vpop.permute.xlu0 %2087
        %2089 = vrot.lane.b32.xlu0 %v2031, 126
        %v2090 = vpop.permute.xlu0 %2089
        %2091 = vrot.lane.b32.xlu0 %v2032, 126
        %v2092 = vpop.permute.xlu0 %2091
        %2093 = vrot.lane.b32.xlu0 %v2033, 126
        %v2094 = vpop.permute.xlu0 %2093
        %2095 = vrot.lane.b32.xlu0 %v2034, 126
        %v2096 = vpop.permute.xlu0 %2095
        %2097 = vrot.lane.b32.xlu0 %v2035, 126
        %v2098 = vpop.permute.xlu0 %2097
        %v2099 = vsel %vm549, %v2086, %v2088
        %v2100 = vsel %vm549, %v2088, %v2090
        %v2101 = vsel %vm549, %v2090, %v2092
        %v2102 = vsel %vm549, %v2092, %v2094
        %v2103 = vsel %vm549, %v2094, %v2096
        %v2104 = vsel %vm549, %v2096, %v2098
        %2112 = vst [vmem:[#allocation3 + $0x70] sm:$0xff] %v2099
        %2113 = vst [vmem:[#allocation3 + $0x78] sm:$0xff] %v2100
        %2114 = vst [vmem:[#allocation3 + $0x80] sm:$0xff] %v2101
        %2115 = vst [vmem:[#allocation3 + $0x88] sm:$0xff] %v2102
        %2116 = vst [vmem:[#allocation3 + $0x90] sm:$0xff] %v2103
        %2117 = vst [vmem:[#allocation3 + $0x98] sm:$0xff] %v2104
        %2118 = vst.msk [vmem:[#allocation3 + $0xa0] sm:$0xff] %vm325, %v2098
        %2119 = vrot.lane.b32.xlu0 %v2029, 118
        %v2120 = vpop.permute.xlu0 %2119
        %2121 = vrot.lane.b32.xlu0 %v2030, 118
        %v2122 = vpop.permute.xlu0 %2121
        %2123 = vrot.lane.b32.xlu0 %v2031, 118
        %v2124 = vpop.permute.xlu0 %2123
        %2125 = vrot.lane.b32.xlu0 %v2032, 118
        %v2126 = vpop.permute.xlu0 %2125
        %2127 = vrot.lane.b32.xlu0 %v2033, 118
        %v2128 = vpop.permute.xlu0 %2127
        %2129 = vrot.lane.b32.xlu0 %v2034, 118
        %v2130 = vpop.permute.xlu0 %2129
        %2131 = vrot.lane.b32.xlu0 %v2035, 118
        %v2132 = vpop.permute.xlu0 %2131
        %v2133 = vsel %vm584, %v2120, %v2122
        %v2134 = vsel %vm584, %v2122, %v2124
        %v2135 = vsel %vm584, %v2124, %v2126
        %v2136 = vsel %vm584, %v2126, %v2128
        %v2137 = vsel %vm584, %v2128, %v2130
        %v2138 = vsel %vm584, %v2130, %v2132
        %2146 = vst [vmem:[#allocation3 + $0xa8] sm:$0xff] %v2133
        %2147 = vst [vmem:[#allocation3 + $0xb0] sm:$0xff] %v2134
        %2148 = vst [vmem:[#allocation3 + $0xb8] sm:$0xff] %v2135
        %2149 = vst [vmem:[#allocation3 + $0xc0] sm:$0xff] %v2136
        %2150 = vst [vmem:[#allocation3 + $0xc8] sm:$0xff] %v2137
        %2151 = vst [vmem:[#allocation3 + $0xd0] sm:$0xff] %v2138
        %2152 = vst.msk [vmem:[#allocation3 + $0xd8] sm:$0xff] %vm325, %v2132
        %2153 = vrot.lane.b32.xlu0 %v2029, 117
        %v2154 = vpop.permute.xlu0 %2153
        %2155 = vrot.lane.b32.xlu0 %v2030, 117
        %v2156 = vpop.permute.xlu0 %2155
        %2157 = vrot.lane.b32.xlu0 %v2031, 117
        %v2158 = vpop.permute.xlu0 %2157
        %2159 = vrot.lane.b32.xlu0 %v2032, 117
        %v2160 = vpop.permute.xlu0 %2159
        %2161 = vrot.lane.b32.xlu0 %v2033, 117
        %v2162 = vpop.permute.xlu0 %2161
        %2163 = vrot.lane.b32.xlu0 %v2034, 117
        %v2164 = vpop.permute.xlu0 %2163
        %2165 = vrot.lane.b32.xlu0 %v2035, 117
        %v2166 = vpop.permute.xlu0 %2165
        %v2167 = vsel %vm619, %v2154, %v2156
        %v2168 = vsel %vm619, %v2156, %v2158
        %v2169 = vsel %vm619, %v2158, %v2160
        %v2170 = vsel %vm619, %v2160, %v2162
        %v2171 = vsel %vm619, %v2162, %v2164
        %v2172 = vsel %vm619, %v2164, %v2166
        %2180 = vst [vmem:[#allocation3 + $0xe0] sm:$0xff] %v2167
        %2181 = vst [vmem:[#allocation3 + $0xe8] sm:$0xff] %v2168
        %2182 = vst [vmem:[#allocation3 + $0xf0] sm:$0xff] %v2169
        %2183 = vst [vmem:[#allocation3 + $0xf8] sm:$0xff] %v2170
        %2184 = vst [vmem:[#allocation3 + $0x100] sm:$0xff] %v2171
        %2185 = vst [vmem:[#allocation3 + $0x108] sm:$0xff] %v2172
        %2186 = vst.msk [vmem:[#allocation3 + $0x110] sm:$0xff] %vm325, %v2166
        %2187 = vrot.lane.b32.xlu0 %v2029, 116
        %v2188 = vpop.permute.xlu0 %2187
        %2189 = vrot.lane.b32.xlu0 %v2030, 116
        %v2190 = vpop.permute.xlu0 %2189
        %2191 = vrot.lane.b32.xlu0 %v2031, 116
        %v2192 = vpop.permute.xlu0 %2191
        %2193 = vrot.lane.b32.xlu0 %v2032, 116
        %v2194 = vpop.permute.xlu0 %2193
        %2195 = vrot.lane.b32.xlu0 %v2033, 116
        %v2196 = vpop.permute.xlu0 %2195
        %2197 = vrot.lane.b32.xlu0 %v2034, 116
        %v2198 = vpop.permute.xlu0 %2197
        %2199 = vrot.lane.b32.xlu0 %v2035, 116
        %v2200 = vpop.permute.xlu0 %2199
        %v2201 = vsel %vm654, %v2188, %v2190
        %v2202 = vsel %vm654, %v2190, %v2192
        %v2203 = vsel %vm654, %v2192, %v2194
        %v2204 = vsel %vm654, %v2194, %v2196
        %v2205 = vsel %vm654, %v2196, %v2198
        %v2206 = vsel %vm654, %v2198, %v2200
        %2214 = vst [vmem:[#allocation3 + $0x118] sm:$0xff] %v2201
        %2215 = vst [vmem:[#allocation3 + $0x120] sm:$0xff] %v2202
        %2216 = vst [vmem:[#allocation3 + $0x128] sm:$0xff] %v2203
        %2217 = vst [vmem:[#allocation3 + $0x130] sm:$0xff] %v2204
        %2218 = vst [vmem:[#allocation3 + $0x138] sm:$0xff] %v2205
        %2219 = vst [vmem:[#allocation3 + $0x140] sm:$0xff] %v2206
        %2220 = vst.msk [vmem:[#allocation3 + $0x148] sm:$0xff] %vm325, %v2200
        %2221 = vrot.lane.b32.xlu0 %v2029, 108
        %v2222 = vpop.permute.xlu0 %2221
        %2223 = vrot.lane.b32.xlu0 %v2030, 108
        %v2224 = vpop.permute.xlu0 %2223
        %2225 = vrot.lane.b32.xlu0 %v2031, 108
        %v2226 = vpop.permute.xlu0 %2225
        %2227 = vrot.lane.b32.xlu0 %v2032, 108
        %v2228 = vpop.permute.xlu0 %2227
        %2229 = vrot.lane.b32.xlu0 %v2033, 108
        %v2230 = vpop.permute.xlu0 %2229
        %2231 = vrot.lane.b32.xlu0 %v2034, 108
        %v2232 = vpop.permute.xlu0 %2231
        %2233 = vrot.lane.b32.xlu0 %v2035, 108
        %v2234 = vpop.permute.xlu0 %2233
        %v2235 = vsel %vm689, %v2222, %v2224
        %v2236 = vsel %vm689, %v2224, %v2226
        %v2237 = vsel %vm689, %v2226, %v2228
        %v2238 = vsel %vm689, %v2228, %v2230
        %v2239 = vsel %vm689, %v2230, %v2232
        %v2240 = vsel %vm689, %v2232, %v2234
        %2248 = vst [vmem:[#allocation3 + $0x150] sm:$0xff] %v2235
        %2249 = vst [vmem:[#allocation3 + $0x158] sm:$0xff] %v2236
        %2250 = vst [vmem:[#allocation3 + $0x160] sm:$0xff] %v2237
        %2251 = vst [vmem:[#allocation3 + $0x168] sm:$0xff] %v2238
        %2252 = vst [vmem:[#allocation3 + $0x170] sm:$0xff] %v2239
        %2253 = vst [vmem:[#allocation3 + $0x178] sm:$0xff] %v2240
        %2254 = vst.msk [vmem:[#allocation3 + $0x180] sm:$0xff] %vm325, %v2234
        %2255 = vrot.lane.b32.xlu0 %v2029, 107
        %v2256 = vpop.permute.xlu0 %2255
        %2257 = vrot.lane.b32.xlu0 %v2030, 107
        %v2258 = vpop.permute.xlu0 %2257
        %2259 = vrot.lane.b32.xlu0 %v2031, 107
        %v2260 = vpop.permute.xlu0 %2259
        %2261 = vrot.lane.b32.xlu0 %v2032, 107
        %v2262 = vpop.permute.xlu0 %2261
        %2263 = vrot.lane.b32.xlu0 %v2033, 107
        %v2264 = vpop.permute.xlu0 %2263
        %2265 = vrot.lane.b32.xlu0 %v2034, 107
        %v2266 = vpop.permute.xlu0 %2265
        %2267 = vrot.lane.b32.xlu0 %v2035, 107
        %v2268 = vpop.permute.xlu0 %2267
        %v2269 = vsel %vm724, %v2256, %v2258
        %v2270 = vsel %vm724, %v2258, %v2260
        %v2271 = vsel %vm724, %v2260, %v2262
        %v2272 = vsel %vm724, %v2262, %v2264
        %v2273 = vsel %vm724, %v2264, %v2266
        %v2274 = vsel %vm724, %v2266, %v2268
        %2282 = vst [vmem:[#allocation3 + $0x188] sm:$0xff] %v2269
        %2283 = vst [vmem:[#allocation3 + $0x190] sm:$0xff] %v2270
        %2284 = vst [vmem:[#allocation3 + $0x198] sm:$0xff] %v2271
        %2285 = vst [vmem:[#allocation3 + $0x1a0] sm:$0xff] %v2272
        %2286 = vst [vmem:[#allocation3 + $0x1a8] sm:$0xff] %v2273
        %2287 = vst [vmem:[#allocation3 + $0x1b0] sm:$0xff] %v2274
        %2288 = vst.msk [vmem:[#allocation3 + $0x1b8] sm:$0xff] %vm325, %v2268
        %2289 = vrot.lane.b32.xlu0 %v2029, 106
        %v2290 = vpop.permute.xlu0 %2289
        %2291 = vrot.lane.b32.xlu0 %v2030, 106
        %v2292 = vpop.permute.xlu0 %2291
        %2293 = vrot.lane.b32.xlu0 %v2031, 106
        %v2294 = vpop.permute.xlu0 %2293
        %2295 = vrot.lane.b32.xlu0 %v2032, 106
        %v2296 = vpop.permute.xlu0 %2295
        %2297 = vrot.lane.b32.xlu0 %v2033, 106
        %v2298 = vpop.permute.xlu0 %2297
        %2299 = vrot.lane.b32.xlu0 %v2034, 106
        %v2300 = vpop.permute.xlu0 %2299
        %2301 = vrot.lane.b32.xlu0 %v2035, 106
        %v2302 = vpop.permute.xlu0 %2301
        %v2303 = vsel %vm759, %v2290, %v2292
        %v2304 = vsel %vm759, %v2292, %v2294
        %v2305 = vsel %vm759, %v2294, %v2296
        %v2306 = vsel %vm759, %v2296, %v2298
        %v2307 = vsel %vm759, %v2298, %v2300
        %v2308 = vsel %vm759, %v2300, %v2302
        %2316 = vst [vmem:[#allocation3 + $0x1c0] sm:$0xff] %v2303
        %2317 = vst [vmem:[#allocation3 + $0x1c8] sm:$0xff] %v2304
        %2318 = vst [vmem:[#allocation3 + $0x1d0] sm:$0xff] %v2305
        %2319 = vst [vmem:[#allocation3 + $0x1d8] sm:$0xff] %v2306
        %2320 = vst [vmem:[#allocation3 + $0x1e0] sm:$0xff] %v2307
        %2321 = vst [vmem:[#allocation3 + $0x1e8] sm:$0xff] %v2308
        %2322 = vst.msk [vmem:[#allocation3 + $0x1f0] sm:$0xff] %vm325, %v2302
        %2323 = vrot.lane.b32.xlu0 %v2029, 28
        %v2324 = vpop.permute.xlu0 %2323
        %2325 = vrot.lane.b32.xlu0 %v2030, 28
        %v2326 = vpop.permute.xlu0 %2325
        %2327 = vrot.lane.b32.xlu0 %v2031, 28
        %v2328 = vpop.permute.xlu0 %2327
        %2329 = vrot.lane.b32.xlu0 %v2032, 28
        %v2330 = vpop.permute.xlu0 %2329
        %2331 = vrot.lane.b32.xlu0 %v2033, 28
        %v2332 = vpop.permute.xlu0 %2331
        %2333 = vrot.lane.b32.xlu0 %v2034, 28
        %v2334 = vpop.permute.xlu0 %2333
        %2335 = vrot.lane.b32.xlu0 %v2035, 28
        %v2336 = vpop.permute.xlu0 %2335
        %v2337 = vsel %vm794, %v2324, %v2326
        %v2338 = vsel %vm794, %v2326, %v2328
        %v2339 = vsel %vm794, %v2328, %v2330
        %v2340 = vsel %vm794, %v2330, %v2332
        %v2341 = vsel %vm794, %v2332, %v2334
        %v2342 = vsel %vm794, %v2334, %v2336
        %2350 = vst [vmem:[#allocation3 + $0x1f8] sm:$0xff] %v2337
        %2351 = vst [vmem:[#allocation3 + $0x200] sm:$0xff] %v2338
        %2352 = vst [vmem:[#allocation3 + $0x208] sm:$0xff] %v2339
        %2353 = vst [vmem:[#allocation3 + $0x210] sm:$0xff] %v2340
        %2354 = vst [vmem:[#allocation3 + $0x218] sm:$0xff] %v2341
        %2355 = vst [vmem:[#allocation3 + $0x220] sm:$0xff] %v2342
        %2356 = vst.msk [vmem:[#allocation3 + $0x228] sm:$0xff] %vm325, %v2336
        %2357 = vrot.lane.b32.xlu0 %v2029, 27
        %v2358 = vpop.permute.xlu0 %2357
        %2359 = vrot.lane.b32.xlu0 %v2030, 27
        %v2360 = vpop.permute.xlu0 %2359
        %2361 = vrot.lane.b32.xlu0 %v2031, 27
        %v2362 = vpop.permute.xlu0 %2361
        %2363 = vrot.lane.b32.xlu0 %v2032, 27
        %v2364 = vpop.permute.xlu0 %2363
        %2365 = vrot.lane.b32.xlu0 %v2033, 27
        %v2366 = vpop.permute.xlu0 %2365
        %2367 = vrot.lane.b32.xlu0 %v2034, 27
        %v2368 = vpop.permute.xlu0 %2367
        %2369 = vrot.lane.b32.xlu0 %v2035, 27
        %v2370 = vpop.permute.xlu0 %2369
        %v2371 = vsel %vm829, %v2358, %v2360
        %v2372 = vsel %vm829, %v2360, %v2362
        %v2373 = vsel %vm829, %v2362, %v2364
        %v2374 = vsel %vm829, %v2364, %v2366
        %v2375 = vsel %vm829, %v2366, %v2368
        %v2376 = vsel %vm829, %v2368, %v2370
        %2384 = vst [vmem:[#allocation3 + $0x230] sm:$0xff] %v2371
        %2385 = vst [vmem:[#allocation3 + $0x238] sm:$0xff] %v2372
        %2386 = vst [vmem:[#allocation3 + $0x240] sm:$0xff] %v2373
        %2387 = vst [vmem:[#allocation3 + $0x248] sm:$0xff] %v2374
        %2388 = vst [vmem:[#allocation3 + $0x250] sm:$0xff] %v2375
        %2389 = vst [vmem:[#allocation3 + $0x258] sm:$0xff] %v2376
        %2390 = vst.msk [vmem:[#allocation3 + $0x260] sm:$0xff] %vm325, %v2370
        %2391 = vrot.lane.b32.xlu0 %v2029, 26
        %v2392 = vpop.permute.xlu0 %2391
        %2393 = vrot.lane.b32.xlu0 %v2030, 26
        %v2394 = vpop.permute.xlu0 %2393
        %2395 = vrot.lane.b32.xlu0 %v2031, 26
        %v2396 = vpop.permute.xlu0 %2395
        %2397 = vrot.lane.b32.xlu0 %v2032, 26
        %v2398 = vpop.permute.xlu0 %2397
        %2399 = vrot.lane.b32.xlu0 %v2033, 26
        %v2400 = vpop.permute.xlu0 %2399
        %2401 = vrot.lane.b32.xlu0 %v2034, 26
        %v2402 = vpop.permute.xlu0 %2401
        %2403 = vrot.lane.b32.xlu0 %v2035, 26
        %v2404 = vpop.permute.xlu0 %2403
        %v2405 = vsel %vm864, %v2392, %v2394
        %v2406 = vsel %vm864, %v2394, %v2396
        %v2407 = vsel %vm864, %v2396, %v2398
        %v2408 = vsel %vm864, %v2398, %v2400
        %v2409 = vsel %vm864, %v2400, %v2402
        %v2410 = vsel %vm864, %v2402, %v2404
        %2418 = vst [vmem:[#allocation3 + $0x268] sm:$0xff] %v2405
        %2419 = vst [vmem:[#allocation3 + $0x270] sm:$0xff] %v2406
        %2420 = vst [vmem:[#allocation3 + $0x278] sm:$0xff] %v2407
        %2421 = vst [vmem:[#allocation3 + $0x280] sm:$0xff] %v2408
        %2422 = vst [vmem:[#allocation3 + $0x288] sm:$0xff] %v2409
        %2423 = vst [vmem:[#allocation3 + $0x290] sm:$0xff] %v2410
        %2424 = vst.msk [vmem:[#allocation3 + $0x298] sm:$0xff] %vm325, %v2404
        %2425 = vrot.lane.b32.xlu0 %v2029, 18
        %v2426 = vpop.permute.xlu0 %2425
        %2427 = vrot.lane.b32.xlu0 %v2030, 18
        %v2428 = vpop.permute.xlu0 %2427
        %2429 = vrot.lane.b32.xlu0 %v2031, 18
        %v2430 = vpop.permute.xlu0 %2429
        %2431 = vrot.lane.b32.xlu0 %v2032, 18
        %v2432 = vpop.permute.xlu0 %2431
        %2433 = vrot.lane.b32.xlu0 %v2033, 18
        %v2434 = vpop.permute.xlu0 %2433
        %2435 = vrot.lane.b32.xlu0 %v2034, 18
        %v2436 = vpop.permute.xlu0 %2435
        %2437 = vrot.lane.b32.xlu0 %v2035, 18
        %v2438 = vpop.permute.xlu0 %2437
        %v2439 = vsel %vm899, %v2426, %v2428
        %v2440 = vsel %vm899, %v2428, %v2430
        %v2441 = vsel %vm899, %v2430, %v2432
        %v2442 = vsel %vm899, %v2432, %v2434
        %v2443 = vsel %vm899, %v2434, %v2436
        %v2444 = vsel %vm899, %v2436, %v2438
        %2452 = vst [vmem:[#allocation3 + $0x2a0] sm:$0xff] %v2439
        %2453 = vst [vmem:[#allocation3 + $0x2a8] sm:$0xff] %v2440
        %2454 = vst [vmem:[#allocation3 + $0x2b0] sm:$0xff] %v2441
        %2455 = vst [vmem:[#allocation3 + $0x2b8] sm:$0xff] %v2442
        %2456 = vst [vmem:[#allocation3 + $0x2c0] sm:$0xff] %v2443
        %2457 = vst [vmem:[#allocation3 + $0x2c8] sm:$0xff] %v2444
        %2458 = vst.msk [vmem:[#allocation3 + $0x2d0] sm:$0xff] %vm325, %v2438
        %2459 = vrot.lane.b32.xlu0 %v2029, 17
        %v2460 = vpop.permute.xlu0 %2459
        %2461 = vrot.lane.b32.xlu0 %v2030, 17
        %v2462 = vpop.permute.xlu0 %2461
        %2463 = vrot.lane.b32.xlu0 %v2031, 17
        %v2464 = vpop.permute.xlu0 %2463
        %2465 = vrot.lane.b32.xlu0 %v2032, 17
        %v2466 = vpop.permute.xlu0 %2465
        %2467 = vrot.lane.b32.xlu0 %v2033, 17
        %v2468 = vpop.permute.xlu0 %2467
        %2469 = vrot.lane.b32.xlu0 %v2034, 17
        %v2470 = vpop.permute.xlu0 %2469
        %2471 = vrot.lane.b32.xlu0 %v2035, 17
        %v2472 = vpop.permute.xlu0 %2471
        %v2473 = vsel %vm934, %v2460, %v2462
        %v2474 = vsel %vm934, %v2462, %v2464
        %v2475 = vsel %vm934, %v2464, %v2466
        %v2476 = vsel %vm934, %v2466, %v2468
        %v2477 = vsel %vm934, %v2468, %v2470
        %v2478 = vsel %vm934, %v2470, %v2472
        %2486 = vst [vmem:[#allocation3 + $0x2d8] sm:$0xff] %v2473
        %2487 = vst [vmem:[#allocation3 + $0x2e0] sm:$0xff] %v2474
        %2488 = vst [vmem:[#allocation3 + $0x2e8] sm:$0xff] %v2475
        %2489 = vst [vmem:[#allocation3 + $0x2f0] sm:$0xff] %v2476
        %2490 = vst [vmem:[#allocation3 + $0x2f8] sm:$0xff] %v2477
        %2491 = vst [vmem:[#allocation3 + $0x300] sm:$0xff] %v2478
        %2492 = vst.msk [vmem:[#allocation3 + $0x308] sm:$0xff] %vm325, %v2472
        %2493 = vrot.lane.b32.xlu0 %v2029, 16
        %v2494 = vpop.permute.xlu0 %2493
        %2495 = vrot.lane.b32.xlu0 %v2030, 16
        %v2496 = vpop.permute.xlu0 %2495
        %2497 = vrot.lane.b32.xlu0 %v2031, 16
        %v2498 = vpop.permute.xlu0 %2497
        %2499 = vrot.lane.b32.xlu0 %v2032, 16
        %v2500 = vpop.permute.xlu0 %2499
        %2501 = vrot.lane.b32.xlu0 %v2033, 16
        %v2502 = vpop.permute.xlu0 %2501
        %2503 = vrot.lane.b32.xlu0 %v2034, 16
        %v2504 = vpop.permute.xlu0 %2503
        %2505 = vrot.lane.b32.xlu0 %v2035, 16
        %v2506 = vpop.permute.xlu0 %2505
        %v2507 = vsel %vm969, %v2494, %v2496
        %v2508 = vsel %vm969, %v2496, %v2498
        %v2509 = vsel %vm969, %v2498, %v2500
        %v2510 = vsel %vm969, %v2500, %v2502
        %v2511 = vsel %vm969, %v2502, %v2504
        %v2512 = vsel %vm969, %v2504, %v2506
        %2520 = vst [vmem:[#allocation3 + $0x310] sm:$0xff] %v2507
        %2521 = vst [vmem:[#allocation3 + $0x318] sm:$0xff] %v2508
        %2522 = vst [vmem:[#allocation3 + $0x320] sm:$0xff] %v2509
        %2523 = vst [vmem:[#allocation3 + $0x328] sm:$0xff] %v2510
        %2524 = vst [vmem:[#allocation3 + $0x330] sm:$0xff] %v2511
        %2525 = vst [vmem:[#allocation3 + $0x338] sm:$0xff] %v2512
        %2526 = vst.msk [vmem:[#allocation3 + $0x340] sm:$0xff] %vm325, %v2506
        %2528 = vrot.lane.b32.xlu0 %v2029, 8
        %v2529 = vpop.permute.xlu0 %2528
        %2530 = vrot.lane.b32.xlu0 %v2030, 8
        %v2531 = vpop.permute.xlu0 %2530
        %2532 = vrot.lane.b32.xlu0 %v2031, 8
        %v2533 = vpop.permute.xlu0 %2532
        %2534 = vrot.lane.b32.xlu0 %v2032, 8
        %v2535 = vpop.permute.xlu0 %2534
        %2536 = vrot.lane.b32.xlu0 %v2033, 8
        %v2537 = vpop.permute.xlu0 %2536
        %2538 = vrot.lane.b32.xlu0 %v2034, 8
        %v2539 = vpop.permute.xlu0 %2538
        %2540 = vrot.lane.b32.xlu0 %v2035, 8
        %v2541 = vpop.permute.xlu0 %2540
        %2542 = vrot.lane.b32.xlu0 %v2036, 8
        %v2543 = vpop.permute.xlu0 %2542
        %v2544 = vsel %vm1007, %v2529, %v2531
        %v2545 = vsel %vm1007, %v2531, %v2533
        %v2546 = vsel %vm1007, %v2533, %v2535
        %v2547 = vsel %vm1007, %v2535, %v2537
        %v2548 = vsel %vm1007, %v2537, %v2539
        %v2549 = vsel %vm1007, %v2539, %v2541
        %v2550 = vsel %vm1007, %v2541, %v2543
        %2558 = vst [vmem:[#allocation3 + $0x348] sm:$0xff] %v2544
        %2559 = vst [vmem:[#allocation3 + $0x350] sm:$0xff] %v2545
        %2560 = vst [vmem:[#allocation3 + $0x358] sm:$0xff] %v2546
        %2561 = vst [vmem:[#allocation3 + $0x360] sm:$0xff] %v2547
        %2562 = vst [vmem:[#allocation3 + $0x368] sm:$0xff] %v2548
        %2563 = vst [vmem:[#allocation3 + $0x370] sm:$0xff] %v2549
        %2564 = vst.msk [vmem:[#allocation3 + $0x378] sm:$0xff] %vm325, %v2550
        %2565 = vrot.lane.b32.xlu0 %v2029, 7
        %v2566 = vpop.permute.xlu0 %2565
        %2567 = vrot.lane.b32.xlu0 %v2030, 7
        %v2568 = vpop.permute.xlu0 %2567
        %2569 = vrot.lane.b32.xlu0 %v2031, 7
        %v2570 = vpop.permute.xlu0 %2569
        %2571 = vrot.lane.b32.xlu0 %v2032, 7
        %v2572 = vpop.permute.xlu0 %2571
        %2573 = vrot.lane.b32.xlu0 %v2033, 7
        %v2574 = vpop.permute.xlu0 %2573
        %2575 = vrot.lane.b32.xlu0 %v2034, 7
        %v2576 = vpop.permute.xlu0 %2575
        %2577 = vrot.lane.b32.xlu0 %v2035, 7
        %v2578 = vpop.permute.xlu0 %2577
        %2579 = vrot.lane.b32.xlu0 %v2036, 7
        %v2580 = vpop.permute.xlu0 %2579
        %v2581 = vsel %vm1045, %v2566, %v2568
        %v2582 = vsel %vm1045, %v2568, %v2570
        %v2583 = vsel %vm1045, %v2570, %v2572
        %v2584 = vsel %vm1045, %v2572, %v2574
        %v2585 = vsel %vm1045, %v2574, %v2576
        %v2586 = vsel %vm1045, %v2576, %v2578
        %v2587 = vsel %vm1045, %v2578, %v2580
        %2595 = vst [vmem:[#allocation3 + $0x380] sm:$0xff] %v2581
        %2596 = vst [vmem:[#allocation3 + $0x388] sm:$0xff] %v2582
        %2597 = vst [vmem:[#allocation3 + $0x390] sm:$0xff] %v2583
        %2598 = vst [vmem:[#allocation3 + $0x398] sm:$0xff] %v2584
        %2599 = vst [vmem:[#allocation3 + $0x3a0] sm:$0xff] %v2585
        %2600 = vst [vmem:[#allocation3 + $0x3a8] sm:$0xff] %v2586
        %2601 = vst.msk [vmem:[#allocation3 + $0x3b0] sm:$0xff] %vm325, %v2587
        %2602 = vrot.lane.b32.xlu0 %v2029, 6
        %v2603 = vpop.permute.xlu0 %2602
        %2604 = vrot.lane.b32.xlu0 %v2030, 6
        %v2605 = vpop.permute.xlu0 %2604
        %2606 = vrot.lane.b32.xlu0 %v2031, 6
        %v2607 = vpop.permute.xlu0 %2606
        %2608 = vrot.lane.b32.xlu0 %v2032, 6
        %v2609 = vpop.permute.xlu0 %2608
        %2610 = vrot.lane.b32.xlu0 %v2033, 6
        %v2611 = vpop.permute.xlu0 %2610
        %2612 = vrot.lane.b32.xlu0 %v2034, 6
        %v2613 = vpop.permute.xlu0 %2612
        %2614 = vrot.lane.b32.xlu0 %v2035, 6
        %v2615 = vpop.permute.xlu0 %2614
        %2616 = vrot.lane.b32.xlu0 %v2036, 6
        %v2617 = vpop.permute.xlu0 %2616
        %v2618 = vsel %vm1083, %v2603, %v2605
        %v2619 = vsel %vm1083, %v2605, %v2607
        %v2620 = vsel %vm1083, %v2607, %v2609
        %v2621 = vsel %vm1083, %v2609, %v2611
        %v2622 = vsel %vm1083, %v2611, %v2613
        %v2623 = vsel %vm1083, %v2613, %v2615
        %v2624 = vsel %vm1083, %v2615, %v2617
        %2632 = vst [vmem:[#allocation3 + $0x3b8] sm:$0xff] %v2618
        %2633 = vst [vmem:[#allocation3 + $0x3c0] sm:$0xff] %v2619
        %2634 = vst [vmem:[#allocation3 + $0x3c8] sm:$0xff] %v2620
        %2635 = vst [vmem:[#allocation3 + $0x3d0] sm:$0xff] %v2621
        %2636 = vst [vmem:[#allocation3 + $0x3d8] sm:$0xff] %v2622
        %2637 = vst [vmem:[#allocation3 + $0x3e0] sm:$0xff] %v2623
        %2638 = vst.msk [vmem:[#allocation3 + $0x3e8] sm:$0xff] %vm325, %v2624
        %2639 = vrot.lane.b32.xlu0 %v2030, 56
        %v2640 = vpop.permute.xlu0 %2639
        %2641 = vrot.lane.b32.xlu0 %v2031, 56
        %v2642 = vpop.permute.xlu0 %2641
        %2643 = vrot.lane.b32.xlu0 %v2032, 56
        %v2644 = vpop.permute.xlu0 %2643
        %2645 = vrot.lane.b32.xlu0 %v2033, 56
        %v2646 = vpop.permute.xlu0 %2645
        %2647 = vrot.lane.b32.xlu0 %v2034, 56
        %v2648 = vpop.permute.xlu0 %2647
        %2649 = vrot.lane.b32.xlu0 %v2035, 56
        %v2650 = vpop.permute.xlu0 %2649
        %2651 = vrot.lane.b32.xlu0 %v2036, 56
        %v2652 = vpop.permute.xlu0 %2651
        %v2653 = vsel %vm1119, %v2640, %v2642
        %v2654 = vsel %vm1119, %v2642, %v2644
        %v2655 = vsel %vm1119, %v2644, %v2646
        %v2656 = vsel %vm1119, %v2646, %v2648
        %v2657 = vsel %vm1119, %v2648, %v2650
        %v2658 = vsel %vm1119, %v2650, %v2652
        %2666 = vst [vmem:[#allocation3 + $0x3f0] sm:$0xff] %v2653
        %2667 = vst [vmem:[#allocation3 + $0x3f8] sm:$0xff] %v2654
        %2668 = vst [vmem:[#allocation3 + $0x400] sm:$0xff] %v2655
        %2669 = vst [vmem:[#allocation3 + $0x408] sm:$0xff] %v2656
        %2670 = vst [vmem:[#allocation3 + $0x410] sm:$0xff] %v2657
        %2671 = vst [vmem:[#allocation3 + $0x418] sm:$0xff] %v2658
        %2672 = vst.msk [vmem:[#allocation3 + $0x420] sm:$0xff] %vm325, %v2652
        %2673 = vrot.lane.b32.xlu0 %v2030, 55
        %v2674 = vpop.permute.xlu0 %2673
        %2675 = vrot.lane.b32.xlu0 %v2031, 55
        %v2676 = vpop.permute.xlu0 %2675
        %2677 = vrot.lane.b32.xlu0 %v2032, 55
        %v2678 = vpop.permute.xlu0 %2677
        %2679 = vrot.lane.b32.xlu0 %v2033, 55
        %v2680 = vpop.permute.xlu0 %2679
        %2681 = vrot.lane.b32.xlu0 %v2034, 55
        %v2682 = vpop.permute.xlu0 %2681
        %2683 = vrot.lane.b32.xlu0 %v2035, 55
        %v2684 = vpop.permute.xlu0 %2683
        %2685 = vrot.lane.b32.xlu0 %v2036, 55
        %v2686 = vpop.permute.xlu0 %2685
        %v2687 = vsel %vm1154, %v2674, %v2676
        %v2688 = vsel %vm1154, %v2676, %v2678
        %v2689 = vsel %vm1154, %v2678, %v2680
        %v2690 = vsel %vm1154, %v2680, %v2682
        %v2691 = vsel %vm1154, %v2682, %v2684
        %v2692 = vsel %vm1154, %v2684, %v2686
        %2700 = vst [vmem:[#allocation3 + $0x428] sm:$0xff] %v2687
        %2701 = vst [vmem:[#allocation3 + $0x430] sm:$0xff] %v2688
        %2702 = vst [vmem:[#allocation3 + $0x438] sm:$0xff] %v2689
        %2703 = vst [vmem:[#allocation3 + $0x440] sm:$0xff] %v2690
        %2704 = vst [vmem:[#allocation3 + $0x448] sm:$0xff] %v2691
        %2705 = vst [vmem:[#allocation3 + $0x450] sm:$0xff] %v2692
        %2706 = vst.msk [vmem:[#allocation3 + $0x458] sm:$0xff] %vm325, %v2686
        %2707 = vrot.lane.b32.xlu0 %v2030, 54
        %v2708 = vpop.permute.xlu0 %2707
        %2709 = vrot.lane.b32.xlu0 %v2031, 54
        %v2710 = vpop.permute.xlu0 %2709
        %2711 = vrot.lane.b32.xlu0 %v2032, 54
        %v2712 = vpop.permute.xlu0 %2711
        %2713 = vrot.lane.b32.xlu0 %v2033, 54
        %v2714 = vpop.permute.xlu0 %2713
        %2715 = vrot.lane.b32.xlu0 %v2034, 54
        %v2716 = vpop.permute.xlu0 %2715
        %2717 = vrot.lane.b32.xlu0 %v2035, 54
        %v2718 = vpop.permute.xlu0 %2717
        %2719 = vrot.lane.b32.xlu0 %v2036, 54
        %v2720 = vpop.permute.xlu0 %2719
        %v2721 = vsel %vm1189, %v2708, %v2710
        %v2722 = vsel %vm1189, %v2710, %v2712
        %v2723 = vsel %vm1189, %v2712, %v2714
        %v2724 = vsel %vm1189, %v2714, %v2716
        %v2725 = vsel %vm1189, %v2716, %v2718
        %v2726 = vsel %vm1189, %v2718, %v2720
        %2734 = vst [vmem:[#allocation3 + $0x460] sm:$0xff] %v2721
        %2735 = vst [vmem:[#allocation3 + $0x468] sm:$0xff] %v2722
        %2736 = vst [vmem:[#allocation3 + $0x470] sm:$0xff] %v2723
        %2737 = vst [vmem:[#allocation3 + $0x478] sm:$0xff] %v2724
        %2738 = vst [vmem:[#allocation3 + $0x480] sm:$0xff] %v2725
        %2739 = vst [vmem:[#allocation3 + $0x488] sm:$0xff] %v2726
        %2740 = vst.msk [vmem:[#allocation3 + $0x490] sm:$0xff] %vm325, %v2720
        %2741 = vrot.lane.b32.xlu0 %v2030, 46
        %v2742 = vpop.permute.xlu0 %2741
        %2743 = vrot.lane.b32.xlu0 %v2031, 46
        %v2744 = vpop.permute.xlu0 %2743
        %2745 = vrot.lane.b32.xlu0 %v2032, 46
        %v2746 = vpop.permute.xlu0 %2745
        %2747 = vrot.lane.b32.xlu0 %v2033, 46
        %v2748 = vpop.permute.xlu0 %2747
        %2749 = vrot.lane.b32.xlu0 %v2034, 46
        %v2750 = vpop.permute.xlu0 %2749
        %2751 = vrot.lane.b32.xlu0 %v2035, 46
        %v2752 = vpop.permute.xlu0 %2751
        %2753 = vrot.lane.b32.xlu0 %v2036, 46
        %v2754 = vpop.permute.xlu0 %2753
        %v2755 = vsel %vm1224, %v2742, %v2744
        %v2756 = vsel %vm1224, %v2744, %v2746
        %v2757 = vsel %vm1224, %v2746, %v2748
        %v2758 = vsel %vm1224, %v2748, %v2750
        %v2759 = vsel %vm1224, %v2750, %v2752
        %v2760 = vsel %vm1224, %v2752, %v2754
        %2768 = vst [vmem:[#allocation3 + $0x498] sm:$0xff] %v2755
        %2769 = vst [vmem:[#allocation3 + $0x4a0] sm:$0xff] %v2756
        %2770 = vst [vmem:[#allocation3 + $0x4a8] sm:$0xff] %v2757
        %2771 = vst [vmem:[#allocation3 + $0x4b0] sm:$0xff] %v2758
        %2772 = vst [vmem:[#allocation3 + $0x4b8] sm:$0xff] %v2759
        %2773 = vst [vmem:[#allocation3 + $0x4c0] sm:$0xff] %v2760
        %2774 = vst.msk [vmem:[#allocation3 + $0x4c8] sm:$0xff] %vm325, %v2754
        %2775 = vrot.lane.b32.xlu0 %v2030, 45
        %v2776 = vpop.permute.xlu0 %2775
        %2777 = vrot.lane.b32.xlu0 %v2031, 45
        %v2778 = vpop.permute.xlu0 %2777
        %2779 = vrot.lane.b32.xlu0 %v2032, 45
        %v2780 = vpop.permute.xlu0 %2779
        %2781 = vrot.lane.b32.xlu0 %v2033, 45
        %v2782 = vpop.permute.xlu0 %2781
        %2783 = vrot.lane.b32.xlu0 %v2034, 45
        %v2784 = vpop.permute.xlu0 %2783
        %2785 = vrot.lane.b32.xlu0 %v2035, 45
        %v2786 = vpop.permute.xlu0 %2785
        %2787 = vrot.lane.b32.xlu0 %v2036, 45
        %v2788 = vpop.permute.xlu0 %2787
        %v2789 = vsel %vm1259, %v2776, %v2778
        %v2790 = vsel %vm1259, %v2778, %v2780
        %v2791 = vsel %vm1259, %v2780, %v2782
        %v2792 = vsel %vm1259, %v2782, %v2784
        %v2793 = vsel %vm1259, %v2784, %v2786
        %v2794 = vsel %vm1259, %v2786, %v2788
        %2802 = vst [vmem:[#allocation3 + $0x4d0] sm:$0xff] %v2789
        %2803 = vst [vmem:[#allocation3 + $0x4d8] sm:$0xff] %v2790
        %2804 = vst [vmem:[#allocation3 + $0x4e0] sm:$0xff] %v2791
        %2805 = vst [vmem:[#allocation3 + $0x4e8] sm:$0xff] %v2792
        %2806 = vst [vmem:[#allocation3 + $0x4f0] sm:$0xff] %v2793
        %2807 = vst [vmem:[#allocation3 + $0x4f8] sm:$0xff] %v2794
        %2808 = vst.msk [vmem:[#allocation3 + $0x500] sm:$0xff] %vm325, %v2788
        %2809 = vrot.lane.b32.xlu0 %v2030, 44
        %v2810 = vpop.permute.xlu0 %2809
        %2811 = vrot.lane.b32.xlu0 %v2031, 44
        %v2812 = vpop.permute.xlu0 %2811
        %2813 = vrot.lane.b32.xlu0 %v2032, 44
        %v2814 = vpop.permute.xlu0 %2813
        %2815 = vrot.lane.b32.xlu0 %v2033, 44
        %v2816 = vpop.permute.xlu0 %2815
        %2817 = vrot.lane.b32.xlu0 %v2034, 44
        %v2818 = vpop.permute.xlu0 %2817
        %2819 = vrot.lane.b32.xlu0 %v2035, 44
        %v2820 = vpop.permute.xlu0 %2819
        %2821 = vrot.lane.b32.xlu0 %v2036, 44
        %v2822 = vpop.permute.xlu0 %2821
        %v2823 = vsel %vm1294, %v2810, %v2812
        %v2824 = vsel %vm1294, %v2812, %v2814
        %v2825 = vsel %vm1294, %v2814, %v2816
        %v2826 = vsel %vm1294, %v2816, %v2818
        %v2827 = vsel %vm1294, %v2818, %v2820
        %v2828 = vsel %vm1294, %v2820, %v2822
        %2836 = vst [vmem:[#allocation3 + $0x508] sm:$0xff] %v2823
        %2837 = vst [vmem:[#allocation3 + $0x510] sm:$0xff] %v2824
        %2838 = vst [vmem:[#allocation3 + $0x518] sm:$0xff] %v2825
        %2839 = vst [vmem:[#allocation3 + $0x520] sm:$0xff] %v2826
        %2840 = vst [vmem:[#allocation3 + $0x528] sm:$0xff] %v2827
        %2841 = vst [vmem:[#allocation3 + $0x530] sm:$0xff] %v2828
        %2842 = vst.msk [vmem:[#allocation3 + $0x538] sm:$0xff] %vm325, %v2822
        %2843 = vrot.lane.b32.xlu0 %v2030, 36
        %v2844 = vpop.permute.xlu0 %2843
        %2845 = vrot.lane.b32.xlu0 %v2031, 36
        %v2846 = vpop.permute.xlu0 %2845
        %2847 = vrot.lane.b32.xlu0 %v2032, 36
        %v2848 = vpop.permute.xlu0 %2847
        %2849 = vrot.lane.b32.xlu0 %v2033, 36
        %v2850 = vpop.permute.xlu0 %2849
        %2851 = vrot.lane.b32.xlu0 %v2034, 36
        %v2852 = vpop.permute.xlu0 %2851
        %2853 = vrot.lane.b32.xlu0 %v2035, 36
        %v2854 = vpop.permute.xlu0 %2853
        %2855 = vrot.lane.b32.xlu0 %v2036, 36
        %v2856 = vpop.permute.xlu0 %2855
        %v2857 = vsel %vm1329, %v2844, %v2846
        %v2858 = vsel %vm1329, %v2846, %v2848
        %v2859 = vsel %vm1329, %v2848, %v2850
        %v2860 = vsel %vm1329, %v2850, %v2852
        %v2861 = vsel %vm1329, %v2852, %v2854
        %v2862 = vsel %vm1329, %v2854, %v2856
        %2870 = vst [vmem:[#allocation3 + $0x540] sm:$0xff] %v2857
        %2871 = vst [vmem:[#allocation3 + $0x548] sm:$0xff] %v2858
        %2872 = vst [vmem:[#allocation3 + $0x550] sm:$0xff] %v2859
        %2873 = vst [vmem:[#allocation3 + $0x558] sm:$0xff] %v2860
        %2874 = vst [vmem:[#allocation3 + $0x560] sm:$0xff] %v2861
        %2875 = vst [vmem:[#allocation3 + $0x568] sm:$0xff] %v2862
        %2876 = vst.msk [vmem:[#allocation3 + $0x570] sm:$0xff] %vm325, %v2856
        %2877 = vrot.lane.b32.xlu0 %v2030, 35
        %v2878 = vpop.permute.xlu0 %2877
        %2879 = vrot.lane.b32.xlu0 %v2031, 35
        %v2880 = vpop.permute.xlu0 %2879
        %2881 = vrot.lane.b32.xlu0 %v2032, 35
        %v2882 = vpop.permute.xlu0 %2881
        %2883 = vrot.lane.b32.xlu0 %v2033, 35
        %v2884 = vpop.permute.xlu0 %2883
        %2885 = vrot.lane.b32.xlu0 %v2034, 35
        %v2886 = vpop.permute.xlu0 %2885
        %2887 = vrot.lane.b32.xlu0 %v2035, 35
        %v2888 = vpop.permute.xlu0 %2887
        %2889 = vrot.lane.b32.xlu0 %v2036, 35
        %v2890 = vpop.permute.xlu0 %2889
        %v2891 = vsel %vm1364, %v2878, %v2880
        %v2892 = vsel %vm1364, %v2880, %v2882
        %v2893 = vsel %vm1364, %v2882, %v2884
        %v2894 = vsel %vm1364, %v2884, %v2886
        %v2895 = vsel %vm1364, %v2886, %v2888
        %v2896 = vsel %vm1364, %v2888, %v2890
        %2904 = vst [vmem:[#allocation3 + $0x578] sm:$0xff] %v2891
        %2905 = vst [vmem:[#allocation3 + $0x580] sm:$0xff] %v2892
        %2906 = vst [vmem:[#allocation3 + $0x588] sm:$0xff] %v2893
        %2907 = vst [vmem:[#allocation3 + $0x590] sm:$0xff] %v2894
        %2908 = vst [vmem:[#allocation3 + $0x598] sm:$0xff] %v2895
        %2909 = vst [vmem:[#allocation3 + $0x5a0] sm:$0xff] %v2896
        %2910 = vst.msk [vmem:[#allocation3 + $0x5a8] sm:$0xff] %vm325, %v2890
        %2911 = vrot.lane.b32.xlu0 %v2030, 34
        %v2912 = vpop.permute.xlu0 %2911
        %2913 = vrot.lane.b32.xlu0 %v2031, 34
        %v2914 = vpop.permute.xlu0 %2913
        %2915 = vrot.lane.b32.xlu0 %v2032, 34
        %v2916 = vpop.permute.xlu0 %2915
        %2917 = vrot.lane.b32.xlu0 %v2033, 34
        %v2918 = vpop.permute.xlu0 %2917
        %2919 = vrot.lane.b32.xlu0 %v2034, 34
        %v2920 = vpop.permute.xlu0 %2919
        %2921 = vrot.lane.b32.xlu0 %v2035, 34
        %v2922 = vpop.permute.xlu0 %2921
        %2923 = vrot.lane.b32.xlu0 %v2036, 34
        %v2924 = vpop.permute.xlu0 %2923
        %v2925 = vsel %vm1399, %v2912, %v2914
        %v2926 = vsel %vm1399, %v2914, %v2916
        %v2927 = vsel %vm1399, %v2916, %v2918
        %v2928 = vsel %vm1399, %v2918, %v2920
        %v2929 = vsel %vm1399, %v2920, %v2922
        %v2930 = vsel %vm1399, %v2922, %v2924
        %2938 = vst [vmem:[#allocation3 + $0x5b0] sm:$0xff] %v2925
        %2939 = vst [vmem:[#allocation3 + $0x5b8] sm:$0xff] %v2926
        %2940 = vst [vmem:[#allocation3 + $0x5c0] sm:$0xff] %v2927
        %2941 = vst [vmem:[#allocation3 + $0x5c8] sm:$0xff] %v2928
        %2942 = vst [vmem:[#allocation3 + $0x5d0] sm:$0xff] %v2929
        %2943 = vst [vmem:[#allocation3 + $0x5d8] sm:$0xff] %v2930
        %2944 = vst.msk [vmem:[#allocation3 + $0x5e0] sm:$0xff] %vm325, %v2924
        %v2945 = vld [vmem:[%s3] sm:$0xff]
        %v2946 = vld [vmem:[#allocation3] sm:$0xff]
        %v2947 = vld [vmem:[#allocation3 + $0x8] sm:$0xff]
        %v2948 = vld [vmem:[#allocation3 + $0x10] sm:$0xff]
        %v2949 = vld [vmem:[#allocation3 + $0x18] sm:$0xff]
        %v2950 = vld [vmem:[#allocation3 + $0x20] sm:$0xff]
        %v2951 = vld [vmem:[#allocation3 + $0x28] sm:$0xff]
        %v2952 = vld [vmem:[#allocation3 + $0x30] sm:$0xff]
        %v2953 = vld [vmem:[#allocation3 + $0x38] sm:$0xff]
        %v2954 = vld [vmem:[#allocation3 + $0x40] sm:$0xff]
        %v2955 = vld [vmem:[#allocation3 + $0x48] sm:$0xff]
        %v2956 = vld [vmem:[#allocation3 + $0x50] sm:$0xff]
        %v2957 = vld [vmem:[#allocation3 + $0x58] sm:$0xff]
        %v2958 = vld [vmem:[#allocation3 + $0x60] sm:$0xff]
        %v2959 = vld [vmem:[#allocation3 + $0x68] sm:$0xff]
        %v2960 = vld [vmem:[#allocation3 + $0x70] sm:$0xff]
        %v2961 = vld [vmem:[#allocation3 + $0x78] sm:$0xff]
        %v2962 = vld [vmem:[#allocation3 + $0x80] sm:$0xff]
        %v2963 = vld [vmem:[#allocation3 + $0x88] sm:$0xff]
        %v2964 = vld [vmem:[#allocation3 + $0x90] sm:$0xff]
        %v2965 = vld [vmem:[#allocation3 + $0x98] sm:$0xff]
        %v2966 = vld [vmem:[#allocation3 + $0xa0] sm:$0xff]
        %v2967 = vld [vmem:[#allocation3 + $0xa8] sm:$0xff]
        %v2968 = vld [vmem:[#allocation3 + $0xb0] sm:$0xff]
        %v2969 = vld [vmem:[#allocation3 + $0xb8] sm:$0xff]
        %v2970 = vld [vmem:[#allocation3 + $0xc0] sm:$0xff]
        %v2971 = vld [vmem:[#allocation3 + $0xc8] sm:$0xff]
        %v2972 = vld [vmem:[#allocation3 + $0xd0] sm:$0xff]
        %v2973 = vld [vmem:[#allocation3 + $0xd8] sm:$0xff]
        %v2974 = vld [vmem:[#allocation3 + $0xe0] sm:$0xff]
        %v2975 = vld [vmem:[#allocation3 + $0xe8] sm:$0xff]
        %v2976 = vld [vmem:[#allocation3 + $0xf0] sm:$0xff]
        %v2977 = vld [vmem:[#allocation3 + $0xf8] sm:$0xff]
        %v2978 = vld [vmem:[#allocation3 + $0x100] sm:$0xff]
        %v2979 = vld [vmem:[#allocation3 + $0x108] sm:$0xff]
        %v2980 = vld [vmem:[#allocation3 + $0x110] sm:$0xff]
        %v2981 = vld [vmem:[#allocation3 + $0x118] sm:$0xff]
        %v2982 = vld [vmem:[#allocation3 + $0x120] sm:$0xff]
        %v2983 = vld [vmem:[#allocation3 + $0x128] sm:$0xff]
        %v2984 = vld [vmem:[#allocation3 + $0x130] sm:$0xff]
        %v2985 = vld [vmem:[#allocation3 + $0x138] sm:$0xff]
        %v2986 = vld [vmem:[#allocation3 + $0x140] sm:$0xff]
        %v2987 = vld [vmem:[#allocation3 + $0x148] sm:$0xff]
        %v2988 = vld [vmem:[#allocation3 + $0x150] sm:$0xff]
        %v2989 = vld [vmem:[#allocation3 + $0x158] sm:$0xff]
        %v2990 = vld [vmem:[#allocation3 + $0x160] sm:$0xff]
        %v2991 = vld [vmem:[#allocation3 + $0x168] sm:$0xff]
        %v2992 = vld [vmem:[#allocation3 + $0x170] sm:$0xff]
        %v2993 = vld [vmem:[#allocation3 + $0x178] sm:$0xff]
        %v2994 = vld [vmem:[#allocation3 + $0x180] sm:$0xff]
        %v2995 = vld [vmem:[#allocation3 + $0x188] sm:$0xff]
        %v2996 = vld [vmem:[#allocation3 + $0x190] sm:$0xff]
        %v2997 = vld [vmem:[#allocation3 + $0x198] sm:$0xff]
        %v2998 = vld [vmem:[#allocation3 + $0x1a0] sm:$0xff]
        %v2999 = vld [vmem:[#allocation3 + $0x1a8] sm:$0xff]
        %v3000 = vld [vmem:[#allocation3 + $0x1b0] sm:$0xff]
        %v3001 = vld [vmem:[#allocation3 + $0x1b8] sm:$0xff]
        %v3002 = vld [vmem:[#allocation3 + $0x1c0] sm:$0xff]
        %v3003 = vld [vmem:[#allocation3 + $0x1c8] sm:$0xff]
        %v3004 = vld [vmem:[#allocation3 + $0x1d0] sm:$0xff]
        %v3005 = vld [vmem:[#allocation3 + $0x1d8] sm:$0xff]
        %v3006 = vld [vmem:[#allocation3 + $0x1e0] sm:$0xff]
        %v3007 = vld [vmem:[#allocation3 + $0x1e8] sm:$0xff]
        %v3008 = vld [vmem:[#allocation3 + $0x1f0] sm:$0xff]
        %v3009 = vld [vmem:[#allocation3 + $0x1f8] sm:$0xff]
        %v3010 = vld [vmem:[#allocation3 + $0x200] sm:$0xff]
        %v3011 = vld [vmem:[#allocation3 + $0x208] sm:$0xff]
        %v3012 = vld [vmem:[#allocation3 + $0x210] sm:$0xff]
        %v3013 = vld [vmem:[#allocation3 + $0x218] sm:$0xff]
        %v3014 = vld [vmem:[#allocation3 + $0x220] sm:$0xff]
        %v3015 = vld [vmem:[#allocation3 + $0x228] sm:$0xff]
        %v3016 = vld [vmem:[#allocation3 + $0x230] sm:$0xff]
        %v3017 = vld [vmem:[#allocation3 + $0x238] sm:$0xff]
        %v3018 = vld [vmem:[#allocation3 + $0x240] sm:$0xff]
        %v3019 = vld [vmem:[#allocation3 + $0x248] sm:$0xff]
        %v3020 = vld [vmem:[#allocation3 + $0x250] sm:$0xff]
        %v3021 = vld [vmem:[#allocation3 + $0x258] sm:$0xff]
        %v3022 = vld [vmem:[#allocation3 + $0x260] sm:$0xff]
        %v3023 = vld [vmem:[#allocation3 + $0x268] sm:$0xff]
        %v3024 = vld [vmem:[#allocation3 + $0x270] sm:$0xff]
        %v3025 = vld [vmem:[#allocation3 + $0x278] sm:$0xff]
        %v3026 = vld [vmem:[#allocation3 + $0x280] sm:$0xff]
        %v3027 = vld [vmem:[#allocation3 + $0x288] sm:$0xff]
        %v3028 = vld [vmem:[#allocation3 + $0x290] sm:$0xff]
        %v3029 = vld [vmem:[#allocation3 + $0x298] sm:$0xff]
        %v3030 = vld [vmem:[#allocation3 + $0x2a0] sm:$0xff]
        %v3031 = vld [vmem:[#allocation3 + $0x2a8] sm:$0xff]
        %v3032 = vld [vmem:[#allocation3 + $0x2b0] sm:$0xff]
        %v3033 = vld [vmem:[#allocation3 + $0x2b8] sm:$0xff]
        %v3034 = vld [vmem:[#allocation3 + $0x2c0] sm:$0xff]
        %v3035 = vld [vmem:[#allocation3 + $0x2c8] sm:$0xff]
        %v3036 = vld [vmem:[#allocation3 + $0x2d0] sm:$0xff]
        %v3037 = vld [vmem:[#allocation3 + $0x2d8] sm:$0xff]
        %v3038 = vld [vmem:[#allocation3 + $0x2e0] sm:$0xff]
        %v3039 = vld [vmem:[#allocation3 + $0x2e8] sm:$0xff]
        %v3040 = vld [vmem:[#allocation3 + $0x2f0] sm:$0xff]
        %v3041 = vld [vmem:[#allocation3 + $0x2f8] sm:$0xff]
        %v3042 = vld [vmem:[#allocation3 + $0x300] sm:$0xff]
        %v3043 = vld [vmem:[#allocation3 + $0x308] sm:$0xff]
        %v3044 = vld [vmem:[#allocation3 + $0x310] sm:$0xff]
        %v3045 = vld [vmem:[#allocation3 + $0x318] sm:$0xff]
        %v3046 = vld [vmem:[#allocation3 + $0x320] sm:$0xff]
        %v3047 = vld [vmem:[#allocation3 + $0x328] sm:$0xff]
        %v3048 = vld [vmem:[#allocation3 + $0x330] sm:$0xff]
        %v3049 = vld [vmem:[#allocation3 + $0x338] sm:$0xff]
        %v3050 = vld [vmem:[#allocation3 + $0x340] sm:$0xff]
        %v3051 = vld [vmem:[#allocation3 + $0x348] sm:$0xff]
        %v3052 = vld [vmem:[#allocation3 + $0x350] sm:$0xff]
        %v3053 = vld [vmem:[#allocation3 + $0x358] sm:$0xff]
        %v3054 = vld [vmem:[#allocation3 + $0x360] sm:$0xff]
        %v3055 = vld [vmem:[#allocation3 + $0x368] sm:$0xff]
        %v3056 = vld [vmem:[#allocation3 + $0x370] sm:$0xff]
        %v3057 = vld [vmem:[#allocation3 + $0x378] sm:$0xff]
        %v3058 = vld [vmem:[#allocation3 + $0x380] sm:$0xff]
        %v3059 = vld [vmem:[#allocation3 + $0x388] sm:$0xff]
        %v3060 = vld [vmem:[#allocation3 + $0x390] sm:$0xff]
        %v3061 = vld [vmem:[#allocation3 + $0x398] sm:$0xff]
        %v3062 = vld [vmem:[#allocation3 + $0x3a0] sm:$0xff]
        %v3063 = vld [vmem:[#allocation3 + $0x3a8] sm:$0xff]
        %v3064 = vld [vmem:[#allocation3 + $0x3b0] sm:$0xff]
        %v3065 = vld [vmem:[#allocation3 + $0x3b8] sm:$0xff]
        %v3066 = vld [vmem:[#allocation3 + $0x3c0] sm:$0xff]
        %v3067 = vld [vmem:[#allocation3 + $0x3c8] sm:$0xff]
        %v3068 = vld [vmem:[#allocation3 + $0x3d0] sm:$0xff]
        %v3069 = vld [vmem:[#allocation3 + $0x3d8] sm:$0xff]
        %v3070 = vld [vmem:[#allocation3 + $0x3e0] sm:$0xff]
        %v3071 = vld [vmem:[#allocation3 + $0x3e8] sm:$0xff]
        %v3072 = vld [vmem:[#allocation3 + $0x3f0] sm:$0xff]
        %v3073 = vld [vmem:[#allocation3 + $0x3f8] sm:$0xff]
        %v3074 = vld [vmem:[#allocation3 + $0x400] sm:$0xff]
        %v3075 = vld [vmem:[#allocation3 + $0x408] sm:$0xff]
        %v3076 = vld [vmem:[#allocation3 + $0x410] sm:$0xff]
        %v3077 = vld [vmem:[#allocation3 + $0x418] sm:$0xff]
        %v3078 = vld [vmem:[#allocation3 + $0x420] sm:$0xff]
        %v3079 = vld [vmem:[#allocation3 + $0x428] sm:$0xff]
        %v3080 = vld [vmem:[#allocation3 + $0x430] sm:$0xff]
        %v3081 = vld [vmem:[#allocation3 + $0x438] sm:$0xff]
        %v3082 = vld [vmem:[#allocation3 + $0x440] sm:$0xff]
        %v3083 = vld [vmem:[#allocation3 + $0x448] sm:$0xff]
        %v3084 = vld [vmem:[#allocation3 + $0x450] sm:$0xff]
        %v3085 = vld [vmem:[#allocation3 + $0x458] sm:$0xff]
        %v3086 = vld [vmem:[#allocation3 + $0x460] sm:$0xff]
        %v3087 = vld [vmem:[#allocation3 + $0x468] sm:$0xff]
        %v3088 = vld [vmem:[#allocation3 + $0x470] sm:$0xff]
        %v3089 = vld [vmem:[#allocation3 + $0x478] sm:$0xff]
        %v3090 = vld [vmem:[#allocation3 + $0x480] sm:$0xff]
        %v3091 = vld [vmem:[#allocation3 + $0x488] sm:$0xff]
        %v3092 = vld [vmem:[#allocation3 + $0x490] sm:$0xff]
        %v3093 = vld [vmem:[#allocation3 + $0x498] sm:$0xff]
        %v3094 = vld [vmem:[#allocation3 + $0x4a0] sm:$0xff]
        %v3095 = vld [vmem:[#allocation3 + $0x4a8] sm:$0xff]
        %v3096 = vld [vmem:[#allocation3 + $0x4b0] sm:$0xff]
        %v3097 = vld [vmem:[#allocation3 + $0x4b8] sm:$0xff]
        %v3098 = vld [vmem:[#allocation3 + $0x4c0] sm:$0xff]
        %v3099 = vld [vmem:[#allocation3 + $0x4c8] sm:$0xff]
        %v3100 = vld [vmem:[#allocation3 + $0x4d0] sm:$0xff]
        %v3101 = vld [vmem:[#allocation3 + $0x4d8] sm:$0xff]
        %v3102 = vld [vmem:[#allocation3 + $0x4e0] sm:$0xff]
        %v3103 = vld [vmem:[#allocation3 + $0x4e8] sm:$0xff]
        %v3104 = vld [vmem:[#allocation3 + $0x4f0] sm:$0xff]
        %v3105 = vld [vmem:[#allocation3 + $0x4f8] sm:$0xff]
        %v3106 = vld [vmem:[#allocation3 + $0x500] sm:$0xff]
        %v3107 = vld [vmem:[#allocation3 + $0x508] sm:$0xff]
        %v3108 = vld [vmem:[#allocation3 + $0x510] sm:$0xff]
        %v3109 = vld [vmem:[#allocation3 + $0x518] sm:$0xff]
        %v3110 = vld [vmem:[#allocation3 + $0x520] sm:$0xff]
        %v3111 = vld [vmem:[#allocation3 + $0x528] sm:$0xff]
        %v3112 = vld [vmem:[#allocation3 + $0x530] sm:$0xff]
        %v3113 = vld [vmem:[#allocation3 + $0x538] sm:$0xff]
        %v3114 = vld [vmem:[#allocation3 + $0x540] sm:$0xff]
        %v3115 = vld [vmem:[#allocation3 + $0x548] sm:$0xff]
        %v3116 = vld [vmem:[#allocation3 + $0x550] sm:$0xff]
        %v3117 = vld [vmem:[#allocation3 + $0x558] sm:$0xff]
        %v3118 = vld [vmem:[#allocation3 + $0x560] sm:$0xff]
        %v3119 = vld [vmem:[#allocation3 + $0x568] sm:$0xff]
        %v3120 = vld [vmem:[#allocation3 + $0x570] sm:$0xff]
        %v3121 = vld [vmem:[#allocation3 + $0x578] sm:$0xff]
        %v3122 = vld [vmem:[#allocation3 + $0x580] sm:$0xff]
        %v3123 = vld [vmem:[#allocation3 + $0x588] sm:$0xff]
        %v3124 = vld [vmem:[#allocation3 + $0x590] sm:$0xff]
        %v3125 = vld [vmem:[#allocation3 + $0x598] sm:$0xff]
        %v3126 = vld [vmem:[#allocation3 + $0x5a0] sm:$0xff]
        %v3127 = vld [vmem:[#allocation3 + $0x5a8] sm:$0xff]
        %v3128 = vld [vmem:[#allocation3 + $0x5b0] sm:$0xff]
        %v3129 = vld [vmem:[#allocation3 + $0x5b8] sm:$0xff]
        %v3130 = vld [vmem:[#allocation3 + $0x5c0] sm:$0xff]
        %v3131 = vld [vmem:[#allocation3 + $0x5c8] sm:$0xff]
        %v3132 = vld [vmem:[#allocation3 + $0x5d0] sm:$0xff]
        %v3133 = vld [vmem:[#allocation3 + $0x5d8] sm:$0xff]
        %v3134 = vld [vmem:[#allocation3 + $0x5e0] sm:$0xff]
        %v3135 = vpack.c.bf16 %v2953, %v2946
        %v3136 = vpack.c.bf16 %v2954, %v2947
        %v3137 = vpack.c.bf16 %v2955, %v2948
        %v3138 = vpack.c.bf16 %v2956, %v2949
        %v3139 = vpack.c.bf16 %v2957, %v2950
        %v3140 = vpack.c.bf16 %v2958, %v2951
        %v3141 = vpack.c.bf16 %v2959, %v2952
        %v3142 = vpack.c.bf16 %v2967, %v2960
        %v3143 = vpack.c.bf16 %v2968, %v2961
        %v3144 = vpack.c.bf16 %v2969, %v2962
        %v3145 = vpack.c.bf16 %v2970, %v2963
        %v3146 = vpack.c.bf16 %v2971, %v2964
        %v3147 = vpack.c.bf16 %v2972, %v2965
        %v3148 = vpack.c.bf16 %v2973, %v2966
        %v3149 = vpack.c.bf16 %v2981, %v2974
        %v3150 = vpack.c.bf16 %v2982, %v2975
        %v3151 = vpack.c.bf16 %v2983, %v2976
        %v3152 = vpack.c.bf16 %v2984, %v2977
        %v3153 = vpack.c.bf16 %v2985, %v2978
        %v3154 = vpack.c.bf16 %v2986, %v2979
        %v3155 = vpack.c.bf16 %v2987, %v2980
        %v3156 = vpack.c.bf16 %v2995, %v2988
        %v3157 = vpack.c.bf16 %v2996, %v2989
        %v3158 = vpack.c.bf16 %v2997, %v2990
        %v3159 = vpack.c.bf16 %v2998, %v2991
        %v3160 = vpack.c.bf16 %v2999, %v2992
        %v3161 = vpack.c.bf16 %v3000, %v2993
        %v3162 = vpack.c.bf16 %v3001, %v2994
        %v3163 = vpack.c.bf16 %v3009, %v3002
        %v3164 = vpack.c.bf16 %v3010, %v3003
        %v3165 = vpack.c.bf16 %v3011, %v3004
        %v3166 = vpack.c.bf16 %v3012, %v3005
        %v3167 = vpack.c.bf16 %v3013, %v3006
        %v3168 = vpack.c.bf16 %v3014, %v3007
        %v3169 = vpack.c.bf16 %v3015, %v3008
        %v3170 = vpack.c.bf16 %v3023, %v3016
        %v3171 = vpack.c.bf16 %v3024, %v3017
        %v3172 = vpack.c.bf16 %v3025, %v3018
        %v3173 = vpack.c.bf16 %v3026, %v3019
        %v3174 = vpack.c.bf16 %v3027, %v3020
        %v3175 = vpack.c.bf16 %v3028, %v3021
        %v3176 = vpack.c.bf16 %v3029, %v3022
        %v3177 = vpack.c.bf16 %v3037, %v3030
        %v3178 = vpack.c.bf16 %v3038, %v3031
        %v3179 = vpack.c.bf16 %v3039, %v3032
        %v3180 = vpack.c.bf16 %v3040, %v3033
        %v3181 = vpack.c.bf16 %v3041, %v3034
        %v3182 = vpack.c.bf16 %v3042, %v3035
        %v3183 = vpack.c.bf16 %v3043, %v3036
        %v3184 = vpack.c.bf16 %v3051, %v3044
        %v3185 = vpack.c.bf16 %v3052, %v3045
        %v3186 = vpack.c.bf16 %v3053, %v3046
        %v3187 = vpack.c.bf16 %v3054, %v3047
        %v3188 = vpack.c.bf16 %v3055, %v3048
        %v3189 = vpack.c.bf16 %v3056, %v3049
        %v3190 = vpack.c.bf16 %v3057, %v3050
        %v3191 = vpack.c.bf16 %v3065, %v3058
        %v3192 = vpack.c.bf16 %v3066, %v3059
        %v3193 = vpack.c.bf16 %v3067, %v3060
        %v3194 = vpack.c.bf16 %v3068, %v3061
        %v3195 = vpack.c.bf16 %v3069, %v3062
        %v3196 = vpack.c.bf16 %v3070, %v3063
        %v3197 = vpack.c.bf16 %v3071, %v3064
        %v3198 = vpack.c.bf16 %v3079, %v3072
        %v3199 = vpack.c.bf16 %v3080, %v3073
        %v3200 = vpack.c.bf16 %v3081, %v3074
        %v3201 = vpack.c.bf16 %v3082, %v3075
        %v3202 = vpack.c.bf16 %v3083, %v3076
        %v3203 = vpack.c.bf16 %v3084, %v3077
        %v3204 = vpack.c.bf16 %v3085, %v3078
        %v3205 = vpack.c.bf16 %v3093, %v3086
        %v3206 = vpack.c.bf16 %v3094, %v3087
        %v3207 = vpack.c.bf16 %v3095, %v3088
        %v3208 = vpack.c.bf16 %v3096, %v3089
        %v3209 = vpack.c.bf16 %v3097, %v3090
        %v3210 = vpack.c.bf16 %v3098, %v3091
        %v3211 = vpack.c.bf16 %v3099, %v3092
        %v3212 = vpack.c.bf16 %v3107, %v3100
        %v3213 = vpack.c.bf16 %v3108, %v3101
        %v3214 = vpack.c.bf16 %v3109, %v3102
        %v3215 = vpack.c.bf16 %v3110, %v3103
        %v3216 = vpack.c.bf16 %v3111, %v3104
        %v3217 = vpack.c.bf16 %v3112, %v3105
        %v3218 = vpack.c.bf16 %v3113, %v3106
        %v3219 = vpack.c.bf16 %v3121, %v3114
        %v3220 = vpack.c.bf16 %v3122, %v3115
        %v3221 = vpack.c.bf16 %v3123, %v3116
        %v3222 = vpack.c.bf16 %v3124, %v3117
        %v3223 = vpack.c.bf16 %v3125, %v3118
        %v3224 = vpack.c.bf16 %v3126, %v3119
        %v3225 = vpack.c.bf16 %v3127, %v3120
        %v3226 = vpack.c.bf16 %v3128, %v3128
        %v3227 = vpack.c.bf16 %v3129, %v3129
        %v3228 = vpack.c.bf16 %v3130, %v3130
        %v3229 = vpack.c.bf16 %v3131, %v3131
        %v3230 = vpack.c.bf16 %v3132, %v3132
        %v3231 = vpack.c.bf16 %v3133, %v3133
        %v3232 = vpack.c.bf16 %v3134, %v3134
        %v3233 = vld [vmem:[%s4] sm:$0xff]
        %3235 = vset.pattern.permute.xlu0 0
        %3236 = vperm.xlu0 %3235, %v3233
        %v3237 = vpop.permute.xlu0 %3236
        %v3240 = vunpack.c.l.b16 %v2945
        %v3241 = vunpack.c.h.b16 %v2945
        %v3242 = vpack.c.b16 %v3240, %v3240
        %v3243 = vpack.c.b16 %v3241, %v3241
        %v3246 = vsel %vm1720, %v3243, 0
        %v3249 = vsel %vm1724, %v3226, 0
        %v3252 = vsel %vm1724, %v3227, 0
        %v3255 = vsel %vm1724, %v3228, 0
        %v3258 = vsel %vm1724, %v3229, 0
        %v3261 = vsel %vm1724, %v3230, 0
        %v3264 = vsel %vm1724, %v3231, 0
        %v3267 = vsel %vm1724, %v3232, 0
        %3269 = vmatprep.subr.bf16.mxu0 %v3136
        %3270 = vmatpush1.bf16.msra.mxu0 %v3135
        %3271 = vmatprep.subr.bf16.mxu0 %v3143
        %3272 = vmatpush1.bf16.msra.mxu0 %v3142
        %3273 = vmatprep.subr.bf16.mxu0 %v3150
        %3274 = vmatpush1.bf16.msra.mxu0 %v3149
        %3275 = vmatprep.subr.bf16.mxu0 %v3157
        %3276 = vmatpush1.bf16.msra.mxu0 %v3156
        %3277 = vmatprep.subr.bf16.mxu0 %v3164
        %3278 = vmatpush1.bf16.msra.mxu0 %v3163
        %3279 = vmatprep.subr.bf16.mxu0 %v3171
        %3280 = vmatpush1.bf16.msra.mxu0 %v3170
        %3281 = vmatprep.subr.bf16.mxu0 %v3178
        %3282 = vmatpush1.bf16.msra.mxu0 %v3177
        %3283 = vmatprep.subr.bf16.mxu0 %v3185
        %3284 = vmatpush1.bf16.msra.mxu0 %v3184
        %3285 = vmatprep.subr.bf16.mxu0 %v3192
        %3286 = vmatpush1.bf16.msra.mxu0 %v3191
        %3287 = vmatprep.subr.bf16.mxu0 %v3199
        %3288 = vmatpush1.bf16.msra.mxu0 %v3198
        %3289 = vmatprep.subr.bf16.mxu0 %v3206
        %3290 = vmatpush1.bf16.msra.mxu0 %v3205
        %3291 = vmatprep.subr.bf16.mxu0 %v3213
        %3292 = vmatpush1.bf16.msra.mxu0 %v3212
        %3293 = vmatprep.subr.bf16.mxu0 %v3220
        %3294 = vmatpush1.bf16.msra.mxu0 %v3219
        %3295 = vmatprep.subr.bf16.mxu0 %v3252
        %3296 = vmatpush1.bf16.msra.mxu0 %v3249
        %3297 = vmatprep.subr.bf16.mxu0 0
        %3298 = vmatpush1.bf16.msra.mxu0 0
        %3299 = vmatprep.subr.bf16.mxu0 0
        %3300 = vmatpush1.bf16.msra.mxu0 0
        %3301 = vmatprep.mubr.bf16.mxu0 %v3246
        %3302 = vmatmul.mubr.bf16.gmra.mrb[0].mxu0 %v3242
        %v3303 = vpop.f32.mrb[0].mxu0
        %v3304 = vadd.f32 %v3237, %v3303
        %v3305 = vpop.f32.mrb[0].mxu0
        %v3306 = vadd.f32 %v3237, %v3305
        %v3307 = vpop.f32.mrb[0].mxu0
        %v3308 = vpop.f32.mrb[0].mxu0
        %3309 = vdwg.mxu0
        %3310 = vmatprep.subr.bf16.mxu0 %v3138
        %3311 = vmatpush1.bf16.msra.mxu0 %v3137
        %3312 = vmatprep.subr.bf16.mxu0 %v3145
        %3313 = vmatpush1.bf16.msra.mxu0 %v3144
        %3314 = vmatprep.subr.bf16.mxu0 %v3152
        %3315 = vmatpush1.bf16.msra.mxu0 %v3151
        %3316 = vmatprep.subr.bf16.mxu0 %v3159
        %3317 = vmatpush1.bf16.msra.mxu0 %v3158
        %3318 = vmatprep.subr.bf16.mxu0 %v3166
        %3319 = vmatpush1.bf16.msra.mxu0 %v3165
        %3320 = vmatprep.subr.bf16.mxu0 %v3173
        %3321 = vmatpush1.bf16.msra.mxu0 %v3172
        %3322 = vmatprep.subr.bf16.mxu0 %v3180
        %3323 = vmatpush1.bf16.msra.mxu0 %v3179
        %3324 = vmatprep.subr.bf16.mxu0 %v3187
        %3325 = vmatpush1.bf16.msra.mxu0 %v3186
        %3326 = vmatprep.subr.bf16.mxu0 %v3194
        %3327 = vmatpush1.bf16.msra.mxu0 %v3193
        %3328 = vmatprep.subr.bf16.mxu0 %v3201
        %3329 = vmatpush1.bf16.msra.mxu0 %v3200
        %3330 = vmatprep.subr.bf16.mxu0 %v3208
        %3331 = vmatpush1.bf16.msra.mxu0 %v3207
        %3332 = vmatprep.subr.bf16.mxu0 %v3215
        %3333 = vmatpush1.bf16.msra.mxu0 %v3214
        %3334 = vmatprep.subr.bf16.mxu0 %v3222
        %3335 = vmatpush1.bf16.msra.mxu0 %v3221
        %3336 = vmatprep.subr.bf16.mxu0 %v3258
        %3337 = vmatpush1.bf16.msra.mxu0 %v3255
        %3338 = vmatprep.subr.bf16.mxu0 0
        %3339 = vmatpush1.bf16.msra.mxu0 0
        %3340 = vmatprep.subr.bf16.mxu0 0
        %3341 = vmatpush1.bf16.msra.mxu0 0
        %3342 = vmatprep.mubr.bf16.mxu0 %v3246
        %3343 = vmatmul.mubr.bf16.gmra.mrb[0].mxu0 %v3242
        %v3344 = vpop.f32.mrb[0].mxu0
        %v3345 = vadd.f32 %v3237, %v3344
        %v3346 = vpop.f32.mrb[0].mxu0
        %v3347 = vadd.f32 %v3237, %v3346
        %v3348 = vpop.f32.mrb[0].mxu0
        %v3349 = vpop.f32.mrb[0].mxu0
        %3350 = vdwg.mxu0
        %3351 = vmatprep.subr.bf16.mxu0 %v3140
        %3352 = vmatpush1.bf16.msra.mxu0 %v3139
        %3353 = vmatprep.subr.bf16.mxu0 %v3147
        %3354 = vmatpush1.bf16.msra.mxu0 %v3146
        %3355 = vmatprep.subr.bf16.mxu0 %v3154
        %3356 = vmatpush1.bf16.msra.mxu0 %v3153
        %3357 = vmatprep.subr.bf16.mxu0 %v3161
        %3358 = vmatpush1.bf16.msra.mxu0 %v3160
        %3359 = vmatprep.subr.bf16.mxu0 %v3168
        %3360 = vmatpush1.bf16.msra.mxu0 %v3167
        %3361 = vmatprep.subr.bf16.mxu0 %v3175
        %3362 = vmatpush1.bf16.msra.mxu0 %v3174
        %3363 = vmatprep.subr.bf16.mxu0 %v3182
        %3364 = vmatpush1.bf16.msra.mxu0 %v3181
        %3365 = vmatprep.subr.bf16.mxu0 %v3189
        %3366 = vmatpush1.bf16.msra.mxu0 %v3188
        %3367 = vmatprep.subr.bf16.mxu0 %v3196
        %3368 = vmatpush1.bf16.msra.mxu0 %v3195
        %3369 = vmatprep.subr.bf16.mxu0 %v3203
        %3370 = vmatpush1.bf16.msra.mxu0 %v3202
        %3371 = vmatprep.subr.bf16.mxu0 %v3210
        %3372 = vmatpush1.bf16.msra.mxu0 %v3209
        %3373 = vmatprep.subr.bf16.mxu0 %v3217
        %3374 = vmatpush1.bf16.msra.mxu0 %v3216
        %3375 = vmatprep.subr.bf16.mxu0 %v3224
        %3376 = vmatpush1.bf16.msra.mxu0 %v3223
        %3377 = vmatprep.subr.bf16.mxu0 %v3264
        %3378 = vmatpush1.bf16.msra.mxu0 %v3261
        %3379 = vmatprep.subr.bf16.mxu0 0
        %3380 = vmatpush1.bf16.msra.mxu0 0
        %3381 = vmatprep.subr.bf16.mxu0 0
        %3382 = vmatpush1.bf16.msra.mxu0 0
        %3383 = vmatprep.mubr.bf16.mxu0 %v3246
        %3384 = vmatmul.mubr.bf16.gmra.mrb[0].mxu0 %v3242
        %v3385 = vpop.f32.mrb[0].mxu0
        %v3386 = vadd.f32 %v3237, %v3385
        %v3387 = vpop.f32.mrb[0].mxu0
        %v3388 = vadd.f32 %v3237, %v3387
        %v3389 = vpop.f32.mrb[0].mxu0
        %v3390 = vpop.f32.mrb[0].mxu0
        %3391 = vdwg.mxu0
        %3392 = vmatprep.subr.bf16.mxu0 0
        %3393 = vmatpush1.bf16.msra.mxu0 %v3141
        %3394 = vmatprep.subr.bf16.mxu0 0
        %3395 = vmatpush1.bf16.msra.mxu0 %v3148
        %3396 = vmatprep.subr.bf16.mxu0 0
        %3397 = vmatpush1.bf16.msra.mxu0 %v3155
        %3398 = vmatprep.subr.bf16.mxu0 0
        %3399 = vmatpush1.bf16.msra.mxu0 %v3162
        %3400 = vmatprep.subr.bf16.mxu0 0
        %3401 = vmatpush1.bf16.msra.mxu0 %v3169
        %3402 = vmatprep.subr.bf16.mxu0 0
        %3403 = vmatpush1.bf16.msra.mxu0 %v3176
        %3404 = vmatprep.subr.bf16.mxu0 0
        %3405 = vmatpush1.bf16.msra.mxu0 %v3183
        %3406 = vmatprep.subr.bf16.mxu0 0
        %3407 = vmatpush1.bf16.msra.mxu0 %v3190
        %3408 = vmatprep.subr.bf16.mxu0 0
        %3409 = vmatpush1.bf16.msra.mxu0 %v3197
        %3410 = vmatprep.subr.bf16.mxu0 0
        %3411 = vmatpush1.bf16.msra.mxu0 %v3204
        %3412 = vmatprep.subr.bf16.mxu0 0
        %3413 = vmatpush1.bf16.msra.mxu0 %v3211
        %3414 = vmatprep.subr.bf16.mxu0 0
        %3415 = vmatpush1.bf16.msra.mxu0 %v3218
        %3416 = vmatprep.subr.bf16.mxu0 0
        %3417 = vmatpush1.bf16.msra.mxu0 %v3225
        %3418 = vmatprep.subr.bf16.mxu0 0
        %3419 = vmatpush1.bf16.msra.mxu0 %v3267
        %3420 = vmatprep.subr.bf16.mxu0 0
        %3421 = vmatpush1.bf16.msra.mxu0 0
        %3422 = vmatprep.subr.bf16.mxu0 0
        %3423 = vmatpush1.bf16.msra.mxu0 0
        %3424 = vmatprep.mubr.bf16.mxu0 %v3246
        %3425 = vmatmul.mubr.bf16.gmra.mrb[0].mxu0 %v3242
        %v3426 = vpop.f32.mrb[0].mxu0
        %v3427 = vadd.f32 %v3237, %v3426
        %v3428 = vpop.f32.mrb[0].mxu0
        %v3429 = vpop.f32.mrb[0].mxu0
        %v3430 = vpop.f32.mrb[0].mxu0
        %3431 = vdwg.mxu0
        %v3432 = vadd.f32 %v310, %v3304
        %v3433 = vadd.f32 %v311, %v3306
        %v3434 = vadd.f32 %v312, %v3345
        %v3435 = vadd.f32 %v313, %v3347
        %v3436 = vadd.f32 %v314, %v3386
        %v3437 = vadd.f32 %v315, %v3388
        %v3438 = vadd.f32 %v316, %v3427
        %3439 = vst [vmem:[%s308] sm:$0xff] %v3432
        %3440 = vst [vmem:[%s308 + $0x8] sm:$0xff] %v3433
        %3441 = vst [vmem:[%s308 + $0x10] sm:$0xff] %v3434
        %3442 = vst [vmem:[%s308 + $0x18] sm:$0xff] %v3435
        %3443 = vst [vmem:[%s308 + $0x20] sm:$0xff] %v3436
        %3444 = vst [vmem:[%s308 + $0x28] sm:$0xff] %v3437
        %3445 = vst.msk [vmem:[%s308 + $0x30] sm:$0xff] %vm325, %v3438
        %s3446 = sand.u32 %s185, 1
        %s3447 = scalar_lea.sflag [#allocation6], %s3446
        %s3448 = sand.u32 %s185, 1
        %s3449 = smul.addr %s3448, 56
        %s3450 = scalar_lea.vmem [#allocation9], %s3449
        // Predicated region
        $region57: #{tpu_custom_call.1} parent=47 // pred_check
          %p3451 = pneg %p195
        $region58: #{tpu_custom_call.1} parent=47 // pred_check_branch
          %3453 = sbr.rel (%p3451) target = $region60
        $region59: #{tpu_custom_call.1} parent=47 // pred_region
          %s3455 = ssub.s32 896, 896
          %3456 = vsyncadd %s3447, %s3455
          %s3457 = smul.addr %s25, 7
          %s3458 = smul.addr %s3457, 128
          %s3459 = scalar_lea.hbm %s7, %s3458
          %s3461 = sshll.u32 %s3450, 4
          %s3462 = int_to_ptr.vmem [resolvable:$true] %s3461
          %3464 = dma.vmem_to_hbm [thread:$0]  %s3462, 896, %s3459, %s3447
        $region60: #{tpu_custom_call.1} parent=47 // pred_fallthru
          _
      $region48: #{tpu_custom_call.1} parent=5 // pred_fallthru
        _
      %p3465 = scmp.le.s32.totalorder 2, %s20
      // Predicated region
      $region61: #{tpu_custom_call.1} parent=5 // pred_check
        %p3466 = pneg %p3465
      $region62: #{tpu_custom_call.1} parent=5 // pred_check_branch
        %3468 = sbr.rel (%p3466) target = $region64
      $region63: #{tpu_custom_call.1} parent=5 // pred_region
        %s3469 = ssub.s32 %s20, 2
        // Predicated region
        $region65: #{tpu_custom_call.1} parent=63 // pred_check
          %p3470 = pneg %p201
        $region66: #{tpu_custom_call.1} parent=63 // pred_check_branch
          %3472 = sbr.rel (%p3470) target = $region68
        $region67: #{tpu_custom_call.1} parent=63 // pred_region
          %s3473 = sand.u32 %s186, 1
          %s3474 = scalar_lea.sflag [#allocation6], %s3473
          %s3475 = sand.u32 %s186, 1
          %s3476 = smul.addr %s3475, 56
          %s3477 = scalar_lea.vmem [#allocation9], %s3476
          %3478 = dma.done %s3474, 896
        $region68: #{tpu_custom_call.1} parent=63 // pred_fallthru
          _
      $region64: #{tpu_custom_call.1} parent=5 // pred_fallthru
        _
    $region6: #{tpu_custom_call.1} parent=1 // loop_footer
      %s24 = sadd.s32 1, %s20
    $region7: #{tpu_custom_call.1} parent=1 // loop_footer_branch
      %19 = sbr.rel target = $region3
    $region8: #{tpu_custom_call.1} parent=1 // loop_exit
      _
    %3479 = vsyncpa [#allocation5], 1
    %s3480 = scalar_lea.sflag [#allocation5], 1
    %3481 = vsyncpa %s3480, 1
    %3482 = vsyncpa [#allocation6], 1
    %s3483 = scalar_lea.sflag [#allocation6], 1
    %3484 = vsyncpa %s3483, 1
    %3485 = vsyncpa [#allocation7], 1
    %s3486 = scalar_lea.sflag [#allocation7], 1
    %3487 = vsyncpa %s3486, 1

</llo_original>
